<compile_context>
chip_gen: v5e
topology: v5e:2x2
jax: 0.10.0
libtpu: 0.0.40
codegen_flags: <defaults>
</compile_context>

<pallas_src>
import functools

import jax
import jax.numpy as jnp
import numpy as np
from jax.experimental import pallas as pl
from jax.experimental.pallas import tpu as pltpu

# ----------------------------- configuration (params_model) -----------------------------
PARAMS_MODEL = {
    "thT_bound": [[0.01, 0.10], [0.005, 0.05]],
    "odeint": {"dt": 0.05, "method": "euler", "mesh_step": 1.0},
    "field_size": 16,
    "num_steps_y": 3,
    "batchnorm": {"use_batchnorm": False, "track_running_stats": False},
    "fD": {"sizes_hidden_layers": [8], "nums_hidden_channels": [4]},
}


# ----------------------------- fused Pallas kernel: full Euler ODE solve -----------------------------
def _greybox_kernel(convw_ref, ab_ref, w_ref, state0_ref,        # inputs
                    yh_ref, d2_ref, td_ref,                      # outputs
                    *, conv_channels, B, H, W, S, dt, mesh_step):
    HW = H * W
    inv_ms2 = 1.0 / (mesh_step * mesh_step)
    n_layers = len(conv_channels) - 1

    # ---- hoisted: conv weights read from SMEM once (step-invariant) ----
    off = 0
    layer_w = []
    for li in range(n_layers):
        cin, cout = conv_channels[li], conv_channels[li + 1]
        wl = [[[[convw_ref[off + ((co * cin + ci) * 3 + ky) * 3 + kx]
                 for kx in range(3)] for ky in range(3)]
               for ci in range(cin)] for co in range(cout)]
        off += cout * cin * 9
        layer_w.append(wl)
    bias_last = [convw_ref[off + co] for co in range(conv_channels[-1])]

    # ---- hoisted: boundary masks per packed-row count (built once, reused) ----
    mask_cache = {}

    def get_masks(rows):
        if rows not in mask_cache:
            flat = jax.lax.broadcasted_iota(jnp.int32, (rows, HW), 1)
            if (W & (W - 1)) == 0:                         # W is a power of two (16)
                col = jnp.bitwise_and(flat, W - 1)
                row = jnp.right_shift(flat, int(np.log2(W)))
            else:
                col = flat % W
                row = flat // W
            mask_cache[rows] = (col == 0, col == W - 1, row == 0, row == H - 1)
        return mask_cache[rows]

    def shift9(x):
        """Replicate-padded 3x3 neighbourhood of a packed (rows, HW) array."""
        m_l, m_r, m_t, m_b = get_masks(x.shape[0])
        xl = jnp.where(m_l, x, pltpu.roll(x, 1, axis=1))          # value at (h, w-1)
        xr = jnp.where(m_r, x, pltpu.roll(x, HW - 1, axis=1))     # value at (h, w+1)
        sh = {}
        for dw, xw in ((-1, xl), (0, x), (1, xr)):
            sh[(0, dw)] = xw
            sh[(-1, dw)] = jnp.where(m_t, xw, pltpu.roll(xw, W, axis=1))       # (h-1, w+dw)
            sh[(1, dw)] = jnp.where(m_b, xw, pltpu.roll(xw, HW - W, axis=1))   # (h+1, w+dw)
        return sh

    ab = ab_ref[...]        # (C*B, 1)  diffusion coefficients per packed row
    wfd = w_ref[...]        # (C*B, 1)  learned fD laplacian weights per packed row
    st = state0_ref[...]    # (C*B, HW) packed state, rows = c*B + b
    d2_acc = jnp.zeros_like(st)
    td_acc = jnp.zeros_like(st)

    for s in range(S):                           # statically unrolled Euler steps
        sh_st = shift9(st)
        lap = (sh_st[(-1, 0)] + sh_st[(1, 0)] + sh_st[(0, -1)] + sh_st[(0, 1)]
               - 4.0 * sh_st[(0, 0)]) * inv_ms2
        fT = ab * lap

        # ---- net_fD_conv: 3x3 replicate-pad convs with LeakyReLU(0.01) between ----
        sh_list = sh_st
        conv_out = None
        for li in range(n_layers):
            cin, cout = conv_channels[li], conv_channels[li + 1]
            # slice each shifted packed plane once into per-input-channel (B, HW) views
            sh_ci = {tap: [v[ci * B:(ci + 1) * B] for ci in range(cin)]
                     for tap, v in sh_list.items()}
            outs = []
            for co in range(cout):
                acc = None
                for ci in range(cin):
                    for ky in range(3):
                        for kx in range(3):
                            t = layer_w[li][co][ci][ky][kx] * sh_ci[(ky - 1, kx - 1)][ci]
                            acc = t if acc is None else acc + t
                outs.append(acc)
            if li == n_layers - 1:
                outs = [o + bias_last[co] for co, o in enumerate(outs)]   # bias, no act
                conv_out = jnp.concatenate(outs, axis=0)                  # (C*B, HW)
            else:
                h = jnp.concatenate(outs, axis=0)                         # (cout*B, HW)
                h = jnp.where(h >= 0.0, h, 0.01 * h)                      # LeakyReLU(0.01)
                sh_list = shift9(h)                                       # one shift9 per layer

        fD = conv_out + wfd * lap
        st = st + dt * (fT + fD)
        yh_ref[s] = st

        d2_acc = d2_acc + fD * fD
        td_acc = td_acc + fT * fD

    d2_ref[...] = jnp.sum(d2_acc)[None, None]
    td_ref[...] = jnp.sum(td_acc)[None, None]


def greybox_ode_solve(state0, ab_col, w_col, conv_flat, *,
                      conv_channels, B, H, W, S, dt, mesh_step):
    """state0: (C*B, H*W) f32; ab_col/w_col: (C*B, 1) f32; conv_flat: (n_w,) f32."""
    CB, HW = state0.shape
    kern = functools.partial(
        _greybox_kernel, conv_channels=tuple(conv_channels),
        B=B, H=H, W=W, S=S, dt=float(dt), mesh_step=float(mesh_step))

    # Single invocation (no grid): the whole solve is one kernel; all operands are
    # tiny full-array VMEM/SMEM blocks (<20 KiB total) on every TPU generation.
    # TODO(synk): for non-toy batch sizes add a batch-tile grid axis marked
    #             "parallel" so v7x can use both TensorCores.
    return pl.pallas_call(
        kern,
        out_shape=(
            jax.ShapeDtypeStruct((S, CB, HW), jnp.float32),   # yh (packed)
            jax.ShapeDtypeStruct((1, 1), jnp.float32),        # sum(fD^2)
            jax.ShapeDtypeStruct((1, 1), jnp.float32),        # sum(fT*fD)
        ),
        in_specs=[
            pl.BlockSpec(memory_space=pltpu.MemorySpace.SMEM),   # flattened conv weights
            pl.BlockSpec(memory_space=pltpu.MemorySpace.VMEM),   # ab_col (C*B, 1)
            pl.BlockSpec(memory_space=pltpu.MemorySpace.VMEM),   # w_col  (C*B, 1)
            pl.BlockSpec(memory_space=pltpu.MemorySpace.VMEM),   # state0 (C*B, HW)
        ],
        out_specs=(
            pl.BlockSpec(memory_space=pltpu.MemorySpace.VMEM),
            pl.BlockSpec(memory_space=pltpu.MemorySpace.VMEM),
            pl.BlockSpec(memory_space=pltpu.MemorySpace.VMEM),
        ),
    )(conv_flat, ab_col, w_col, state0)


# ----------------------------- parameter init (deterministic, synthetic) -----------------------------
def init_params(key):
    cfg = PARAMS_MODEL
    hidden_mlp = cfg["fD"]["sizes_hidden_layers"]
    hidden_conv = cfg["fD"]["nums_hidden_channels"]
    keys = list(jax.random.split(key, 32))
    ki = 0

    def nk():
        nonlocal ki
        k = keys[ki]
        ki += 1
        return k

    # prm_thT_fixed ~ uniform within thT_bound (shape (1, 2))
    bound = jnp.array(cfg["thT_bound"], jnp.float32)       # (2, 2) -> [[lo, hi], ...]
    u = jax.random.uniform(nk(), (1, bound.shape[0]))
    thT = bound[:, 0] + u * (bound[:, 1] - bound[:, 0])    # (1, 2)

    # net_fD_mlp: Linear(2,k0) + LeakyReLU + ... + Linear(k[-1],2); stored as (in,out)
    sizes = [2] + list(hidden_mlp) + [2]
    mlp_Ws, mlp_bs = [], []
    for i in range(len(sizes) - 1):
        lim = 1.0 / np.sqrt(sizes[i])
        mlp_Ws.append(jax.random.uniform(nk(), (sizes[i], sizes[i + 1]), minval=-lim, maxval=lim))
        mlp_bs.append(jax.random.uniform(nk(), (sizes[i + 1],), minval=-lim, maxval=lim))

    # net_fD_conv: Conv(2,k0,3,rep,no bias) + LeakyReLU + ... + Conv(k[-1],2,3,rep,bias)
    ch = [2] + list(hidden_conv) + [2]
    conv_Ws, flat_parts = [], []
    for i in range(len(ch) - 1):
        cin, cout = ch[i], ch[i + 1]
        lim = 1.0 / np.sqrt(cin * 9)
        Wc = jax.random.uniform(nk(), (cout, cin, 3, 3), minval=-lim, maxval=lim)
        conv_Ws.append(Wc)
        flat_parts.append(Wc.reshape(-1))
    lim = 1.0 / np.sqrt(ch[-2] * 9)
    conv_b_last = jax.random.uniform(nk(), (2,), minval=-lim, maxval=lim)
    flat_parts.append(conv_b_last)
    conv_flat = jnp.concatenate(flat_parts).astype(jnp.float32)

    return {
        "thT": thT,
        "mlp_Ws": mlp_Ws, "mlp_bs": mlp_bs,
        "conv_Ws": conv_Ws, "conv_b_last": conv_b_last,
        "conv_flat": conv_flat, "conv_channels": tuple(ch),
    }


# ----------------------------- forward (glue around the fused Pallas kernel) -----------------------------
def greybox_forward(x, params):
    # x: (B, num_steps_x, 2, H, W); only x[:, 0] (initial condition) enters the ODE.
    cfg = PARAMS_MODEL
    B = x.shape[0]
    H = W = cfg["field_size"]
    HW = H * W
    S = cfg["num_steps_y"]
    dt = cfg["odeint"]["dt"]
    mesh_step = cfg["odeint"]["mesh_step"]
    thT = params["thT"]                                    # (1, 2)

    # Tiny thT -> weights MLP (2->8->2) in plain jnp: constant across ODE steps.
    z = 100.0 * jnp.broadcast_to(thT, (B, 2))
    L = len(params["mlp_Ws"])
    for l in range(L):
        z = z @ params["mlp_Ws"][l] + params["mlp_bs"][l]
        if l < L - 1:
            z = jnp.where(z >= 0, z, 0.01 * z)             # LeakyReLU(0.01)
    wfD = jnp.maximum(jnp.tanh(z) * 0.01, -0.5 * thT)      # torch.clamp(..., min=-0.5*thT), (B, 2)

    # channel-major packed layout (C*B, H*W): row index = c*B + b, lane axis = 256
    state0 = jnp.transpose(x[:, 0].astype(jnp.float32), (1, 0, 2, 3)).reshape(2 * B, HW)
    ab_col = jnp.repeat(thT[0].astype(jnp.float32), B).reshape(2 * B, 1)   # [a,a,b,b]
    w_col = jnp.transpose(wfD).astype(jnp.float32).reshape(2 * B, 1)       # [wU_b0,wU_b1,wV_b0,wV_b1]

    yh_p, d2, td = greybox_ode_solve(
        state0, ab_col, w_col, params["conv_flat"],
        conv_channels=params["conv_channels"],
        B=B, H=H, W=W, S=S, dt=dt, mesh_step=mesh_step)

    yh = jnp.transpose(yh_p.reshape(S, 2, B, H, W), (2, 0, 1, 3, 4))   # (B, S, 2, H, W)
    n_samples = S * B                                      # len(compD_list concatenated along batch)
    normD = d2[0, 0] / n_samples
    abs_dotTD = jnp.abs(td[0, 0] / n_samples)
    R = jnp.log(normD) + jnp.log(abs_dotTD)
    return yh, R


# ----------------------------- pure-JAX reference (for validation only) -----------------------------
def reference_forward(x, params):
    cfg = PARAMS_MODEL
    B = x.shape[0]
    fs = cfg["field_size"]
    S = cfg["num_steps_y"]
    dt = cfg["odeint"]["dt"]
    ms2 = cfg["odeint"]["mesh_step"] ** 2
    thT = params["thT"]

    def leaky(z):
        return jnp.where(z >= 0, z, 0.01 * z)

    def lap(f):
        p = jnp.pad(f, ((0, 0), (1, 1), (1, 1)), mode="edge")
        return (p[:, :-2, 1:-1] + p[:, 1:-1, :-2] + p[:, 2:, 1:-1]
                + p[:, 1:-1, 2:] - 4.0 * p[:, 1:-1, 1:-1]) / ms2

    z = 100.0 * jnp.broadcast_to(thT, (B, 2))
    L = len(params["mlp_Ws"])
    for l in range(L):
        z = z @ params["mlp_Ws"][l] + params["mlp_bs"][l]
        if l < L - 1:
            z = leaky(z)
    wfD = jnp.maximum(jnp.tanh(z) * 0.01, -0.5 * thT)

    def conv_net(st):
        h = st
        n = len(params["conv_Ws"])
        for li, Wc in enumerate(params["conv_Ws"]):
            p = jnp.pad(h, ((0, 0), (0, 0), (1, 1), (1, 1)), mode="edge")
            out = jnp.zeros((B, Wc.shape[0], fs, fs), jnp.float32)
            for dy in range(3):
                for dx in range(3):
                    out = out + jnp.einsum("bihw,oi->bohw",
                                           p[:, :, dy:dy + fs, dx:dx + fs], Wc[:, :, dy, dx])
            if li == n - 1:
                out = out + params["conv_b_last"][None, :, None, None]
            else:
                out = leaky(out)
            h = out
        return h

    a, b = thT[0, 0], thT[0, 1]
    state = x[:, 0].astype(jnp.float32)
    d2_tot, td_tot, yh = 0.0, 0.0, []
    for _ in range(S):
        U, V = state[:, 0], state[:, 1]
        lu, lv = lap(U), lap(V)
        fT = jnp.stack([a * lu, b * lv], axis=1)
        fD = conv_net(state) + jnp.stack(
            [wfD[:, 0].reshape(B, 1, 1) * lu, wfD[:, 1].reshape(B, 1, 1) * lv], axis=1)
        d2_tot = d2_tot + jnp.sum(fD * fD)
        td_tot = td_tot + jnp.sum(fT * fD)
        state = state + dt * (fT + fD)
        yh.append(state)
    yh = jnp.stack(yh, axis=1)
    normD = d2_tot / (S * B)
    abs_dotTD = jnp.abs(td_tot / (S * B))
    return yh, jnp.log(normD) + jnp.log(abs_dotTD)


# ----------------------------- main -----------------------------
if __name__ == "__main__":
    cfg = PARAMS_MODEL
    B, num_steps_x = 2, 4
    H = W = cfg["field_size"]

    key = jax.random.PRNGKey(0)
    kx, kp = jax.random.split(key)
    x = 0.5 * jax.random.normal(kx, (B, num_steps_x, 2, H, W), jnp.float32)
    params = init_params(kp)

    fwd = jax.jit(lambda xx: greybox_forward(xx, params))
    yh, R = fwd(x)
    yh = jax.block_until_ready(yh)
    R = jax.block_until_ready(R)

    assert yh.shape == (B, cfg["num_steps_y"], 2, H, W)

    yh_ref, R_ref = reference_forward(x, params)
    np.testing.assert_allclose(np.asarray(yh), np.asarray(yh_ref), rtol=1e-3, atol=1e-5)
    np.testing.assert_allclose(np.asarray(R), np.asarray(R_ref), rtol=1e-3, atol=5e-4)

    print("KERNEL_OK")
</pallas_src>

<mosaic_0001>
module attributes {stable_mosaic.version = 11 : i64} {
  func.func @_greybox_kernel(%arg0: memref<146xf32, #tpu.memory_space<smem>>, %arg1: memref<4x1xf32, #tpu.memory_space<vmem>>, %arg2: memref<4x1xf32, #tpu.memory_space<vmem>>, %arg3: memref<4x256xf32, #tpu.memory_space<vmem>>, %arg4: memref<3x4x256xf32, #tpu.memory_space<vmem>>, %arg5: memref<1x1xf32, #tpu.memory_space<vmem>>, %arg6: memref<1x1xf32, #tpu.memory_space<vmem>>) attributes {dimension_semantics = [], scalar_prefetch = 0 : i64, scratch_operands = 0 : i64, tpu.core_type = #tpu.core_type<tc>} {
    %c0 = arith.constant 0 : index
    %0 = memref.load %arg0[%c0] : memref<146xf32, #tpu.memory_space<smem>>
    %c1 = arith.constant 1 : index
    %1 = memref.load %arg0[%c1] : memref<146xf32, #tpu.memory_space<smem>>
    %c2 = arith.constant 2 : index
    %2 = memref.load %arg0[%c2] : memref<146xf32, #tpu.memory_space<smem>>
    %c3 = arith.constant 3 : index
    %3 = memref.load %arg0[%c3] : memref<146xf32, #tpu.memory_space<smem>>
    %c4 = arith.constant 4 : index
    %4 = memref.load %arg0[%c4] : memref<146xf32, #tpu.memory_space<smem>>
    %c5 = arith.constant 5 : index
    %5 = memref.load %arg0[%c5] : memref<146xf32, #tpu.memory_space<smem>>
    %c6 = arith.constant 6 : index
    %6 = memref.load %arg0[%c6] : memref<146xf32, #tpu.memory_space<smem>>
    %c7 = arith.constant 7 : index
    %7 = memref.load %arg0[%c7] : memref<146xf32, #tpu.memory_space<smem>>
    %c8 = arith.constant 8 : index
    %8 = memref.load %arg0[%c8] : memref<146xf32, #tpu.memory_space<smem>>
    %c9 = arith.constant 9 : index
    %9 = memref.load %arg0[%c9] : memref<146xf32, #tpu.memory_space<smem>>
    %c10 = arith.constant 10 : index
    %10 = memref.load %arg0[%c10] : memref<146xf32, #tpu.memory_space<smem>>
    %c11 = arith.constant 11 : index
    %11 = memref.load %arg0[%c11] : memref<146xf32, #tpu.memory_space<smem>>
    %c12 = arith.constant 12 : index
    %12 = memref.load %arg0[%c12] : memref<146xf32, #tpu.memory_space<smem>>
    %c13 = arith.constant 13 : index
    %13 = memref.load %arg0[%c13] : memref<146xf32, #tpu.memory_space<smem>>
    %c14 = arith.constant 14 : index
    %14 = memref.load %arg0[%c14] : memref<146xf32, #tpu.memory_space<smem>>
    %c15 = arith.constant 15 : index
    %15 = memref.load %arg0[%c15] : memref<146xf32, #tpu.memory_space<smem>>
    %c16 = arith.constant 16 : index
    %16 = memref.load %arg0[%c16] : memref<146xf32, #tpu.memory_space<smem>>
    %c17 = arith.constant 17 : index
    %17 = memref.load %arg0[%c17] : memref<146xf32, #tpu.memory_space<smem>>
    %c18 = arith.constant 18 : index
    %18 = memref.load %arg0[%c18] : memref<146xf32, #tpu.memory_space<smem>>
    %c19 = arith.constant 19 : index
    %19 = memref.load %arg0[%c19] : memref<146xf32, #tpu.memory_space<smem>>
    %c20 = arith.constant 20 : index
    %20 = memref.load %arg0[%c20] : memref<146xf32, #tpu.memory_space<smem>>
    %c21 = arith.constant 21 : index
    %21 = memref.load %arg0[%c21] : memref<146xf32, #tpu.memory_space<smem>>
    %c22 = arith.constant 22 : index
    %22 = memref.load %arg0[%c22] : memref<146xf32, #tpu.memory_space<smem>>
    %c23 = arith.constant 23 : index
    %23 = memref.load %arg0[%c23] : memref<146xf32, #tpu.memory_space<smem>>
    %c24 = arith.constant 24 : index
    %24 = memref.load %arg0[%c24] : memref<146xf32, #tpu.memory_space<smem>>
    %c25 = arith.constant 25 : index
    %25 = memref.load %arg0[%c25] : memref<146xf32, #tpu.memory_space<smem>>
    %c26 = arith.constant 26 : index
    %26 = memref.load %arg0[%c26] : memref<146xf32, #tpu.memory_space<smem>>
    %c27 = arith.constant 27 : index
    %27 = memref.load %arg0[%c27] : memref<146xf32, #tpu.memory_space<smem>>
    %c28 = arith.constant 28 : index
    %28 = memref.load %arg0[%c28] : memref<146xf32, #tpu.memory_space<smem>>
    %c29 = arith.constant 29 : index
    %29 = memref.load %arg0[%c29] : memref<146xf32, #tpu.memory_space<smem>>
    %c30 = arith.constant 30 : index
    %30 = memref.load %arg0[%c30] : memref<146xf32, #tpu.memory_space<smem>>
    %c31 = arith.constant 31 : index
    %31 = memref.load %arg0[%c31] : memref<146xf32, #tpu.memory_space<smem>>
    %c32 = arith.constant 32 : index
    %32 = memref.load %arg0[%c32] : memref<146xf32, #tpu.memory_space<smem>>
    %c33 = arith.constant 33 : index
    %33 = memref.load %arg0[%c33] : memref<146xf32, #tpu.memory_space<smem>>
    %c34 = arith.constant 34 : index
    %34 = memref.load %arg0[%c34] : memref<146xf32, #tpu.memory_space<smem>>
    %c35 = arith.constant 35 : index
    %35 = memref.load %arg0[%c35] : memref<146xf32, #tpu.memory_space<smem>>
    %c36 = arith.constant 36 : index
    %36 = memref.load %arg0[%c36] : memref<146xf32, #tpu.memory_space<smem>>
    %c37 = arith.constant 37 : index
    %37 = memref.load %arg0[%c37] : memref<146xf32, #tpu.memory_space<smem>>
    %c38 = arith.constant 38 : index
    %38 = memref.load %arg0[%c38] : memref<146xf32, #tpu.memory_space<smem>>
    %c39 = arith.constant 39 : index
    %39 = memref.load %arg0[%c39] : memref<146xf32, #tpu.memory_space<smem>>
    %c40 = arith.constant 40 : index
    %40 = memref.load %arg0[%c40] : memref<146xf32, #tpu.memory_space<smem>>
    %c41 = arith.constant 41 : index
    %41 = memref.load %arg0[%c41] : memref<146xf32, #tpu.memory_space<smem>>
    %c42 = arith.constant 42 : index
    %42 = memref.load %arg0[%c42] : memref<146xf32, #tpu.memory_space<smem>>
    %c43 = arith.constant 43 : index
    %43 = memref.load %arg0[%c43] : memref<146xf32, #tpu.memory_space<smem>>
    %c44 = arith.constant 44 : index
    %44 = memref.load %arg0[%c44] : memref<146xf32, #tpu.memory_space<smem>>
    %c45 = arith.constant 45 : index
    %45 = memref.load %arg0[%c45] : memref<146xf32, #tpu.memory_space<smem>>
    %c46 = arith.constant 46 : index
    %46 = memref.load %arg0[%c46] : memref<146xf32, #tpu.memory_space<smem>>
    %c47 = arith.constant 47 : index
    %47 = memref.load %arg0[%c47] : memref<146xf32, #tpu.memory_space<smem>>
    %c48 = arith.constant 48 : index
    %48 = memref.load %arg0[%c48] : memref<146xf32, #tpu.memory_space<smem>>
    %c49 = arith.constant 49 : index
    %49 = memref.load %arg0[%c49] : memref<146xf32, #tpu.memory_space<smem>>
    %c50 = arith.constant 50 : index
    %50 = memref.load %arg0[%c50] : memref<146xf32, #tpu.memory_space<smem>>
    %c51 = arith.constant 51 : index
    %51 = memref.load %arg0[%c51] : memref<146xf32, #tpu.memory_space<smem>>
    %c52 = arith.constant 52 : index
    %52 = memref.load %arg0[%c52] : memref<146xf32, #tpu.memory_space<smem>>
    %c53 = arith.constant 53 : index
    %53 = memref.load %arg0[%c53] : memref<146xf32, #tpu.memory_space<smem>>
    %c54 = arith.constant 54 : index
    %54 = memref.load %arg0[%c54] : memref<146xf32, #tpu.memory_space<smem>>
    %c55 = arith.constant 55 : index
    %55 = memref.load %arg0[%c55] : memref<146xf32, #tpu.memory_space<smem>>
    %c56 = arith.constant 56 : index
    %56 = memref.load %arg0[%c56] : memref<146xf32, #tpu.memory_space<smem>>
    %c57 = arith.constant 57 : index
    %57 = memref.load %arg0[%c57] : memref<146xf32, #tpu.memory_space<smem>>
    %c58 = arith.constant 58 : index
    %58 = memref.load %arg0[%c58] : memref<146xf32, #tpu.memory_space<smem>>
    %c59 = arith.constant 59 : index
    %59 = memref.load %arg0[%c59] : memref<146xf32, #tpu.memory_space<smem>>
    %c60 = arith.constant 60 : index
    %60 = memref.load %arg0[%c60] : memref<146xf32, #tpu.memory_space<smem>>
    %c61 = arith.constant 61 : index
    %61 = memref.load %arg0[%c61] : memref<146xf32, #tpu.memory_space<smem>>
    %c62 = arith.constant 62 : index
    %62 = memref.load %arg0[%c62] : memref<146xf32, #tpu.memory_space<smem>>
    %c63 = arith.constant 63 : index
    %63 = memref.load %arg0[%c63] : memref<146xf32, #tpu.memory_space<smem>>
    %c64 = arith.constant 64 : index
    %64 = memref.load %arg0[%c64] : memref<146xf32, #tpu.memory_space<smem>>
    %c65 = arith.constant 65 : index
    %65 = memref.load %arg0[%c65] : memref<146xf32, #tpu.memory_space<smem>>
    %c66 = arith.constant 66 : index
    %66 = memref.load %arg0[%c66] : memref<146xf32, #tpu.memory_space<smem>>
    %c67 = arith.constant 67 : index
    %67 = memref.load %arg0[%c67] : memref<146xf32, #tpu.memory_space<smem>>
    %c68 = arith.constant 68 : index
    %68 = memref.load %arg0[%c68] : memref<146xf32, #tpu.memory_space<smem>>
    %c69 = arith.constant 69 : index
    %69 = memref.load %arg0[%c69] : memref<146xf32, #tpu.memory_space<smem>>
    %c70 = arith.constant 70 : index
    %70 = memref.load %arg0[%c70] : memref<146xf32, #tpu.memory_space<smem>>
    %c71 = arith.constant 71 : index
    %71 = memref.load %arg0[%c71] : memref<146xf32, #tpu.memory_space<smem>>
    %c72 = arith.constant 72 : index
    %72 = memref.load %arg0[%c72] : memref<146xf32, #tpu.memory_space<smem>>
    %c73 = arith.constant 73 : index
    %73 = memref.load %arg0[%c73] : memref<146xf32, #tpu.memory_space<smem>>
    %c74 = arith.constant 74 : index
    %74 = memref.load %arg0[%c74] : memref<146xf32, #tpu.memory_space<smem>>
    %c75 = arith.constant 75 : index
    %75 = memref.load %arg0[%c75] : memref<146xf32, #tpu.memory_space<smem>>
    %c76 = arith.constant 76 : index
    %76 = memref.load %arg0[%c76] : memref<146xf32, #tpu.memory_space<smem>>
    %c77 = arith.constant 77 : index
    %77 = memref.load %arg0[%c77] : memref<146xf32, #tpu.memory_space<smem>>
    %c78 = arith.constant 78 : index
    %78 = memref.load %arg0[%c78] : memref<146xf32, #tpu.memory_space<smem>>
    %c79 = arith.constant 79 : index
    %79 = memref.load %arg0[%c79] : memref<146xf32, #tpu.memory_space<smem>>
    %c80 = arith.constant 80 : index
    %80 = memref.load %arg0[%c80] : memref<146xf32, #tpu.memory_space<smem>>
    %c81 = arith.constant 81 : index
    %81 = memref.load %arg0[%c81] : memref<146xf32, #tpu.memory_space<smem>>
    %c82 = arith.constant 82 : index
    %82 = memref.load %arg0[%c82] : memref<146xf32, #tpu.memory_space<smem>>
    %c83 = arith.constant 83 : index
    %83 = memref.load %arg0[%c83] : memref<146xf32, #tpu.memory_space<smem>>
    %c84 = arith.constant 84 : index
    %84 = memref.load %arg0[%c84] : memref<146xf32, #tpu.memory_space<smem>>
    %c85 = arith.constant 85 : index
    %85 = memref.load %arg0[%c85] : memref<146xf32, #tpu.memory_space<smem>>
    %c86 = arith.constant 86 : index
    %86 = memref.load %arg0[%c86] : memref<146xf32, #tpu.memory_space<smem>>
    %c87 = arith.constant 87 : index
    %87 = memref.load %arg0[%c87] : memref<146xf32, #tpu.memory_space<smem>>
    %c88 = arith.constant 88 : index
    %88 = memref.load %arg0[%c88] : memref<146xf32, #tpu.memory_space<smem>>
    %c89 = arith.constant 89 : index
    %89 = memref.load %arg0[%c89] : memref<146xf32, #tpu.memory_space<smem>>
    %c90 = arith.constant 90 : index
    %90 = memref.load %arg0[%c90] : memref<146xf32, #tpu.memory_space<smem>>
    %c91 = arith.constant 91 : index
    %91 = memref.load %arg0[%c91] : memref<146xf32, #tpu.memory_space<smem>>
    %c92 = arith.constant 92 : index
    %92 = memref.load %arg0[%c92] : memref<146xf32, #tpu.memory_space<smem>>
    %c93 = arith.constant 93 : index
    %93 = memref.load %arg0[%c93] : memref<146xf32, #tpu.memory_space<smem>>
    %c94 = arith.constant 94 : index
    %94 = memref.load %arg0[%c94] : memref<146xf32, #tpu.memory_space<smem>>
    %c95 = arith.constant 95 : index
    %95 = memref.load %arg0[%c95] : memref<146xf32, #tpu.memory_space<smem>>
    %c96 = arith.constant 96 : index
    %96 = memref.load %arg0[%c96] : memref<146xf32, #tpu.memory_space<smem>>
    %c97 = arith.constant 97 : index
    %97 = memref.load %arg0[%c97] : memref<146xf32, #tpu.memory_space<smem>>
    %c98 = arith.constant 98 : index
    %98 = memref.load %arg0[%c98] : memref<146xf32, #tpu.memory_space<smem>>
    %c99 = arith.constant 99 : index
    %99 = memref.load %arg0[%c99] : memref<146xf32, #tpu.memory_space<smem>>
    %c100 = arith.constant 100 : index
    %100 = memref.load %arg0[%c100] : memref<146xf32, #tpu.memory_space<smem>>
    %c101 = arith.constant 101 : index
    %101 = memref.load %arg0[%c101] : memref<146xf32, #tpu.memory_space<smem>>
    %c102 = arith.constant 102 : index
    %102 = memref.load %arg0[%c102] : memref<146xf32, #tpu.memory_space<smem>>
    %c103 = arith.constant 103 : index
    %103 = memref.load %arg0[%c103] : memref<146xf32, #tpu.memory_space<smem>>
    %c104 = arith.constant 104 : index
    %104 = memref.load %arg0[%c104] : memref<146xf32, #tpu.memory_space<smem>>
    %c105 = arith.constant 105 : index
    %105 = memref.load %arg0[%c105] : memref<146xf32, #tpu.memory_space<smem>>
    %c106 = arith.constant 106 : index
    %106 = memref.load %arg0[%c106] : memref<146xf32, #tpu.memory_space<smem>>
    %c107 = arith.constant 107 : index
    %107 = memref.load %arg0[%c107] : memref<146xf32, #tpu.memory_space<smem>>
    %c108 = arith.constant 108 : index
    %108 = memref.load %arg0[%c108] : memref<146xf32, #tpu.memory_space<smem>>
    %c109 = arith.constant 109 : index
    %109 = memref.load %arg0[%c109] : memref<146xf32, #tpu.memory_space<smem>>
    %c110 = arith.constant 110 : index
    %110 = memref.load %arg0[%c110] : memref<146xf32, #tpu.memory_space<smem>>
    %c111 = arith.constant 111 : index
    %111 = memref.load %arg0[%c111] : memref<146xf32, #tpu.memory_space<smem>>
    %c112 = arith.constant 112 : index
    %112 = memref.load %arg0[%c112] : memref<146xf32, #tpu.memory_space<smem>>
    %c113 = arith.constant 113 : index
    %113 = memref.load %arg0[%c113] : memref<146xf32, #tpu.memory_space<smem>>
    %c114 = arith.constant 114 : index
    %114 = memref.load %arg0[%c114] : memref<146xf32, #tpu.memory_space<smem>>
    %c115 = arith.constant 115 : index
    %115 = memref.load %arg0[%c115] : memref<146xf32, #tpu.memory_space<smem>>
    %c116 = arith.constant 116 : index
    %116 = memref.load %arg0[%c116] : memref<146xf32, #tpu.memory_space<smem>>
    %c117 = arith.constant 117 : index
    %117 = memref.load %arg0[%c117] : memref<146xf32, #tpu.memory_space<smem>>
    %c118 = arith.constant 118 : index
    %118 = memref.load %arg0[%c118] : memref<146xf32, #tpu.memory_space<smem>>
    %c119 = arith.constant 119 : index
    %119 = memref.load %arg0[%c119] : memref<146xf32, #tpu.memory_space<smem>>
    %c120 = arith.constant 120 : index
    %120 = memref.load %arg0[%c120] : memref<146xf32, #tpu.memory_space<smem>>
    %c121 = arith.constant 121 : index
    %121 = memref.load %arg0[%c121] : memref<146xf32, #tpu.memory_space<smem>>
    %c122 = arith.constant 122 : index
    %122 = memref.load %arg0[%c122] : memref<146xf32, #tpu.memory_space<smem>>
    %c123 = arith.constant 123 : index
    %123 = memref.load %arg0[%c123] : memref<146xf32, #tpu.memory_space<smem>>
    %c124 = arith.constant 124 : index
    %124 = memref.load %arg0[%c124] : memref<146xf32, #tpu.memory_space<smem>>
    %c125 = arith.constant 125 : index
    %125 = memref.load %arg0[%c125] : memref<146xf32, #tpu.memory_space<smem>>
    %c126 = arith.constant 126 : index
    %126 = memref.load %arg0[%c126] : memref<146xf32, #tpu.memory_space<smem>>
    %c127 = arith.constant 127 : index
    %127 = memref.load %arg0[%c127] : memref<146xf32, #tpu.memory_space<smem>>
    %c128 = arith.constant 128 : index
    %128 = memref.load %arg0[%c128] : memref<146xf32, #tpu.memory_space<smem>>
    %c129 = arith.constant 129 : index
    %129 = memref.load %arg0[%c129] : memref<146xf32, #tpu.memory_space<smem>>
    %c130 = arith.constant 130 : index
    %130 = memref.load %arg0[%c130] : memref<146xf32, #tpu.memory_space<smem>>
    %c131 = arith.constant 131 : index
    %131 = memref.load %arg0[%c131] : memref<146xf32, #tpu.memory_space<smem>>
    %c132 = arith.constant 132 : index
    %132 = memref.load %arg0[%c132] : memref<146xf32, #tpu.memory_space<smem>>
    %c133 = arith.constant 133 : index
    %133 = memref.load %arg0[%c133] : memref<146xf32, #tpu.memory_space<smem>>
    %c134 = arith.constant 134 : index
    %134 = memref.load %arg0[%c134] : memref<146xf32, #tpu.memory_space<smem>>
    %c135 = arith.constant 135 : index
    %135 = memref.load %arg0[%c135] : memref<146xf32, #tpu.memory_space<smem>>
    %c136 = arith.constant 136 : index
    %136 = memref.load %arg0[%c136] : memref<146xf32, #tpu.memory_space<smem>>
    %c137 = arith.constant 137 : index
    %137 = memref.load %arg0[%c137] : memref<146xf32, #tpu.memory_space<smem>>
    %c138 = arith.constant 138 : index
    %138 = memref.load %arg0[%c138] : memref<146xf32, #tpu.memory_space<smem>>
    %c139 = arith.constant 139 : index
    %139 = memref.load %arg0[%c139] : memref<146xf32, #tpu.memory_space<smem>>
    %c140 = arith.constant 140 : index
    %140 = memref.load %arg0[%c140] : memref<146xf32, #tpu.memory_space<smem>>
    %c141 = arith.constant 141 : index
    %141 = memref.load %arg0[%c141] : memref<146xf32, #tpu.memory_space<smem>>
    %c142 = arith.constant 142 : index
    %142 = memref.load %arg0[%c142] : memref<146xf32, #tpu.memory_space<smem>>
    %c143 = arith.constant 143 : index
    %143 = memref.load %arg0[%c143] : memref<146xf32, #tpu.memory_space<smem>>
    %c144 = arith.constant 144 : index
    %144 = memref.load %arg0[%c144] : memref<146xf32, #tpu.memory_space<smem>>
    %c145 = arith.constant 145 : index
    %145 = memref.load %arg0[%c145] : memref<146xf32, #tpu.memory_space<smem>>
    %c0_0 = arith.constant 0 : index
    %c0_1 = arith.constant 0 : index
    %146 = vector.load %arg1[%c0_0, %c0_1] : memref<4x1xf32, #tpu.memory_space<vmem>>, vector<4x1xf32>
    %c0_2 = arith.constant 0 : index
    %c0_3 = arith.constant 0 : index
    %147 = vector.load %arg2[%c0_2, %c0_3] : memref<4x1xf32, #tpu.memory_space<vmem>>, vector<4x1xf32>
    %c0_4 = arith.constant 0 : index
    %c0_5 = arith.constant 0 : index
    %148 = vector.load %arg3[%c0_4, %c0_5] : memref<4x256xf32, #tpu.memory_space<vmem>>, vector<4x256xf32>
    %cst = arith.constant 0.000000e+00 : f32
    %149 = vector.broadcast %cst : f32 to vector<4x256xf32>
    %cst_6 = arith.constant 0.000000e+00 : f32
    %150 = vector.broadcast %cst_6 : f32 to vector<4x256xf32>
    %151 = tpu.iota {dimensions = array<i32: 1>} : vector<4x256xi32>
    %c15_i32 = arith.constant 15 : i32
    %152 = vector.broadcast %c15_i32 : i32 to vector<4x256xi32>
    %153 = arith.andi %151, %152 : vector<4x256xi32>
    %c4_i32 = arith.constant 4 : i32
    %154 = vector.broadcast %c4_i32 : i32 to vector<4x256xi32>
    %155 = arith.shrsi %151, %154 : vector<4x256xi32>
    %c0_i32 = arith.constant 0 : i32
    %156 = vector.broadcast %c0_i32 : i32 to vector<4x256xi32>
    %157 = arith.cmpi eq, %153, %156 : vector<4x256xi32>
    %c15_i32_7 = arith.constant 15 : i32
    %158 = vector.broadcast %c15_i32_7 : i32 to vector<4x256xi32>
    %159 = arith.cmpi eq, %153, %158 : vector<4x256xi32>
    %c0_i32_8 = arith.constant 0 : i32
    %160 = vector.broadcast %c0_i32_8 : i32 to vector<4x256xi32>
    %161 = arith.cmpi eq, %155, %160 : vector<4x256xi32>
    %c15_i32_9 = arith.constant 15 : i32
    %162 = vector.broadcast %c15_i32_9 : i32 to vector<4x256xi32>
    %163 = arith.cmpi eq, %155, %162 : vector<4x256xi32>
    %c1_i32 = arith.constant 1 : i32
    %164 = tpu.dynamic_rotate %148 by %c1_i32 dim 1 : vector<4x256xf32>, i32 -> vector<4x256xf32>
    %165 = arith.select %157, %148, %164 : vector<4x256xi1>, vector<4x256xf32>
    %c255_i32 = arith.constant 255 : i32
    %166 = tpu.dynamic_rotate %148 by %c255_i32 dim 1 : vector<4x256xf32>, i32 -> vector<4x256xf32>
    %167 = arith.select %159, %148, %166 : vector<4x256xi1>, vector<4x256xf32>
    %c16_i32 = arith.constant 16 : i32
    %168 = tpu.dynamic_rotate %165 by %c16_i32 dim 1 : vector<4x256xf32>, i32 -> vector<4x256xf32>
    %169 = arith.select %161, %165, %168 : vector<4x256xi1>, vector<4x256xf32>
    %c240_i32 = arith.constant 240 : i32
    %170 = tpu.dynamic_rotate %165 by %c240_i32 dim 1 : vector<4x256xf32>, i32 -> vector<4x256xf32>
    %171 = arith.select %163, %165, %170 : vector<4x256xi1>, vector<4x256xf32>
    %c16_i32_10 = arith.constant 16 : i32
    %172 = tpu.dynamic_rotate %148 by %c16_i32_10 dim 1 : vector<4x256xf32>, i32 -> vector<4x256xf32>
    %173 = arith.select %161, %148, %172 : vector<4x256xi1>, vector<4x256xf32>
    %c240_i32_11 = arith.constant 240 : i32
    %174 = tpu.dynamic_rotate %148 by %c240_i32_11 dim 1 : vector<4x256xf32>, i32 -> vector<4x256xf32>
    %175 = arith.select %163, %148, %174 : vector<4x256xi1>, vector<4x256xf32>
    %c16_i32_12 = arith.constant 16 : i32
    %176 = tpu.dynamic_rotate %167 by %c16_i32_12 dim 1 : vector<4x256xf32>, i32 -> vector<4x256xf32>
    %177 = arith.select %161, %167, %176 : vector<4x256xi1>, vector<4x256xf32>
    %c240_i32_13 = arith.constant 240 : i32
    %178 = tpu.dynamic_rotate %167 by %c240_i32_13 dim 1 : vector<4x256xf32>, i32 -> vector<4x256xf32>
    %179 = arith.select %163, %167, %178 : vector<4x256xi1>, vector<4x256xf32>
    %180 = arith.addf %173, %175 : vector<4x256xf32>
    %181 = arith.addf %180, %165 : vector<4x256xf32>
    %182 = arith.addf %181, %167 : vector<4x256xf32>
    %cst_14 = arith.constant 4.000000e+00 : f32
    %183 = vector.broadcast %cst_14 : f32 to vector<4x256xf32>
    %184 = arith.mulf %183, %148 : vector<4x256xf32>
    %185 = arith.subf %182, %184 : vector<4x256xf32>
    %cst_15 = arith.constant 1.000000e+00 : f32
    %186 = vector.broadcast %cst_15 : f32 to vector<4x256xf32>
    %187 = arith.mulf %185, %186 : vector<4x256xf32>
    %188 = vector.broadcast %146 : vector<4x1xf32> to vector<4x256xf32>
    %189 = arith.mulf %188, %187 : vector<4x256xf32>
    %190 = vector.extract_strided_slice %165 {offsets = [0, 0], sizes = [2, 256], strides = [1, 1]} : vector<4x256xf32> to vector<2x256xf32>
    %191 = vector.extract_strided_slice %165 {offsets = [2, 0], sizes = [2, 256], strides = [1, 1]} : vector<4x256xf32> to vector<2x256xf32>
    %192 = vector.extract_strided_slice %169 {offsets = [0, 0], sizes = [2, 256], strides = [1, 1]} : vector<4x256xf32> to vector<2x256xf32>
    %193 = vector.extract_strided_slice %169 {offsets = [2, 0], sizes = [2, 256], strides = [1, 1]} : vector<4x256xf32> to vector<2x256xf32>
    %194 = vector.extract_strided_slice %171 {offsets = [0, 0], sizes = [2, 256], strides = [1, 1]} : vector<4x256xf32> to vector<2x256xf32>
    %195 = vector.extract_strided_slice %171 {offsets = [2, 0], sizes = [2, 256], strides = [1, 1]} : vector<4x256xf32> to vector<2x256xf32>
    %196 = vector.extract_strided_slice %148 {offsets = [0, 0], sizes = [2, 256], strides = [1, 1]} : vector<4x256xf32> to vector<2x256xf32>
    %197 = vector.extract_strided_slice %148 {offsets = [2, 0], sizes = [2, 256], strides = [1, 1]} : vector<4x256xf32> to vector<2x256xf32>
    %198 = vector.extract_strided_slice %173 {offsets = [0, 0], sizes = [2, 256], strides = [1, 1]} : vector<4x256xf32> to vector<2x256xf32>
    %199 = vector.extract_strided_slice %173 {offsets = [2, 0], sizes = [2, 256], strides = [1, 1]} : vector<4x256xf32> to vector<2x256xf32>
    %200 = vector.extract_strided_slice %175 {offsets = [0, 0], sizes = [2, 256], strides = [1, 1]} : vector<4x256xf32> to vector<2x256xf32>
    %201 = vector.extract_strided_slice %175 {offsets = [2, 0], sizes = [2, 256], strides = [1, 1]} : vector<4x256xf32> to vector<2x256xf32>
    %202 = vector.extract_strided_slice %167 {offsets = [0, 0], sizes = [2, 256], strides = [1, 1]} : vector<4x256xf32> to vector<2x256xf32>
    %203 = vector.extract_strided_slice %167 {offsets = [2, 0], sizes = [2, 256], strides = [1, 1]} : vector<4x256xf32> to vector<2x256xf32>
    %204 = vector.extract_strided_slice %177 {offsets = [0, 0], sizes = [2, 256], strides = [1, 1]} : vector<4x256xf32> to vector<2x256xf32>
    %205 = vector.extract_strided_slice %177 {offsets = [2, 0], sizes = [2, 256], strides = [1, 1]} : vector<4x256xf32> to vector<2x256xf32>
    %206 = vector.extract_strided_slice %179 {offsets = [0, 0], sizes = [2, 256], strides = [1, 1]} : vector<4x256xf32> to vector<2x256xf32>
    %207 = vector.extract_strided_slice %179 {offsets = [2, 0], sizes = [2, 256], strides = [1, 1]} : vector<4x256xf32> to vector<2x256xf32>
    %208 = vector.broadcast %0 : f32 to vector<2x256xf32>
    %209 = arith.mulf %208, %192 : vector<2x256xf32>
    %210 = vector.broadcast %1 : f32 to vector<2x256xf32>
    %211 = arith.mulf %210, %198 : vector<2x256xf32>
    %212 = arith.addf %209, %211 : vector<2x256xf32>
    %213 = vector.broadcast %2 : f32 to vector<2x256xf32>
    %214 = arith.mulf %213, %204 : vector<2x256xf32>
    %215 = arith.addf %212, %214 : vector<2x256xf32>
    %216 = vector.broadcast %3 : f32 to vector<2x256xf32>
    %217 = arith.mulf %216, %190 : vector<2x256xf32>
    %218 = arith.addf %215, %217 : vector<2x256xf32>
    %219 = vector.broadcast %4 : f32 to vector<2x256xf32>
    %220 = arith.mulf %219, %196 : vector<2x256xf32>
    %221 = arith.addf %218, %220 : vector<2x256xf32>
    %222 = vector.broadcast %5 : f32 to vector<2x256xf32>
    %223 = arith.mulf %222, %202 : vector<2x256xf32>
    %224 = arith.addf %221, %223 : vector<2x256xf32>
    %225 = vector.broadcast %6 : f32 to vector<2x256xf32>
    %226 = arith.mulf %225, %194 : vector<2x256xf32>
    %227 = arith.addf %224, %226 : vector<2x256xf32>
    %228 = vector.broadcast %7 : f32 to vector<2x256xf32>
    %229 = arith.mulf %228, %200 : vector<2x256xf32>
    %230 = arith.addf %227, %229 : vector<2x256xf32>
    %231 = vector.broadcast %8 : f32 to vector<2x256xf32>
    %232 = arith.mulf %231, %206 : vector<2x256xf32>
    %233 = arith.addf %230, %232 : vector<2x256xf32>
    %234 = vector.broadcast %9 : f32 to vector<2x256xf32>
    %235 = arith.mulf %234, %193 : vector<2x256xf32>
    %236 = arith.addf %233, %235 : vector<2x256xf32>
    %237 = vector.broadcast %10 : f32 to vector<2x256xf32>
    %238 = arith.mulf %237, %199 : vector<2x256xf32>
    %239 = arith.addf %236, %238 : vector<2x256xf32>
    %240 = vector.broadcast %11 : f32 to vector<2x256xf32>
    %241 = arith.mulf %240, %205 : vector<2x256xf32>
    %242 = arith.addf %239, %241 : vector<2x256xf32>
    %243 = vector.broadcast %12 : f32 to vector<2x256xf32>
    %244 = arith.mulf %243, %191 : vector<2x256xf32>
    %245 = arith.addf %242, %244 : vector<2x256xf32>
    %246 = vector.broadcast %13 : f32 to vector<2x256xf32>
    %247 = arith.mulf %246, %197 : vector<2x256xf32>
    %248 = arith.addf %245, %247 : vector<2x256xf32>
    %249 = vector.broadcast %14 : f32 to vector<2x256xf32>
    %250 = arith.mulf %249, %203 : vector<2x256xf32>
    %251 = arith.addf %248, %250 : vector<2x256xf32>
    %252 = vector.broadcast %15 : f32 to vector<2x256xf32>
    %253 = arith.mulf %252, %195 : vector<2x256xf32>
    %254 = arith.addf %251, %253 : vector<2x256xf32>
    %255 = vector.broadcast %16 : f32 to vector<2x256xf32>
    %256 = arith.mulf %255, %201 : vector<2x256xf32>
    %257 = arith.addf %254, %256 : vector<2x256xf32>
    %258 = vector.broadcast %17 : f32 to vector<2x256xf32>
    %259 = arith.mulf %258, %207 : vector<2x256xf32>
    %260 = arith.addf %257, %259 : vector<2x256xf32>
    %261 = vector.broadcast %18 : f32 to vector<2x256xf32>
    %262 = arith.mulf %261, %192 : vector<2x256xf32>
    %263 = vector.broadcast %19 : f32 to vector<2x256xf32>
    %264 = arith.mulf %263, %198 : vector<2x256xf32>
    %265 = arith.addf %262, %264 : vector<2x256xf32>
    %266 = vector.broadcast %20 : f32 to vector<2x256xf32>
    %267 = arith.mulf %266, %204 : vector<2x256xf32>
    %268 = arith.addf %265, %267 : vector<2x256xf32>
    %269 = vector.broadcast %21 : f32 to vector<2x256xf32>
    %270 = arith.mulf %269, %190 : vector<2x256xf32>
    %271 = arith.addf %268, %270 : vector<2x256xf32>
    %272 = vector.broadcast %22 : f32 to vector<2x256xf32>
    %273 = arith.mulf %272, %196 : vector<2x256xf32>
    %274 = arith.addf %271, %273 : vector<2x256xf32>
    %275 = vector.broadcast %23 : f32 to vector<2x256xf32>
    %276 = arith.mulf %275, %202 : vector<2x256xf32>
    %277 = arith.addf %274, %276 : vector<2x256xf32>
    %278 = vector.broadcast %24 : f32 to vector<2x256xf32>
    %279 = arith.mulf %278, %194 : vector<2x256xf32>
    %280 = arith.addf %277, %279 : vector<2x256xf32>
    %281 = vector.broadcast %25 : f32 to vector<2x256xf32>
    %282 = arith.mulf %281, %200 : vector<2x256xf32>
    %283 = arith.addf %280, %282 : vector<2x256xf32>
    %284 = vector.broadcast %26 : f32 to vector<2x256xf32>
    %285 = arith.mulf %284, %206 : vector<2x256xf32>
    %286 = arith.addf %283, %285 : vector<2x256xf32>
    %287 = vector.broadcast %27 : f32 to vector<2x256xf32>
    %288 = arith.mulf %287, %193 : vector<2x256xf32>
    %289 = arith.addf %286, %288 : vector<2x256xf32>
    %290 = vector.broadcast %28 : f32 to vector<2x256xf32>
    %291 = arith.mulf %290, %199 : vector<2x256xf32>
    %292 = arith.addf %289, %291 : vector<2x256xf32>
    %293 = vector.broadcast %29 : f32 to vector<2x256xf32>
    %294 = arith.mulf %293, %205 : vector<2x256xf32>
    %295 = arith.addf %292, %294 : vector<2x256xf32>
    %296 = vector.broadcast %30 : f32 to vector<2x256xf32>
    %297 = arith.mulf %296, %191 : vector<2x256xf32>
    %298 = arith.addf %295, %297 : vector<2x256xf32>
    %299 = vector.broadcast %31 : f32 to vector<2x256xf32>
    %300 = arith.mulf %299, %197 : vector<2x256xf32>
    %301 = arith.addf %298, %300 : vector<2x256xf32>
    %302 = vector.broadcast %32 : f32 to vector<2x256xf32>
    %303 = arith.mulf %302, %203 : vector<2x256xf32>
    %304 = arith.addf %301, %303 : vector<2x256xf32>
    %305 = vector.broadcast %33 : f32 to vector<2x256xf32>
    %306 = arith.mulf %305, %195 : vector<2x256xf32>
    %307 = arith.addf %304, %306 : vector<2x256xf32>
    %308 = vector.broadcast %34 : f32 to vector<2x256xf32>
    %309 = arith.mulf %308, %201 : vector<2x256xf32>
    %310 = arith.addf %307, %309 : vector<2x256xf32>
    %311 = vector.broadcast %35 : f32 to vector<2x256xf32>
    %312 = arith.mulf %311, %207 : vector<2x256xf32>
    %313 = arith.addf %310, %312 : vector<2x256xf32>
    %314 = vector.broadcast %36 : f32 to vector<2x256xf32>
    %315 = arith.mulf %314, %192 : vector<2x256xf32>
    %316 = vector.broadcast %37 : f32 to vector<2x256xf32>
    %317 = arith.mulf %316, %198 : vector<2x256xf32>
    %318 = arith.addf %315, %317 : vector<2x256xf32>
    %319 = vector.broadcast %38 : f32 to vector<2x256xf32>
    %320 = arith.mulf %319, %204 : vector<2x256xf32>
    %321 = arith.addf %318, %320 : vector<2x256xf32>
    %322 = vector.broadcast %39 : f32 to vector<2x256xf32>
    %323 = arith.mulf %322, %190 : vector<2x256xf32>
    %324 = arith.addf %321, %323 : vector<2x256xf32>
    %325 = vector.broadcast %40 : f32 to vector<2x256xf32>
    %326 = arith.mulf %325, %196 : vector<2x256xf32>
    %327 = arith.addf %324, %326 : vector<2x256xf32>
    %328 = vector.broadcast %41 : f32 to vector<2x256xf32>
    %329 = arith.mulf %328, %202 : vector<2x256xf32>
    %330 = arith.addf %327, %329 : vector<2x256xf32>
    %331 = vector.broadcast %42 : f32 to vector<2x256xf32>
    %332 = arith.mulf %331, %194 : vector<2x256xf32>
    %333 = arith.addf %330, %332 : vector<2x256xf32>
    %334 = vector.broadcast %43 : f32 to vector<2x256xf32>
    %335 = arith.mulf %334, %200 : vector<2x256xf32>
    %336 = arith.addf %333, %335 : vector<2x256xf32>
    %337 = vector.broadcast %44 : f32 to vector<2x256xf32>
    %338 = arith.mulf %337, %206 : vector<2x256xf32>
    %339 = arith.addf %336, %338 : vector<2x256xf32>
    %340 = vector.broadcast %45 : f32 to vector<2x256xf32>
    %341 = arith.mulf %340, %193 : vector<2x256xf32>
    %342 = arith.addf %339, %341 : vector<2x256xf32>
    %343 = vector.broadcast %46 : f32 to vector<2x256xf32>
    %344 = arith.mulf %343, %199 : vector<2x256xf32>
    %345 = arith.addf %342, %344 : vector<2x256xf32>
    %346 = vector.broadcast %47 : f32 to vector<2x256xf32>
    %347 = arith.mulf %346, %205 : vector<2x256xf32>
    %348 = arith.addf %345, %347 : vector<2x256xf32>
    %349 = vector.broadcast %48 : f32 to vector<2x256xf32>
    %350 = arith.mulf %349, %191 : vector<2x256xf32>
    %351 = arith.addf %348, %350 : vector<2x256xf32>
    %352 = vector.broadcast %49 : f32 to vector<2x256xf32>
    %353 = arith.mulf %352, %197 : vector<2x256xf32>
    %354 = arith.addf %351, %353 : vector<2x256xf32>
    %355 = vector.broadcast %50 : f32 to vector<2x256xf32>
    %356 = arith.mulf %355, %203 : vector<2x256xf32>
    %357 = arith.addf %354, %356 : vector<2x256xf32>
    %358 = vector.broadcast %51 : f32 to vector<2x256xf32>
    %359 = arith.mulf %358, %195 : vector<2x256xf32>
    %360 = arith.addf %357, %359 : vector<2x256xf32>
    %361 = vector.broadcast %52 : f32 to vector<2x256xf32>
    %362 = arith.mulf %361, %201 : vector<2x256xf32>
    %363 = arith.addf %360, %362 : vector<2x256xf32>
    %364 = vector.broadcast %53 : f32 to vector<2x256xf32>
    %365 = arith.mulf %364, %207 : vector<2x256xf32>
    %366 = arith.addf %363, %365 : vector<2x256xf32>
    %367 = vector.broadcast %54 : f32 to vector<2x256xf32>
    %368 = arith.mulf %367, %192 : vector<2x256xf32>
    %369 = vector.broadcast %55 : f32 to vector<2x256xf32>
    %370 = arith.mulf %369, %198 : vector<2x256xf32>
    %371 = arith.addf %368, %370 : vector<2x256xf32>
    %372 = vector.broadcast %56 : f32 to vector<2x256xf32>
    %373 = arith.mulf %372, %204 : vector<2x256xf32>
    %374 = arith.addf %371, %373 : vector<2x256xf32>
    %375 = vector.broadcast %57 : f32 to vector<2x256xf32>
    %376 = arith.mulf %375, %190 : vector<2x256xf32>
    %377 = arith.addf %374, %376 : vector<2x256xf32>
    %378 = vector.broadcast %58 : f32 to vector<2x256xf32>
    %379 = arith.mulf %378, %196 : vector<2x256xf32>
    %380 = arith.addf %377, %379 : vector<2x256xf32>
    %381 = vector.broadcast %59 : f32 to vector<2x256xf32>
    %382 = arith.mulf %381, %202 : vector<2x256xf32>
    %383 = arith.addf %380, %382 : vector<2x256xf32>
    %384 = vector.broadcast %60 : f32 to vector<2x256xf32>
    %385 = arith.mulf %384, %194 : vector<2x256xf32>
    %386 = arith.addf %383, %385 : vector<2x256xf32>
    %387 = vector.broadcast %61 : f32 to vector<2x256xf32>
    %388 = arith.mulf %387, %200 : vector<2x256xf32>
    %389 = arith.addf %386, %388 : vector<2x256xf32>
    %390 = vector.broadcast %62 : f32 to vector<2x256xf32>
    %391 = arith.mulf %390, %206 : vector<2x256xf32>
    %392 = arith.addf %389, %391 : vector<2x256xf32>
    %393 = vector.broadcast %63 : f32 to vector<2x256xf32>
    %394 = arith.mulf %393, %193 : vector<2x256xf32>
    %395 = arith.addf %392, %394 : vector<2x256xf32>
    %396 = vector.broadcast %64 : f32 to vector<2x256xf32>
    %397 = arith.mulf %396, %199 : vector<2x256xf32>
    %398 = arith.addf %395, %397 : vector<2x256xf32>
    %399 = vector.broadcast %65 : f32 to vector<2x256xf32>
    %400 = arith.mulf %399, %205 : vector<2x256xf32>
    %401 = arith.addf %398, %400 : vector<2x256xf32>
    %402 = vector.broadcast %66 : f32 to vector<2x256xf32>
    %403 = arith.mulf %402, %191 : vector<2x256xf32>
    %404 = arith.addf %401, %403 : vector<2x256xf32>
    %405 = vector.broadcast %67 : f32 to vector<2x256xf32>
    %406 = arith.mulf %405, %197 : vector<2x256xf32>
    %407 = arith.addf %404, %406 : vector<2x256xf32>
    %408 = vector.broadcast %68 : f32 to vector<2x256xf32>
    %409 = arith.mulf %408, %203 : vector<2x256xf32>
    %410 = arith.addf %407, %409 : vector<2x256xf32>
    %411 = vector.broadcast %69 : f32 to vector<2x256xf32>
    %412 = arith.mulf %411, %195 : vector<2x256xf32>
    %413 = arith.addf %410, %412 : vector<2x256xf32>
    %414 = vector.broadcast %70 : f32 to vector<2x256xf32>
    %415 = arith.mulf %414, %201 : vector<2x256xf32>
    %416 = arith.addf %413, %415 : vector<2x256xf32>
    %417 = vector.broadcast %71 : f32 to vector<2x256xf32>
    %418 = arith.mulf %417, %207 : vector<2x256xf32>
    %419 = arith.addf %416, %418 : vector<2x256xf32>
    %420 = tpu.concatenate %260, %313, %366, %419 in 0 : vector<2x256xf32>, vector<2x256xf32>, vector<2x256xf32>, vector<2x256xf32> -> vector<8x256xf32>
    %cst_16 = arith.constant 0.000000e+00 : f32
    %421 = vector.broadcast %cst_16 : f32 to vector<8x256xf32>
    %422 = arith.cmpf oge, %420, %421 : vector<8x256xf32>
    %cst_17 = arith.constant 0.00999999977 : f32
    %423 = vector.broadcast %cst_17 : f32 to vector<8x256xf32>
    %424 = arith.mulf %423, %420 : vector<8x256xf32>
    %425 = arith.select %422, %420, %424 : vector<8x256xi1>, vector<8x256xf32>
    %426 = tpu.iota {dimensions = array<i32: 1>} : vector<8x256xi32>
    %c15_i32_18 = arith.constant 15 : i32
    %427 = vector.broadcast %c15_i32_18 : i32 to vector<8x256xi32>
    %428 = arith.andi %426, %427 : vector<8x256xi32>
    %c4_i32_19 = arith.constant 4 : i32
    %429 = vector.broadcast %c4_i32_19 : i32 to vector<8x256xi32>
    %430 = arith.shrsi %426, %429 : vector<8x256xi32>
    %c0_i32_20 = arith.constant 0 : i32
    %431 = vector.broadcast %c0_i32_20 : i32 to vector<8x256xi32>
    %432 = arith.cmpi eq, %428, %431 : vector<8x256xi32>
    %c15_i32_21 = arith.constant 15 : i32
    %433 = vector.broadcast %c15_i32_21 : i32 to vector<8x256xi32>
    %434 = arith.cmpi eq, %428, %433 : vector<8x256xi32>
    %c0_i32_22 = arith.constant 0 : i32
    %435 = vector.broadcast %c0_i32_22 : i32 to vector<8x256xi32>
    %436 = arith.cmpi eq, %430, %435 : vector<8x256xi32>
    %c15_i32_23 = arith.constant 15 : i32
    %437 = vector.broadcast %c15_i32_23 : i32 to vector<8x256xi32>
    %438 = arith.cmpi eq, %430, %437 : vector<8x256xi32>
    %c1_i32_24 = arith.constant 1 : i32
    %439 = tpu.dynamic_rotate %425 by %c1_i32_24 dim 1 : vector<8x256xf32>, i32 -> vector<8x256xf32>
    %440 = arith.select %432, %425, %439 : vector<8x256xi1>, vector<8x256xf32>
    %c255_i32_25 = arith.constant 255 : i32
    %441 = tpu.dynamic_rotate %425 by %c255_i32_25 dim 1 : vector<8x256xf32>, i32 -> vector<8x256xf32>
    %442 = arith.select %434, %425, %441 : vector<8x256xi1>, vector<8x256xf32>
    %c16_i32_26 = arith.constant 16 : i32
    %443 = tpu.dynamic_rotate %440 by %c16_i32_26 dim 1 : vector<8x256xf32>, i32 -> vector<8x256xf32>
    %444 = arith.select %436, %440, %443 : vector<8x256xi1>, vector<8x256xf32>
    %c240_i32_27 = arith.constant 240 : i32
    %445 = tpu.dynamic_rotate %440 by %c240_i32_27 dim 1 : vector<8x256xf32>, i32 -> vector<8x256xf32>
    %446 = arith.select %438, %440, %445 : vector<8x256xi1>, vector<8x256xf32>
    %c16_i32_28 = arith.constant 16 : i32
    %447 = tpu.dynamic_rotate %425 by %c16_i32_28 dim 1 : vector<8x256xf32>, i32 -> vector<8x256xf32>
    %448 = arith.select %436, %425, %447 : vector<8x256xi1>, vector<8x256xf32>
    %c240_i32_29 = arith.constant 240 : i32
    %449 = tpu.dynamic_rotate %425 by %c240_i32_29 dim 1 : vector<8x256xf32>, i32 -> vector<8x256xf32>
    %450 = arith.select %438, %425, %449 : vector<8x256xi1>, vector<8x256xf32>
    %c16_i32_30 = arith.constant 16 : i32
    %451 = tpu.dynamic_rotate %442 by %c16_i32_30 dim 1 : vector<8x256xf32>, i32 -> vector<8x256xf32>
    %452 = arith.select %436, %442, %451 : vector<8x256xi1>, vector<8x256xf32>
    %c240_i32_31 = arith.constant 240 : i32
    %453 = tpu.dynamic_rotate %442 by %c240_i32_31 dim 1 : vector<8x256xf32>, i32 -> vector<8x256xf32>
    %454 = arith.select %438, %442, %453 : vector<8x256xi1>, vector<8x256xf32>
    %455 = vector.extract_strided_slice %440 {offsets = [0, 0], sizes = [2, 256], strides = [1, 1]} : vector<8x256xf32> to vector<2x256xf32>
    %456 = vector.extract_strided_slice %440 {offsets = [2, 0], sizes = [2, 256], strides = [1, 1]} : vector<8x256xf32> to vector<2x256xf32>
    %457 = vector.extract_strided_slice %440 {offsets = [4, 0], sizes = [2, 256], strides = [1, 1]} : vector<8x256xf32> to vector<2x256xf32>
    %458 = vector.extract_strided_slice %440 {offsets = [6, 0], sizes = [2, 256], strides = [1, 1]} : vector<8x256xf32> to vector<2x256xf32>
    %459 = vector.extract_strided_slice %444 {offsets = [0, 0], sizes = [2, 256], strides = [1, 1]} : vector<8x256xf32> to vector<2x256xf32>
    %460 = vector.extract_strided_slice %444 {offsets = [2, 0], sizes = [2, 256], strides = [1, 1]} : vector<8x256xf32> to vector<2x256xf32>
    %461 = vector.extract_strided_slice %444 {offsets = [4, 0], sizes = [2, 256], strides = [1, 1]} : vector<8x256xf32> to vector<2x256xf32>
    %462 = vector.extract_strided_slice %444 {offsets = [6, 0], sizes = [2, 256], strides = [1, 1]} : vector<8x256xf32> to vector<2x256xf32>
    %463 = vector.extract_strided_slice %446 {offsets = [0, 0], sizes = [2, 256], strides = [1, 1]} : vector<8x256xf32> to vector<2x256xf32>
    %464 = vector.extract_strided_slice %446 {offsets = [2, 0], sizes = [2, 256], strides = [1, 1]} : vector<8x256xf32> to vector<2x256xf32>
    %465 = vector.extract_strided_slice %446 {offsets = [4, 0], sizes = [2, 256], strides = [1, 1]} : vector<8x256xf32> to vector<2x256xf32>
    %466 = vector.extract_strided_slice %446 {offsets = [6, 0], sizes = [2, 256], strides = [1, 1]} : vector<8x256xf32> to vector<2x256xf32>
    %467 = vector.extract_strided_slice %425 {offsets = [0, 0], sizes = [2, 256], strides = [1, 1]} : vector<8x256xf32> to vector<2x256xf32>
    %468 = vector.extract_strided_slice %425 {offsets = [2, 0], sizes = [2, 256], strides = [1, 1]} : vector<8x256xf32> to vector<2x256xf32>
    %469 = vector.extract_strided_slice %425 {offsets = [4, 0], sizes = [2, 256], strides = [1, 1]} : vector<8x256xf32> to vector<2x256xf32>
    %470 = vector.extract_strided_slice %425 {offsets = [6, 0], sizes = [2, 256], strides = [1, 1]} : vector<8x256xf32> to vector<2x256xf32>
    %471 = vector.extract_strided_slice %448 {offsets = [0, 0], sizes = [2, 256], strides = [1, 1]} : vector<8x256xf32> to vector<2x256xf32>
    %472 = vector.extract_strided_slice %448 {offsets = [2, 0], sizes = [2, 256], strides = [1, 1]} : vector<8x256xf32> to vector<2x256xf32>
    %473 = vector.extract_strided_slice %448 {offsets = [4, 0], sizes = [2, 256], strides = [1, 1]} : vector<8x256xf32> to vector<2x256xf32>
    %474 = vector.extract_strided_slice %448 {offsets = [6, 0], sizes = [2, 256], strides = [1, 1]} : vector<8x256xf32> to vector<2x256xf32>
    %475 = vector.extract_strided_slice %450 {offsets = [0, 0], sizes = [2, 256], strides = [1, 1]} : vector<8x256xf32> to vector<2x256xf32>
    %476 = vector.extract_strided_slice %450 {offsets = [2, 0], sizes = [2, 256], strides = [1, 1]} : vector<8x256xf32> to vector<2x256xf32>
    %477 = vector.extract_strided_slice %450 {offsets = [4, 0], sizes = [2, 256], strides = [1, 1]} : vector<8x256xf32> to vector<2x256xf32>
    %478 = vector.extract_strided_slice %450 {offsets = [6, 0], sizes = [2, 256], strides = [1, 1]} : vector<8x256xf32> to vector<2x256xf32>
    %479 = vector.extract_strided_slice %442 {offsets = [0, 0], sizes = [2, 256], strides = [1, 1]} : vector<8x256xf32> to vector<2x256xf32>
    %480 = vector.extract_strided_slice %442 {offsets = [2, 0], sizes = [2, 256], strides = [1, 1]} : vector<8x256xf32> to vector<2x256xf32>
    %481 = vector.extract_strided_slice %442 {offsets = [4, 0], sizes = [2, 256], strides = [1, 1]} : vector<8x256xf32> to vector<2x256xf32>
    %482 = vector.extract_strided_slice %442 {offsets = [6, 0], sizes = [2, 256], strides = [1, 1]} : vector<8x256xf32> to vector<2x256xf32>
    %483 = vector.extract_strided_slice %452 {offsets = [0, 0], sizes = [2, 256], strides = [1, 1]} : vector<8x256xf32> to vector<2x256xf32>
    %484 = vector.extract_strided_slice %452 {offsets = [2, 0], sizes = [2, 256], strides = [1, 1]} : vector<8x256xf32> to vector<2x256xf32>
    %485 = vector.extract_strided_slice %452 {offsets = [4, 0], sizes = [2, 256], strides = [1, 1]} : vector<8x256xf32> to vector<2x256xf32>
    %486 = vector.extract_strided_slice %452 {offsets = [6, 0], sizes = [2, 256], strides = [1, 1]} : vector<8x256xf32> to vector<2x256xf32>
    %487 = vector.extract_strided_slice %454 {offsets = [0, 0], sizes = [2, 256], strides = [1, 1]} : vector<8x256xf32> to vector<2x256xf32>
    %488 = vector.extract_strided_slice %454 {offsets = [2, 0], sizes = [2, 256], strides = [1, 1]} : vector<8x256xf32> to vector<2x256xf32>
    %489 = vector.extract_strided_slice %454 {offsets = [4, 0], sizes = [2, 256], strides = [1, 1]} : vector<8x256xf32> to vector<2x256xf32>
    %490 = vector.extract_strided_slice %454 {offsets = [6, 0], sizes = [2, 256], strides = [1, 1]} : vector<8x256xf32> to vector<2x256xf32>
    %491 = vector.broadcast %72 : f32 to vector<2x256xf32>
    %492 = arith.mulf %491, %459 : vector<2x256xf32>
    %493 = vector.broadcast %73 : f32 to vector<2x256xf32>
    %494 = arith.mulf %493, %471 : vector<2x256xf32>
    %495 = arith.addf %492, %494 : vector<2x256xf32>
    %496 = vector.broadcast %74 : f32 to vector<2x256xf32>
    %497 = arith.mulf %496, %483 : vector<2x256xf32>
    %498 = arith.addf %495, %497 : vector<2x256xf32>
    %499 = vector.broadcast %75 : f32 to vector<2x256xf32>
    %500 = arith.mulf %499, %455 : vector<2x256xf32>
    %501 = arith.addf %498, %500 : vector<2x256xf32>
    %502 = vector.broadcast %76 : f32 to vector<2x256xf32>
    %503 = arith.mulf %502, %467 : vector<2x256xf32>
    %504 = arith.addf %501, %503 : vector<2x256xf32>
    %505 = vector.broadcast %77 : f32 to vector<2x256xf32>
    %506 = arith.mulf %505, %479 : vector<2x256xf32>
    %507 = arith.addf %504, %506 : vector<2x256xf32>
    %508 = vector.broadcast %78 : f32 to vector<2x256xf32>
    %509 = arith.mulf %508, %463 : vector<2x256xf32>
    %510 = arith.addf %507, %509 : vector<2x256xf32>
    %511 = vector.broadcast %79 : f32 to vector<2x256xf32>
    %512 = arith.mulf %511, %475 : vector<2x256xf32>
    %513 = arith.addf %510, %512 : vector<2x256xf32>
    %514 = vector.broadcast %80 : f32 to vector<2x256xf32>
    %515 = arith.mulf %514, %487 : vector<2x256xf32>
    %516 = arith.addf %513, %515 : vector<2x256xf32>
    %517 = vector.broadcast %81 : f32 to vector<2x256xf32>
    %518 = arith.mulf %517, %460 : vector<2x256xf32>
    %519 = arith.addf %516, %518 : vector<2x256xf32>
    %520 = vector.broadcast %82 : f32 to vector<2x256xf32>
    %521 = arith.mulf %520, %472 : vector<2x256xf32>
    %522 = arith.addf %519, %521 : vector<2x256xf32>
    %523 = vector.broadcast %83 : f32 to vector<2x256xf32>
    %524 = arith.mulf %523, %484 : vector<2x256xf32>
    %525 = arith.addf %522, %524 : vector<2x256xf32>
    %526 = vector.broadcast %84 : f32 to vector<2x256xf32>
    %527 = arith.mulf %526, %456 : vector<2x256xf32>
    %528 = arith.addf %525, %527 : vector<2x256xf32>
    %529 = vector.broadcast %85 : f32 to vector<2x256xf32>
    %530 = arith.mulf %529, %468 : vector<2x256xf32>
    %531 = arith.addf %528, %530 : vector<2x256xf32>
    %532 = vector.broadcast %86 : f32 to vector<2x256xf32>
    %533 = arith.mulf %532, %480 : vector<2x256xf32>
    %534 = arith.addf %531, %533 : vector<2x256xf32>
    %535 = vector.broadcast %87 : f32 to vector<2x256xf32>
    %536 = arith.mulf %535, %464 : vector<2x256xf32>
    %537 = arith.addf %534, %536 : vector<2x256xf32>
    %538 = vector.broadcast %88 : f32 to vector<2x256xf32>
    %539 = arith.mulf %538, %476 : vector<2x256xf32>
    %540 = arith.addf %537, %539 : vector<2x256xf32>
    %541 = vector.broadcast %89 : f32 to vector<2x256xf32>
    %542 = arith.mulf %541, %488 : vector<2x256xf32>
    %543 = arith.addf %540, %542 : vector<2x256xf32>
    %544 = vector.broadcast %90 : f32 to vector<2x256xf32>
    %545 = arith.mulf %544, %461 : vector<2x256xf32>
    %546 = arith.addf %543, %545 : vector<2x256xf32>
    %547 = vector.broadcast %91 : f32 to vector<2x256xf32>
    %548 = arith.mulf %547, %473 : vector<2x256xf32>
    %549 = arith.addf %546, %548 : vector<2x256xf32>
    %550 = vector.broadcast %92 : f32 to vector<2x256xf32>
    %551 = arith.mulf %550, %485 : vector<2x256xf32>
    %552 = arith.addf %549, %551 : vector<2x256xf32>
    %553 = vector.broadcast %93 : f32 to vector<2x256xf32>
    %554 = arith.mulf %553, %457 : vector<2x256xf32>
    %555 = arith.addf %552, %554 : vector<2x256xf32>
    %556 = vector.broadcast %94 : f32 to vector<2x256xf32>
    %557 = arith.mulf %556, %469 : vector<2x256xf32>
    %558 = arith.addf %555, %557 : vector<2x256xf32>
    %559 = vector.broadcast %95 : f32 to vector<2x256xf32>
    %560 = arith.mulf %559, %481 : vector<2x256xf32>
    %561 = arith.addf %558, %560 : vector<2x256xf32>
    %562 = vector.broadcast %96 : f32 to vector<2x256xf32>
    %563 = arith.mulf %562, %465 : vector<2x256xf32>
    %564 = arith.addf %561, %563 : vector<2x256xf32>
    %565 = vector.broadcast %97 : f32 to vector<2x256xf32>
    %566 = arith.mulf %565, %477 : vector<2x256xf32>
    %567 = arith.addf %564, %566 : vector<2x256xf32>
    %568 = vector.broadcast %98 : f32 to vector<2x256xf32>
    %569 = arith.mulf %568, %489 : vector<2x256xf32>
    %570 = arith.addf %567, %569 : vector<2x256xf32>
    %571 = vector.broadcast %99 : f32 to vector<2x256xf32>
    %572 = arith.mulf %571, %462 : vector<2x256xf32>
    %573 = arith.addf %570, %572 : vector<2x256xf32>
    %574 = vector.broadcast %100 : f32 to vector<2x256xf32>
    %575 = arith.mulf %574, %474 : vector<2x256xf32>
    %576 = arith.addf %573, %575 : vector<2x256xf32>
    %577 = vector.broadcast %101 : f32 to vector<2x256xf32>
    %578 = arith.mulf %577, %486 : vector<2x256xf32>
    %579 = arith.addf %576, %578 : vector<2x256xf32>
    %580 = vector.broadcast %102 : f32 to vector<2x256xf32>
    %581 = arith.mulf %580, %458 : vector<2x256xf32>
    %582 = arith.addf %579, %581 : vector<2x256xf32>
    %583 = vector.broadcast %103 : f32 to vector<2x256xf32>
    %584 = arith.mulf %583, %470 : vector<2x256xf32>
    %585 = arith.addf %582, %584 : vector<2x256xf32>
    %586 = vector.broadcast %104 : f32 to vector<2x256xf32>
    %587 = arith.mulf %586, %482 : vector<2x256xf32>
    %588 = arith.addf %585, %587 : vector<2x256xf32>
    %589 = vector.broadcast %105 : f32 to vector<2x256xf32>
    %590 = arith.mulf %589, %466 : vector<2x256xf32>
    %591 = arith.addf %588, %590 : vector<2x256xf32>
    %592 = vector.broadcast %106 : f32 to vector<2x256xf32>
    %593 = arith.mulf %592, %478 : vector<2x256xf32>
    %594 = arith.addf %591, %593 : vector<2x256xf32>
    %595 = vector.broadcast %107 : f32 to vector<2x256xf32>
    %596 = arith.mulf %595, %490 : vector<2x256xf32>
    %597 = arith.addf %594, %596 : vector<2x256xf32>
    %598 = vector.broadcast %108 : f32 to vector<2x256xf32>
    %599 = arith.mulf %598, %459 : vector<2x256xf32>
    %600 = vector.broadcast %109 : f32 to vector<2x256xf32>
    %601 = arith.mulf %600, %471 : vector<2x256xf32>
    %602 = arith.addf %599, %601 : vector<2x256xf32>
    %603 = vector.broadcast %110 : f32 to vector<2x256xf32>
    %604 = arith.mulf %603, %483 : vector<2x256xf32>
    %605 = arith.addf %602, %604 : vector<2x256xf32>
    %606 = vector.broadcast %111 : f32 to vector<2x256xf32>
    %607 = arith.mulf %606, %455 : vector<2x256xf32>
    %608 = arith.addf %605, %607 : vector<2x256xf32>
    %609 = vector.broadcast %112 : f32 to vector<2x256xf32>
    %610 = arith.mulf %609, %467 : vector<2x256xf32>
    %611 = arith.addf %608, %610 : vector<2x256xf32>
    %612 = vector.broadcast %113 : f32 to vector<2x256xf32>
    %613 = arith.mulf %612, %479 : vector<2x256xf32>
    %614 = arith.addf %611, %613 : vector<2x256xf32>
    %615 = vector.broadcast %114 : f32 to vector<2x256xf32>
    %616 = arith.mulf %615, %463 : vector<2x256xf32>
    %617 = arith.addf %614, %616 : vector<2x256xf32>
    %618 = vector.broadcast %115 : f32 to vector<2x256xf32>
    %619 = arith.mulf %618, %475 : vector<2x256xf32>
    %620 = arith.addf %617, %619 : vector<2x256xf32>
    %621 = vector.broadcast %116 : f32 to vector<2x256xf32>
    %622 = arith.mulf %621, %487 : vector<2x256xf32>
    %623 = arith.addf %620, %622 : vector<2x256xf32>
    %624 = vector.broadcast %117 : f32 to vector<2x256xf32>
    %625 = arith.mulf %624, %460 : vector<2x256xf32>
    %626 = arith.addf %623, %625 : vector<2x256xf32>
    %627 = vector.broadcast %118 : f32 to vector<2x256xf32>
    %628 = arith.mulf %627, %472 : vector<2x256xf32>
    %629 = arith.addf %626, %628 : vector<2x256xf32>
    %630 = vector.broadcast %119 : f32 to vector<2x256xf32>
    %631 = arith.mulf %630, %484 : vector<2x256xf32>
    %632 = arith.addf %629, %631 : vector<2x256xf32>
    %633 = vector.broadcast %120 : f32 to vector<2x256xf32>
    %634 = arith.mulf %633, %456 : vector<2x256xf32>
    %635 = arith.addf %632, %634 : vector<2x256xf32>
    %636 = vector.broadcast %121 : f32 to vector<2x256xf32>
    %637 = arith.mulf %636, %468 : vector<2x256xf32>
    %638 = arith.addf %635, %637 : vector<2x256xf32>
    %639 = vector.broadcast %122 : f32 to vector<2x256xf32>
    %640 = arith.mulf %639, %480 : vector<2x256xf32>
    %641 = arith.addf %638, %640 : vector<2x256xf32>
    %642 = vector.broadcast %123 : f32 to vector<2x256xf32>
    %643 = arith.mulf %642, %464 : vector<2x256xf32>
    %644 = arith.addf %641, %643 : vector<2x256xf32>
    %645 = vector.broadcast %124 : f32 to vector<2x256xf32>
    %646 = arith.mulf %645, %476 : vector<2x256xf32>
    %647 = arith.addf %644, %646 : vector<2x256xf32>
    %648 = vector.broadcast %125 : f32 to vector<2x256xf32>
    %649 = arith.mulf %648, %488 : vector<2x256xf32>
    %650 = arith.addf %647, %649 : vector<2x256xf32>
    %651 = vector.broadcast %126 : f32 to vector<2x256xf32>
    %652 = arith.mulf %651, %461 : vector<2x256xf32>
    %653 = arith.addf %650, %652 : vector<2x256xf32>
    %654 = vector.broadcast %127 : f32 to vector<2x256xf32>
    %655 = arith.mulf %654, %473 : vector<2x256xf32>
    %656 = arith.addf %653, %655 : vector<2x256xf32>
    %657 = vector.broadcast %128 : f32 to vector<2x256xf32>
    %658 = arith.mulf %657, %485 : vector<2x256xf32>
    %659 = arith.addf %656, %658 : vector<2x256xf32>
    %660 = vector.broadcast %129 : f32 to vector<2x256xf32>
    %661 = arith.mulf %660, %457 : vector<2x256xf32>
    %662 = arith.addf %659, %661 : vector<2x256xf32>
    %663 = vector.broadcast %130 : f32 to vector<2x256xf32>
    %664 = arith.mulf %663, %469 : vector<2x256xf32>
    %665 = arith.addf %662, %664 : vector<2x256xf32>
    %666 = vector.broadcast %131 : f32 to vector<2x256xf32>
    %667 = arith.mulf %666, %481 : vector<2x256xf32>
    %668 = arith.addf %665, %667 : vector<2x256xf32>
    %669 = vector.broadcast %132 : f32 to vector<2x256xf32>
    %670 = arith.mulf %669, %465 : vector<2x256xf32>
    %671 = arith.addf %668, %670 : vector<2x256xf32>
    %672 = vector.broadcast %133 : f32 to vector<2x256xf32>
    %673 = arith.mulf %672, %477 : vector<2x256xf32>
    %674 = arith.addf %671, %673 : vector<2x256xf32>
    %675 = vector.broadcast %134 : f32 to vector<2x256xf32>
    %676 = arith.mulf %675, %489 : vector<2x256xf32>
    %677 = arith.addf %674, %676 : vector<2x256xf32>
    %678 = vector.broadcast %135 : f32 to vector<2x256xf32>
    %679 = arith.mulf %678, %462 : vector<2x256xf32>
    %680 = arith.addf %677, %679 : vector<2x256xf32>
    %681 = vector.broadcast %136 : f32 to vector<2x256xf32>
    %682 = arith.mulf %681, %474 : vector<2x256xf32>
    %683 = arith.addf %680, %682 : vector<2x256xf32>
    %684 = vector.broadcast %137 : f32 to vector<2x256xf32>
    %685 = arith.mulf %684, %486 : vector<2x256xf32>
    %686 = arith.addf %683, %685 : vector<2x256xf32>
    %687 = vector.broadcast %138 : f32 to vector<2x256xf32>
    %688 = arith.mulf %687, %458 : vector<2x256xf32>
    %689 = arith.addf %686, %688 : vector<2x256xf32>
    %690 = vector.broadcast %139 : f32 to vector<2x256xf32>
    %691 = arith.mulf %690, %470 : vector<2x256xf32>
    %692 = arith.addf %689, %691 : vector<2x256xf32>
    %693 = vector.broadcast %140 : f32 to vector<2x256xf32>
    %694 = arith.mulf %693, %482 : vector<2x256xf32>
    %695 = arith.addf %692, %694 : vector<2x256xf32>
    %696 = vector.broadcast %141 : f32 to vector<2x256xf32>
    %697 = arith.mulf %696, %466 : vector<2x256xf32>
    %698 = arith.addf %695, %697 : vector<2x256xf32>
    %699 = vector.broadcast %142 : f32 to vector<2x256xf32>
    %700 = arith.mulf %699, %478 : vector<2x256xf32>
    %701 = arith.addf %698, %700 : vector<2x256xf32>
    %702 = vector.broadcast %143 : f32 to vector<2x256xf32>
    %703 = arith.mulf %702, %490 : vector<2x256xf32>
    %704 = arith.addf %701, %703 : vector<2x256xf32>
    %705 = vector.broadcast %144 : f32 to vector<2x256xf32>
    %706 = arith.addf %597, %705 : vector<2x256xf32>
    %707 = vector.broadcast %145 : f32 to vector<2x256xf32>
    %708 = arith.addf %704, %707 : vector<2x256xf32>
    %709 = tpu.concatenate %706, %708 in 0 : vector<2x256xf32>, vector<2x256xf32> -> vector<4x256xf32>
    %710 = vector.broadcast %147 : vector<4x1xf32> to vector<4x256xf32>
    %711 = arith.mulf %710, %187 : vector<4x256xf32>
    %712 = arith.addf %709, %711 : vector<4x256xf32>
    %713 = arith.addf %189, %712 : vector<4x256xf32>
    %cst_32 = arith.constant 5.000000e-02 : f32
    %714 = vector.broadcast %cst_32 : f32 to vector<4x256xf32>
    %715 = arith.mulf %714, %713 : vector<4x256xf32>
    %716 = arith.addf %148, %715 : vector<4x256xf32>
    %c0_33 = arith.constant 0 : index
    %c0_34 = arith.constant 0 : index
    %c0_35 = arith.constant 0 : index
    %717 = vector.load %arg4[%c0_33, %c0_34, %c0_35] : memref<3x4x256xf32, #tpu.memory_space<vmem>>, vector<1x4x256xf32>
    %718 = vector.shape_cast %717 : vector<1x4x256xf32> to vector<4x256xf32>
    %719 = vector.shape_cast %716 : vector<4x256xf32> to vector<1x4x256xf32>
    tpu.vector_store %arg4[%c0_33, %c0_34, %c0_35], %719 {strides = array<i32>} : memref<3x4x256xf32, #tpu.memory_space<vmem>>, vector<1x4x256xf32>,
    %720 = arith.mulf %712, %712 : vector<4x256xf32>
    %721 = arith.addf %149, %720 : vector<4x256xf32>
    %722 = arith.mulf %189, %712 : vector<4x256xf32>
    %723 = arith.addf %150, %722 : vector<4x256xf32>
    %c1_i32_36 = arith.constant 1 : i32
    %724 = tpu.dynamic_rotate %716 by %c1_i32_36 dim 1 : vector<4x256xf32>, i32 -> vector<4x256xf32>
    %725 = arith.select %157, %716, %724 : vector<4x256xi1>, vector<4x256xf32>
    %c255_i32_37 = arith.constant 255 : i32
    %726 = tpu.dynamic_rotate %716 by %c255_i32_37 dim 1 : vector<4x256xf32>, i32 -> vector<4x256xf32>
    %727 = arith.select %159, %716, %726 : vector<4x256xi1>, vector<4x256xf32>
    %c16_i32_38 = arith.constant 16 : i32
    %728 = tpu.dynamic_rotate %725 by %c16_i32_38 dim 1 : vector<4x256xf32>, i32 -> vector<4x256xf32>
    %729 = arith.select %161, %725, %728 : vector<4x256xi1>, vector<4x256xf32>
    %c240_i32_39 = arith.constant 240 : i32
    %730 = tpu.dynamic_rotate %725 by %c240_i32_39 dim 1 : vector<4x256xf32>, i32 -> vector<4x256xf32>
    %731 = arith.select %163, %725, %730 : vector<4x256xi1>, vector<4x256xf32>
    %c16_i32_40 = arith.constant 16 : i32
    %732 = tpu.dynamic_rotate %716 by %c16_i32_40 dim 1 : vector<4x256xf32>, i32 -> vector<4x256xf32>
    %733 = arith.select %161, %716, %732 : vector<4x256xi1>, vector<4x256xf32>
    %c240_i32_41 = arith.constant 240 : i32
    %734 = tpu.dynamic_rotate %716 by %c240_i32_41 dim 1 : vector<4x256xf32>, i32 -> vector<4x256xf32>
    %735 = arith.select %163, %716, %734 : vector<4x256xi1>, vector<4x256xf32>
    %c16_i32_42 = arith.constant 16 : i32
    %736 = tpu.dynamic_rotate %727 by %c16_i32_42 dim 1 : vector<4x256xf32>, i32 -> vector<4x256xf32>
    %737 = arith.select %161, %727, %736 : vector<4x256xi1>, vector<4x256xf32>
    %c240_i32_43 = arith.constant 240 : i32
    %738 = tpu.dynamic_rotate %727 by %c240_i32_43 dim 1 : vector<4x256xf32>, i32 -> vector<4x256xf32>
    %739 = arith.select %163, %727, %738 : vector<4x256xi1>, vector<4x256xf32>
    %740 = arith.addf %733, %735 : vector<4x256xf32>
    %741 = arith.addf %740, %725 : vector<4x256xf32>
    %742 = arith.addf %741, %727 : vector<4x256xf32>
    %cst_44 = arith.constant 4.000000e+00 : f32
    %743 = vector.broadcast %cst_44 : f32 to vector<4x256xf32>
    %744 = arith.mulf %743, %716 : vector<4x256xf32>
    %745 = arith.subf %742, %744 : vector<4x256xf32>
    %cst_45 = arith.constant 1.000000e+00 : f32
    %746 = vector.broadcast %cst_45 : f32 to vector<4x256xf32>
    %747 = arith.mulf %745, %746 : vector<4x256xf32>
    %748 = vector.broadcast %146 : vector<4x1xf32> to vector<4x256xf32>
    %749 = arith.mulf %748, %747 : vector<4x256xf32>
    %750 = vector.extract_strided_slice %725 {offsets = [0, 0], sizes = [2, 256], strides = [1, 1]} : vector<4x256xf32> to vector<2x256xf32>
    %751 = vector.extract_strided_slice %725 {offsets = [2, 0], sizes = [2, 256], strides = [1, 1]} : vector<4x256xf32> to vector<2x256xf32>
    %752 = vector.extract_strided_slice %729 {offsets = [0, 0], sizes = [2, 256], strides = [1, 1]} : vector<4x256xf32> to vector<2x256xf32>
    %753 = vector.extract_strided_slice %729 {offsets = [2, 0], sizes = [2, 256], strides = [1, 1]} : vector<4x256xf32> to vector<2x256xf32>
    %754 = vector.extract_strided_slice %731 {offsets = [0, 0], sizes = [2, 256], strides = [1, 1]} : vector<4x256xf32> to vector<2x256xf32>
    %755 = vector.extract_strided_slice %731 {offsets = [2, 0], sizes = [2, 256], strides = [1, 1]} : vector<4x256xf32> to vector<2x256xf32>
    %756 = vector.extract_strided_slice %716 {offsets = [0, 0], sizes = [2, 256], strides = [1, 1]} : vector<4x256xf32> to vector<2x256xf32>
    %757 = vector.extract_strided_slice %716 {offsets = [2, 0], sizes = [2, 256], strides = [1, 1]} : vector<4x256xf32> to vector<2x256xf32>
    %758 = vector.extract_strided_slice %733 {offsets = [0, 0], sizes = [2, 256], strides = [1, 1]} : vector<4x256xf32> to vector<2x256xf32>
    %759 = vector.extract_strided_slice %733 {offsets = [2, 0], sizes = [2, 256], strides = [1, 1]} : vector<4x256xf32> to vector<2x256xf32>
    %760 = vector.extract_strided_slice %735 {offsets = [0, 0], sizes = [2, 256], strides = [1, 1]} : vector<4x256xf32> to vector<2x256xf32>
    %761 = vector.extract_strided_slice %735 {offsets = [2, 0], sizes = [2, 256], strides = [1, 1]} : vector<4x256xf32> to vector<2x256xf32>
    %762 = vector.extract_strided_slice %727 {offsets = [0, 0], sizes = [2, 256], strides = [1, 1]} : vector<4x256xf32> to vector<2x256xf32>
    %763 = vector.extract_strided_slice %727 {offsets = [2, 0], sizes = [2, 256], strides = [1, 1]} : vector<4x256xf32> to vector<2x256xf32>
    %764 = vector.extract_strided_slice %737 {offsets = [0, 0], sizes = [2, 256], strides = [1, 1]} : vector<4x256xf32> to vector<2x256xf32>
    %765 = vector.extract_strided_slice %737 {offsets = [2, 0], sizes = [2, 256], strides = [1, 1]} : vector<4x256xf32> to vector<2x256xf32>
    %766 = vector.extract_strided_slice %739 {offsets = [0, 0], sizes = [2, 256], strides = [1, 1]} : vector<4x256xf32> to vector<2x256xf32>
    %767 = vector.extract_strided_slice %739 {offsets = [2, 0], sizes = [2, 256], strides = [1, 1]} : vector<4x256xf32> to vector<2x256xf32>
    %768 = vector.broadcast %0 : f32 to vector<2x256xf32>
    %769 = arith.mulf %768, %752 : vector<2x256xf32>
    %770 = vector.broadcast %1 : f32 to vector<2x256xf32>
    %771 = arith.mulf %770, %758 : vector<2x256xf32>
    %772 = arith.addf %769, %771 : vector<2x256xf32>
    %773 = vector.broadcast %2 : f32 to vector<2x256xf32>
    %774 = arith.mulf %773, %764 : vector<2x256xf32>
    %775 = arith.addf %772, %774 : vector<2x256xf32>
    %776 = vector.broadcast %3 : f32 to vector<2x256xf32>
    %777 = arith.mulf %776, %750 : vector<2x256xf32>
    %778 = arith.addf %775, %777 : vector<2x256xf32>
    %779 = vector.broadcast %4 : f32 to vector<2x256xf32>
    %780 = arith.mulf %779, %756 : vector<2x256xf32>
    %781 = arith.addf %778, %780 : vector<2x256xf32>
    %782 = vector.broadcast %5 : f32 to vector<2x256xf32>
    %783 = arith.mulf %782, %762 : vector<2x256xf32>
    %784 = arith.addf %781, %783 : vector<2x256xf32>
    %785 = vector.broadcast %6 : f32 to vector<2x256xf32>
    %786 = arith.mulf %785, %754 : vector<2x256xf32>
    %787 = arith.addf %784, %786 : vector<2x256xf32>
    %788 = vector.broadcast %7 : f32 to vector<2x256xf32>
    %789 = arith.mulf %788, %760 : vector<2x256xf32>
    %790 = arith.addf %787, %789 : vector<2x256xf32>
    %791 = vector.broadcast %8 : f32 to vector<2x256xf32>
    %792 = arith.mulf %791, %766 : vector<2x256xf32>
    %793 = arith.addf %790, %792 : vector<2x256xf32>
    %794 = vector.broadcast %9 : f32 to vector<2x256xf32>
    %795 = arith.mulf %794, %753 : vector<2x256xf32>
    %796 = arith.addf %793, %795 : vector<2x256xf32>
    %797 = vector.broadcast %10 : f32 to vector<2x256xf32>
    %798 = arith.mulf %797, %759 : vector<2x256xf32>
    %799 = arith.addf %796, %798 : vector<2x256xf32>
    %800 = vector.broadcast %11 : f32 to vector<2x256xf32>
    %801 = arith.mulf %800, %765 : vector<2x256xf32>
    %802 = arith.addf %799, %801 : vector<2x256xf32>
    %803 = vector.broadcast %12 : f32 to vector<2x256xf32>
    %804 = arith.mulf %803, %751 : vector<2x256xf32>
    %805 = arith.addf %802, %804 : vector<2x256xf32>
    %806 = vector.broadcast %13 : f32 to vector<2x256xf32>
    %807 = arith.mulf %806, %757 : vector<2x256xf32>
    %808 = arith.addf %805, %807 : vector<2x256xf32>
    %809 = vector.broadcast %14 : f32 to vector<2x256xf32>
    %810 = arith.mulf %809, %763 : vector<2x256xf32>
    %811 = arith.addf %808, %810 : vector<2x256xf32>
    %812 = vector.broadcast %15 : f32 to vector<2x256xf32>
    %813 = arith.mulf %812, %755 : vector<2x256xf32>
    %814 = arith.addf %811, %813 : vector<2x256xf32>
    %815 = vector.broadcast %16 : f32 to vector<2x256xf32>
    %816 = arith.mulf %815, %761 : vector<2x256xf32>
    %817 = arith.addf %814, %816 : vector<2x256xf32>
    %818 = vector.broadcast %17 : f32 to vector<2x256xf32>
    %819 = arith.mulf %818, %767 : vector<2x256xf32>
    %820 = arith.addf %817, %819 : vector<2x256xf32>
    %821 = vector.broadcast %18 : f32 to vector<2x256xf32>
    %822 = arith.mulf %821, %752 : vector<2x256xf32>
    %823 = vector.broadcast %19 : f32 to vector<2x256xf32>
    %824 = arith.mulf %823, %758 : vector<2x256xf32>
    %825 = arith.addf %822, %824 : vector<2x256xf32>
    %826 = vector.broadcast %20 : f32 to vector<2x256xf32>
    %827 = arith.mulf %826, %764 : vector<2x256xf32>
    %828 = arith.addf %825, %827 : vector<2x256xf32>
    %829 = vector.broadcast %21 : f32 to vector<2x256xf32>
    %830 = arith.mulf %829, %750 : vector<2x256xf32>
    %831 = arith.addf %828, %830 : vector<2x256xf32>
    %832 = vector.broadcast %22 : f32 to vector<2x256xf32>
    %833 = arith.mulf %832, %756 : vector<2x256xf32>
    %834 = arith.addf %831, %833 : vector<2x256xf32>
    %835 = vector.broadcast %23 : f32 to vector<2x256xf32>
    %836 = arith.mulf %835, %762 : vector<2x256xf32>
    %837 = arith.addf %834, %836 : vector<2x256xf32>
    %838 = vector.broadcast %24 : f32 to vector<2x256xf32>
    %839 = arith.mulf %838, %754 : vector<2x256xf32>
    %840 = arith.addf %837, %839 : vector<2x256xf32>
    %841 = vector.broadcast %25 : f32 to vector<2x256xf32>
    %842 = arith.mulf %841, %760 : vector<2x256xf32>
    %843 = arith.addf %840, %842 : vector<2x256xf32>
    %844 = vector.broadcast %26 : f32 to vector<2x256xf32>
    %845 = arith.mulf %844, %766 : vector<2x256xf32>
    %846 = arith.addf %843, %845 : vector<2x256xf32>
    %847 = vector.broadcast %27 : f32 to vector<2x256xf32>
    %848 = arith.mulf %847, %753 : vector<2x256xf32>
    %849 = arith.addf %846, %848 : vector<2x256xf32>
    %850 = vector.broadcast %28 : f32 to vector<2x256xf32>
    %851 = arith.mulf %850, %759 : vector<2x256xf32>
    %852 = arith.addf %849, %851 : vector<2x256xf32>
    %853 = vector.broadcast %29 : f32 to vector<2x256xf32>
    %854 = arith.mulf %853, %765 : vector<2x256xf32>
    %855 = arith.addf %852, %854 : vector<2x256xf32>
    %856 = vector.broadcast %30 : f32 to vector<2x256xf32>
    %857 = arith.mulf %856, %751 : vector<2x256xf32>
    %858 = arith.addf %855, %857 : vector<2x256xf32>
    %859 = vector.broadcast %31 : f32 to vector<2x256xf32>
    %860 = arith.mulf %859, %757 : vector<2x256xf32>
    %861 = arith.addf %858, %860 : vector<2x256xf32>
    %862 = vector.broadcast %32 : f32 to vector<2x256xf32>
    %863 = arith.mulf %862, %763 : vector<2x256xf32>
    %864 = arith.addf %861, %863 : vector<2x256xf32>
    %865 = vector.broadcast %33 : f32 to vector<2x256xf32>
    %866 = arith.mulf %865, %755 : vector<2x256xf32>
    %867 = arith.addf %864, %866 : vector<2x256xf32>
    %868 = vector.broadcast %34 : f32 to vector<2x256xf32>
    %869 = arith.mulf %868, %761 : vector<2x256xf32>
    %870 = arith.addf %867, %869 : vector<2x256xf32>
    %871 = vector.broadcast %35 : f32 to vector<2x256xf32>
    %872 = arith.mulf %871, %767 : vector<2x256xf32>
    %873 = arith.addf %870, %872 : vector<2x256xf32>
    %874 = vector.broadcast %36 : f32 to vector<2x256xf32>
    %875 = arith.mulf %874, %752 : vector<2x256xf32>
    %876 = vector.broadcast %37 : f32 to vector<2x256xf32>
    %877 = arith.mulf %876, %758 : vector<2x256xf32>
    %878 = arith.addf %875, %877 : vector<2x256xf32>
    %879 = vector.broadcast %38 : f32 to vector<2x256xf32>
    %880 = arith.mulf %879, %764 : vector<2x256xf32>
    %881 = arith.addf %878, %880 : vector<2x256xf32>
    %882 = vector.broadcast %39 : f32 to vector<2x256xf32>
    %883 = arith.mulf %882, %750 : vector<2x256xf32>
    %884 = arith.addf %881, %883 : vector<2x256xf32>
    %885 = vector.broadcast %40 : f32 to vector<2x256xf32>
    %886 = arith.mulf %885, %756 : vector<2x256xf32>
    %887 = arith.addf %884, %886 : vector<2x256xf32>
    %888 = vector.broadcast %41 : f32 to vector<2x256xf32>
    %889 = arith.mulf %888, %762 : vector<2x256xf32>
    %890 = arith.addf %887, %889 : vector<2x256xf32>
    %891 = vector.broadcast %42 : f32 to vector<2x256xf32>
    %892 = arith.mulf %891, %754 : vector<2x256xf32>
    %893 = arith.addf %890, %892 : vector<2x256xf32>
    %894 = vector.broadcast %43 : f32 to vector<2x256xf32>
    %895 = arith.mulf %894, %760 : vector<2x256xf32>
    %896 = arith.addf %893, %895 : vector<2x256xf32>
    %897 = vector.broadcast %44 : f32 to vector<2x256xf32>
    %898 = arith.mulf %897, %766 : vector<2x256xf32>
    %899 = arith.addf %896, %898 : vector<2x256xf32>
    %900 = vector.broadcast %45 : f32 to vector<2x256xf32>
    %901 = arith.mulf %900, %753 : vector<2x256xf32>
    %902 = arith.addf %899, %901 : vector<2x256xf32>
    %903 = vector.broadcast %46 : f32 to vector<2x256xf32>
    %904 = arith.mulf %903, %759 : vector<2x256xf32>
    %905 = arith.addf %902, %904 : vector<2x256xf32>
    %906 = vector.broadcast %47 : f32 to vector<2x256xf32>
    %907 = arith.mulf %906, %765 : vector<2x256xf32>
    %908 = arith.addf %905, %907 : vector<2x256xf32>
    %909 = vector.broadcast %48 : f32 to vector<2x256xf32>
    %910 = arith.mulf %909, %751 : vector<2x256xf32>
    %911 = arith.addf %908, %910 : vector<2x256xf32>
    %912 = vector.broadcast %49 : f32 to vector<2x256xf32>
    %913 = arith.mulf %912, %757 : vector<2x256xf32>
    %914 = arith.addf %911, %913 : vector<2x256xf32>
    %915 = vector.broadcast %50 : f32 to vector<2x256xf32>
    %916 = arith.mulf %915, %763 : vector<2x256xf32>
    %917 = arith.addf %914, %916 : vector<2x256xf32>
    %918 = vector.broadcast %51 : f32 to vector<2x256xf32>
    %919 = arith.mulf %918, %755 : vector<2x256xf32>
    %920 = arith.addf %917, %919 : vector<2x256xf32>
    %921 = vector.broadcast %52 : f32 to vector<2x256xf32>
    %922 = arith.mulf %921, %761 : vector<2x256xf32>
    %923 = arith.addf %920, %922 : vector<2x256xf32>
    %924 = vector.broadcast %53 : f32 to vector<2x256xf32>
    %925 = arith.mulf %924, %767 : vector<2x256xf32>
    %926 = arith.addf %923, %925 : vector<2x256xf32>
    %927 = vector.broadcast %54 : f32 to vector<2x256xf32>
    %928 = arith.mulf %927, %752 : vector<2x256xf32>
    %929 = vector.broadcast %55 : f32 to vector<2x256xf32>
    %930 = arith.mulf %929, %758 : vector<2x256xf32>
    %931 = arith.addf %928, %930 : vector<2x256xf32>
    %932 = vector.broadcast %56 : f32 to vector<2x256xf32>
    %933 = arith.mulf %932, %764 : vector<2x256xf32>
    %934 = arith.addf %931, %933 : vector<2x256xf32>
    %935 = vector.broadcast %57 : f32 to vector<2x256xf32>
    %936 = arith.mulf %935, %750 : vector<2x256xf32>
    %937 = arith.addf %934, %936 : vector<2x256xf32>
    %938 = vector.broadcast %58 : f32 to vector<2x256xf32>
    %939 = arith.mulf %938, %756 : vector<2x256xf32>
    %940 = arith.addf %937, %939 : vector<2x256xf32>
    %941 = vector.broadcast %59 : f32 to vector<2x256xf32>
    %942 = arith.mulf %941, %762 : vector<2x256xf32>
    %943 = arith.addf %940, %942 : vector<2x256xf32>
    %944 = vector.broadcast %60 : f32 to vector<2x256xf32>
    %945 = arith.mulf %944, %754 : vector<2x256xf32>
    %946 = arith.addf %943, %945 : vector<2x256xf32>
    %947 = vector.broadcast %61 : f32 to vector<2x256xf32>
    %948 = arith.mulf %947, %760 : vector<2x256xf32>
    %949 = arith.addf %946, %948 : vector<2x256xf32>
    %950 = vector.broadcast %62 : f32 to vector<2x256xf32>
    %951 = arith.mulf %950, %766 : vector<2x256xf32>
    %952 = arith.addf %949, %951 : vector<2x256xf32>
    %953 = vector.broadcast %63 : f32 to vector<2x256xf32>
    %954 = arith.mulf %953, %753 : vector<2x256xf32>
    %955 = arith.addf %952, %954 : vector<2x256xf32>
    %956 = vector.broadcast %64 : f32 to vector<2x256xf32>
    %957 = arith.mulf %956, %759 : vector<2x256xf32>
    %958 = arith.addf %955, %957 : vector<2x256xf32>
    %959 = vector.broadcast %65 : f32 to vector<2x256xf32>
    %960 = arith.mulf %959, %765 : vector<2x256xf32>
    %961 = arith.addf %958, %960 : vector<2x256xf32>
    %962 = vector.broadcast %66 : f32 to vector<2x256xf32>
    %963 = arith.mulf %962, %751 : vector<2x256xf32>
    %964 = arith.addf %961, %963 : vector<2x256xf32>
    %965 = vector.broadcast %67 : f32 to vector<2x256xf32>
    %966 = arith.mulf %965, %757 : vector<2x256xf32>
    %967 = arith.addf %964, %966 : vector<2x256xf32>
    %968 = vector.broadcast %68 : f32 to vector<2x256xf32>
    %969 = arith.mulf %968, %763 : vector<2x256xf32>
    %970 = arith.addf %967, %969 : vector<2x256xf32>
    %971 = vector.broadcast %69 : f32 to vector<2x256xf32>
    %972 = arith.mulf %971, %755 : vector<2x256xf32>
    %973 = arith.addf %970, %972 : vector<2x256xf32>
    %974 = vector.broadcast %70 : f32 to vector<2x256xf32>
    %975 = arith.mulf %974, %761 : vector<2x256xf32>
    %976 = arith.addf %973, %975 : vector<2x256xf32>
    %977 = vector.broadcast %71 : f32 to vector<2x256xf32>
    %978 = arith.mulf %977, %767 : vector<2x256xf32>
    %979 = arith.addf %976, %978 : vector<2x256xf32>
    %980 = tpu.concatenate %820, %873, %926, %979 in 0 : vector<2x256xf32>, vector<2x256xf32>, vector<2x256xf32>, vector<2x256xf32> -> vector<8x256xf32>
    %cst_46 = arith.constant 0.000000e+00 : f32
    %981 = vector.broadcast %cst_46 : f32 to vector<8x256xf32>
    %982 = arith.cmpf oge, %980, %981 : vector<8x256xf32>
    %cst_47 = arith.constant 0.00999999977 : f32
    %983 = vector.broadcast %cst_47 : f32 to vector<8x256xf32>
    %984 = arith.mulf %983, %980 : vector<8x256xf32>
    %985 = arith.select %982, %980, %984 : vector<8x256xi1>, vector<8x256xf32>
    %c1_i32_48 = arith.constant 1 : i32
    %986 = tpu.dynamic_rotate %985 by %c1_i32_48 dim 1 : vector<8x256xf32>, i32 -> vector<8x256xf32>
    %987 = arith.select %432, %985, %986 : vector<8x256xi1>, vector<8x256xf32>
    %c255_i32_49 = arith.constant 255 : i32
    %988 = tpu.dynamic_rotate %985 by %c255_i32_49 dim 1 : vector<8x256xf32>, i32 -> vector<8x256xf32>
    %989 = arith.select %434, %985, %988 : vector<8x256xi1>, vector<8x256xf32>
    %c16_i32_50 = arith.constant 16 : i32
    %990 = tpu.dynamic_rotate %987 by %c16_i32_50 dim 1 : vector<8x256xf32>, i32 -> vector<8x256xf32>
    %991 = arith.select %436, %987, %990 : vector<8x256xi1>, vector<8x256xf32>
    %c240_i32_51 = arith.constant 240 : i32
    %992 = tpu.dynamic_rotate %987 by %c240_i32_51 dim 1 : vector<8x256xf32>, i32 -> vector<8x256xf32>
    %993 = arith.select %438, %987, %992 : vector<8x256xi1>, vector<8x256xf32>
    %c16_i32_52 = arith.constant 16 : i32
    %994 = tpu.dynamic_rotate %985 by %c16_i32_52 dim 1 : vector<8x256xf32>, i32 -> vector<8x256xf32>
    %995 = arith.select %436, %985, %994 : vector<8x256xi1>, vector<8x256xf32>
    %c240_i32_53 = arith.constant 240 : i32
    %996 = tpu.dynamic_rotate %985 by %c240_i32_53 dim 1 : vector<8x256xf32>, i32 -> vector<8x256xf32>
    %997 = arith.select %438, %985, %996 : vector<8x256xi1>, vector<8x256xf32>
    %c16_i32_54 = arith.constant 16 : i32
    %998 = tpu.dynamic_rotate %989 by %c16_i32_54 dim 1 : vector<8x256xf32>, i32 -> vector<8x256xf32>
    %999 = arith.select %436, %989, %998 : vector<8x256xi1>, vector<8x256xf32>
    %c240_i32_55 = arith.constant 240 : i32
    %1000 = tpu.dynamic_rotate %989 by %c240_i32_55 dim 1 : vector<8x256xf32>, i32 -> vector<8x256xf32>
    %1001 = arith.select %438, %989, %1000 : vector<8x256xi1>, vector<8x256xf32>
    %1002 = vector.extract_strided_slice %987 {offsets = [0, 0], sizes = [2, 256], strides = [1, 1]} : vector<8x256xf32> to vector<2x256xf32>
    %1003 = vector.extract_strided_slice %987 {offsets = [2, 0], sizes = [2, 256], strides = [1, 1]} : vector<8x256xf32> to vector<2x256xf32>
    %1004 = vector.extract_strided_slice %987 {offsets = [4, 0], sizes = [2, 256], strides = [1, 1]} : vector<8x256xf32> to vector<2x256xf32>
    %1005 = vector.extract_strided_slice %987 {offsets = [6, 0], sizes = [2, 256], strides = [1, 1]} : vector<8x256xf32> to vector<2x256xf32>
    %1006 = vector.extract_strided_slice %991 {offsets = [0, 0], sizes = [2, 256], strides = [1, 1]} : vector<8x256xf32> to vector<2x256xf32>
    %1007 = vector.extract_strided_slice %991 {offsets = [2, 0], sizes = [2, 256], strides = [1, 1]} : vector<8x256xf32> to vector<2x256xf32>
    %1008 = vector.extract_strided_slice %991 {offsets = [4, 0], sizes = [2, 256], strides = [1, 1]} : vector<8x256xf32> to vector<2x256xf32>
    %1009 = vector.extract_strided_slice %991 {offsets = [6, 0], sizes = [2, 256], strides = [1, 1]} : vector<8x256xf32> to vector<2x256xf32>
    %1010 = vector.extract_strided_slice %993 {offsets = [0, 0], sizes = [2, 256], strides = [1, 1]} : vector<8x256xf32> to vector<2x256xf32>
    %1011 = vector.extract_strided_slice %993 {offsets = [2, 0], sizes = [2, 256], strides = [1, 1]} : vector<8x256xf32> to vector<2x256xf32>
    %1012 = vector.extract_strided_slice %993 {offsets = [4, 0], sizes = [2, 256], strides = [1, 1]} : vector<8x256xf32> to vector<2x256xf32>
    %1013 = vector.extract_strided_slice %993 {offsets = [6, 0], sizes = [2, 256], strides = [1, 1]} : vector<8x256xf32> to vector<2x256xf32>
    %1014 = vector.extract_strided_slice %985 {offsets = [0, 0], sizes = [2, 256], strides = [1, 1]} : vector<8x256xf32> to vector<2x256xf32>
    %1015 = vector.extract_strided_slice %985 {offsets = [2, 0], sizes = [2, 256], strides = [1, 1]} : vector<8x256xf32> to vector<2x256xf32>
    %1016 = vector.extract_strided_slice %985 {offsets = [4, 0], sizes = [2, 256], strides = [1, 1]} : vector<8x256xf32> to vector<2x256xf32>
    %1017 = vector.extract_strided_slice %985 {offsets = [6, 0], sizes = [2, 256], strides = [1, 1]} : vector<8x256xf32> to vector<2x256xf32>
    %1018 = vector.extract_strided_slice %995 {offsets = [0, 0], sizes = [2, 256], strides = [1, 1]} : vector<8x256xf32> to vector<2x256xf32>
    %1019 = vector.extract_strided_slice %995 {offsets = [2, 0], sizes = [2, 256], strides = [1, 1]} : vector<8x256xf32> to vector<2x256xf32>
    %1020 = vector.extract_strided_slice %995 {offsets = [4, 0], sizes = [2, 256], strides = [1, 1]} : vector<8x256xf32> to vector<2x256xf32>
    %1021 = vector.extract_strided_slice %995 {offsets = [6, 0], sizes = [2, 256], strides = [1, 1]} : vector<8x256xf32> to vector<2x256xf32>
    %1022 = vector.extract_strided_slice %997 {offsets = [0, 0], sizes = [2, 256], strides = [1, 1]} : vector<8x256xf32> to vector<2x256xf32>
    %1023 = vector.extract_strided_slice %997 {offsets = [2, 0], sizes = [2, 256], strides = [1, 1]} : vector<8x256xf32> to vector<2x256xf32>
    %1024 = vector.extract_strided_slice %997 {offsets = [4, 0], sizes = [2, 256], strides = [1, 1]} : vector<8x256xf32> to vector<2x256xf32>
    %1025 = vector.extract_strided_slice %997 {offsets = [6, 0], sizes = [2, 256], strides = [1, 1]} : vector<8x256xf32> to vector<2x256xf32>
    %1026 = vector.extract_strided_slice %989 {offsets = [0, 0], sizes = [2, 256], strides = [1, 1]} : vector<8x256xf32> to vector<2x256xf32>
    %1027 = vector.extract_strided_slice %989 {offsets = [2, 0], sizes = [2, 256], strides = [1, 1]} : vector<8x256xf32> to vector<2x256xf32>
    %1028 = vector.extract_strided_slice %989 {offsets = [4, 0], sizes = [2, 256], strides = [1, 1]} : vector<8x256xf32> to vector<2x256xf32>
    %1029 = vector.extract_strided_slice %989 {offsets = [6, 0], sizes = [2, 256], strides = [1, 1]} : vector<8x256xf32> to vector<2x256xf32>
    %1030 = vector.extract_strided_slice %999 {offsets = [0, 0], sizes = [2, 256], strides = [1, 1]} : vector<8x256xf32> to vector<2x256xf32>
    %1031 = vector.extract_strided_slice %999 {offsets = [2, 0], sizes = [2, 256], strides = [1, 1]} : vector<8x256xf32> to vector<2x256xf32>
    %1032 = vector.extract_strided_slice %999 {offsets = [4, 0], sizes = [2, 256], strides = [1, 1]} : vector<8x256xf32> to vector<2x256xf32>
    %1033 = vector.extract_strided_slice %999 {offsets = [6, 0], sizes = [2, 256], strides = [1, 1]} : vector<8x256xf32> to vector<2x256xf32>
    %1034 = vector.extract_strided_slice %1001 {offsets = [0, 0], sizes = [2, 256], strides = [1, 1]} : vector<8x256xf32> to vector<2x256xf32>
    %1035 = vector.extract_strided_slice %1001 {offsets = [2, 0], sizes = [2, 256], strides = [1, 1]} : vector<8x256xf32> to vector<2x256xf32>
    %1036 = vector.extract_strided_slice %1001 {offsets = [4, 0], sizes = [2, 256], strides = [1, 1]} : vector<8x256xf32> to vector<2x256xf32>
    %1037 = vector.extract_strided_slice %1001 {offsets = [6, 0], sizes = [2, 256], strides = [1, 1]} : vector<8x256xf32> to vector<2x256xf32>
    %1038 = vector.broadcast %72 : f32 to vector<2x256xf32>
    %1039 = arith.mulf %1038, %1006 : vector<2x256xf32>
    %1040 = vector.broadcast %73 : f32 to vector<2x256xf32>
    %1041 = arith.mulf %1040, %1018 : vector<2x256xf32>
    %1042 = arith.addf %1039, %1041 : vector<2x256xf32>
    %1043 = vector.broadcast %74 : f32 to vector<2x256xf32>
    %1044 = arith.mulf %1043, %1030 : vector<2x256xf32>
    %1045 = arith.addf %1042, %1044 : vector<2x256xf32>
    %1046 = vector.broadcast %75 : f32 to vector<2x256xf32>
    %1047 = arith.mulf %1046, %1002 : vector<2x256xf32>
    %1048 = arith.addf %1045, %1047 : vector<2x256xf32>
    %1049 = vector.broadcast %76 : f32 to vector<2x256xf32>
    %1050 = arith.mulf %1049, %1014 : vector<2x256xf32>
    %1051 = arith.addf %1048, %1050 : vector<2x256xf32>
    %1052 = vector.broadcast %77 : f32 to vector<2x256xf32>
    %1053 = arith.mulf %1052, %1026 : vector<2x256xf32>
    %1054 = arith.addf %1051, %1053 : vector<2x256xf32>
    %1055 = vector.broadcast %78 : f32 to vector<2x256xf32>
    %1056 = arith.mulf %1055, %1010 : vector<2x256xf32>
    %1057 = arith.addf %1054, %1056 : vector<2x256xf32>
    %1058 = vector.broadcast %79 : f32 to vector<2x256xf32>
    %1059 = arith.mulf %1058, %1022 : vector<2x256xf32>
    %1060 = arith.addf %1057, %1059 : vector<2x256xf32>
    %1061 = vector.broadcast %80 : f32 to vector<2x256xf32>
    %1062 = arith.mulf %1061, %1034 : vector<2x256xf32>
    %1063 = arith.addf %1060, %1062 : vector<2x256xf32>
    %1064 = vector.broadcast %81 : f32 to vector<2x256xf32>
    %1065 = arith.mulf %1064, %1007 : vector<2x256xf32>
    %1066 = arith.addf %1063, %1065 : vector<2x256xf32>
    %1067 = vector.broadcast %82 : f32 to vector<2x256xf32>
    %1068 = arith.mulf %1067, %1019 : vector<2x256xf32>
    %1069 = arith.addf %1066, %1068 : vector<2x256xf32>
    %1070 = vector.broadcast %83 : f32 to vector<2x256xf32>
    %1071 = arith.mulf %1070, %1031 : vector<2x256xf32>
    %1072 = arith.addf %1069, %1071 : vector<2x256xf32>
    %1073 = vector.broadcast %84 : f32 to vector<2x256xf32>
    %1074 = arith.mulf %1073, %1003 : vector<2x256xf32>
    %1075 = arith.addf %1072, %1074 : vector<2x256xf32>
    %1076 = vector.broadcast %85 : f32 to vector<2x256xf32>
    %1077 = arith.mulf %1076, %1015 : vector<2x256xf32>
    %1078 = arith.addf %1075, %1077 : vector<2x256xf32>
    %1079 = vector.broadcast %86 : f32 to vector<2x256xf32>
    %1080 = arith.mulf %1079, %1027 : vector<2x256xf32>
    %1081 = arith.addf %1078, %1080 : vector<2x256xf32>
    %1082 = vector.broadcast %87 : f32 to vector<2x256xf32>
    %1083 = arith.mulf %1082, %1011 : vector<2x256xf32>
    %1084 = arith.addf %1081, %1083 : vector<2x256xf32>
    %1085 = vector.broadcast %88 : f32 to vector<2x256xf32>
    %1086 = arith.mulf %1085, %1023 : vector<2x256xf32>
    %1087 = arith.addf %1084, %1086 : vector<2x256xf32>
    %1088 = vector.broadcast %89 : f32 to vector<2x256xf32>
    %1089 = arith.mulf %1088, %1035 : vector<2x256xf32>
    %1090 = arith.addf %1087, %1089 : vector<2x256xf32>
    %1091 = vector.broadcast %90 : f32 to vector<2x256xf32>
    %1092 = arith.mulf %1091, %1008 : vector<2x256xf32>
    %1093 = arith.addf %1090, %1092 : vector<2x256xf32>
    %1094 = vector.broadcast %91 : f32 to vector<2x256xf32>
    %1095 = arith.mulf %1094, %1020 : vector<2x256xf32>
    %1096 = arith.addf %1093, %1095 : vector<2x256xf32>
    %1097 = vector.broadcast %92 : f32 to vector<2x256xf32>
    %1098 = arith.mulf %1097, %1032 : vector<2x256xf32>
    %1099 = arith.addf %1096, %1098 : vector<2x256xf32>
    %1100 = vector.broadcast %93 : f32 to vector<2x256xf32>
    %1101 = arith.mulf %1100, %1004 : vector<2x256xf32>
    %1102 = arith.addf %1099, %1101 : vector<2x256xf32>
    %1103 = vector.broadcast %94 : f32 to vector<2x256xf32>
    %1104 = arith.mulf %1103, %1016 : vector<2x256xf32>
    %1105 = arith.addf %1102, %1104 : vector<2x256xf32>
    %1106 = vector.broadcast %95 : f32 to vector<2x256xf32>
    %1107 = arith.mulf %1106, %1028 : vector<2x256xf32>
    %1108 = arith.addf %1105, %1107 : vector<2x256xf32>
    %1109 = vector.broadcast %96 : f32 to vector<2x256xf32>
    %1110 = arith.mulf %1109, %1012 : vector<2x256xf32>
    %1111 = arith.addf %1108, %1110 : vector<2x256xf32>
    %1112 = vector.broadcast %97 : f32 to vector<2x256xf32>
    %1113 = arith.mulf %1112, %1024 : vector<2x256xf32>
    %1114 = arith.addf %1111, %1113 : vector<2x256xf32>
    %1115 = vector.broadcast %98 : f32 to vector<2x256xf32>
    %1116 = arith.mulf %1115, %1036 : vector<2x256xf32>
    %1117 = arith.addf %1114, %1116 : vector<2x256xf32>
    %1118 = vector.broadcast %99 : f32 to vector<2x256xf32>
    %1119 = arith.mulf %1118, %1009 : vector<2x256xf32>
    %1120 = arith.addf %1117, %1119 : vector<2x256xf32>
    %1121 = vector.broadcast %100 : f32 to vector<2x256xf32>
    %1122 = arith.mulf %1121, %1021 : vector<2x256xf32>
    %1123 = arith.addf %1120, %1122 : vector<2x256xf32>
    %1124 = vector.broadcast %101 : f32 to vector<2x256xf32>
    %1125 = arith.mulf %1124, %1033 : vector<2x256xf32>
    %1126 = arith.addf %1123, %1125 : vector<2x256xf32>
    %1127 = vector.broadcast %102 : f32 to vector<2x256xf32>
    %1128 = arith.mulf %1127, %1005 : vector<2x256xf32>
    %1129 = arith.addf %1126, %1128 : vector<2x256xf32>
    %1130 = vector.broadcast %103 : f32 to vector<2x256xf32>
    %1131 = arith.mulf %1130, %1017 : vector<2x256xf32>
    %1132 = arith.addf %1129, %1131 : vector<2x256xf32>
    %1133 = vector.broadcast %104 : f32 to vector<2x256xf32>
    %1134 = arith.mulf %1133, %1029 : vector<2x256xf32>
    %1135 = arith.addf %1132, %1134 : vector<2x256xf32>
    %1136 = vector.broadcast %105 : f32 to vector<2x256xf32>
    %1137 = arith.mulf %1136, %1013 : vector<2x256xf32>
    %1138 = arith.addf %1135, %1137 : vector<2x256xf32>
    %1139 = vector.broadcast %106 : f32 to vector<2x256xf32>
    %1140 = arith.mulf %1139, %1025 : vector<2x256xf32>
    %1141 = arith.addf %1138, %1140 : vector<2x256xf32>
    %1142 = vector.broadcast %107 : f32 to vector<2x256xf32>
    %1143 = arith.mulf %1142, %1037 : vector<2x256xf32>
    %1144 = arith.addf %1141, %1143 : vector<2x256xf32>
    %1145 = vector.broadcast %108 : f32 to vector<2x256xf32>
    %1146 = arith.mulf %1145, %1006 : vector<2x256xf32>
    %1147 = vector.broadcast %109 : f32 to vector<2x256xf32>
    %1148 = arith.mulf %1147, %1018 : vector<2x256xf32>
    %1149 = arith.addf %1146, %1148 : vector<2x256xf32>
    %1150 = vector.broadcast %110 : f32 to vector<2x256xf32>
    %1151 = arith.mulf %1150, %1030 : vector<2x256xf32>
    %1152 = arith.addf %1149, %1151 : vector<2x256xf32>
    %1153 = vector.broadcast %111 : f32 to vector<2x256xf32>
    %1154 = arith.mulf %1153, %1002 : vector<2x256xf32>
    %1155 = arith.addf %1152, %1154 : vector<2x256xf32>
    %1156 = vector.broadcast %112 : f32 to vector<2x256xf32>
    %1157 = arith.mulf %1156, %1014 : vector<2x256xf32>
    %1158 = arith.addf %1155, %1157 : vector<2x256xf32>
    %1159 = vector.broadcast %113 : f32 to vector<2x256xf32>
    %1160 = arith.mulf %1159, %1026 : vector<2x256xf32>
    %1161 = arith.addf %1158, %1160 : vector<2x256xf32>
    %1162 = vector.broadcast %114 : f32 to vector<2x256xf32>
    %1163 = arith.mulf %1162, %1010 : vector<2x256xf32>
    %1164 = arith.addf %1161, %1163 : vector<2x256xf32>
    %1165 = vector.broadcast %115 : f32 to vector<2x256xf32>
    %1166 = arith.mulf %1165, %1022 : vector<2x256xf32>
    %1167 = arith.addf %1164, %1166 : vector<2x256xf32>
    %1168 = vector.broadcast %116 : f32 to vector<2x256xf32>
    %1169 = arith.mulf %1168, %1034 : vector<2x256xf32>
    %1170 = arith.addf %1167, %1169 : vector<2x256xf32>
    %1171 = vector.broadcast %117 : f32 to vector<2x256xf32>
    %1172 = arith.mulf %1171, %1007 : vector<2x256xf32>
    %1173 = arith.addf %1170, %1172 : vector<2x256xf32>
    %1174 = vector.broadcast %118 : f32 to vector<2x256xf32>
    %1175 = arith.mulf %1174, %1019 : vector<2x256xf32>
    %1176 = arith.addf %1173, %1175 : vector<2x256xf32>
    %1177 = vector.broadcast %119 : f32 to vector<2x256xf32>
    %1178 = arith.mulf %1177, %1031 : vector<2x256xf32>
    %1179 = arith.addf %1176, %1178 : vector<2x256xf32>
    %1180 = vector.broadcast %120 : f32 to vector<2x256xf32>
    %1181 = arith.mulf %1180, %1003 : vector<2x256xf32>
    %1182 = arith.addf %1179, %1181 : vector<2x256xf32>
    %1183 = vector.broadcast %121 : f32 to vector<2x256xf32>
    %1184 = arith.mulf %1183, %1015 : vector<2x256xf32>
    %1185 = arith.addf %1182, %1184 : vector<2x256xf32>
    %1186 = vector.broadcast %122 : f32 to vector<2x256xf32>
    %1187 = arith.mulf %1186, %1027 : vector<2x256xf32>
    %1188 = arith.addf %1185, %1187 : vector<2x256xf32>
    %1189 = vector.broadcast %123 : f32 to vector<2x256xf32>
    %1190 = arith.mulf %1189, %1011 : vector<2x256xf32>
    %1191 = arith.addf %1188, %1190 : vector<2x256xf32>
    %1192 = vector.broadcast %124 : f32 to vector<2x256xf32>
    %1193 = arith.mulf %1192, %1023 : vector<2x256xf32>
    %1194 = arith.addf %1191, %1193 : vector<2x256xf32>
    %1195 = vector.broadcast %125 : f32 to vector<2x256xf32>
    %1196 = arith.mulf %1195, %1035 : vector<2x256xf32>
    %1197 = arith.addf %1194, %1196 : vector<2x256xf32>
    %1198 = vector.broadcast %126 : f32 to vector<2x256xf32>
    %1199 = arith.mulf %1198, %1008 : vector<2x256xf32>
    %1200 = arith.addf %1197, %1199 : vector<2x256xf32>
    %1201 = vector.broadcast %127 : f32 to vector<2x256xf32>
    %1202 = arith.mulf %1201, %1020 : vector<2x256xf32>
    %1203 = arith.addf %1200, %1202 : vector<2x256xf32>
    %1204 = vector.broadcast %128 : f32 to vector<2x256xf32>
    %1205 = arith.mulf %1204, %1032 : vector<2x256xf32>
    %1206 = arith.addf %1203, %1205 : vector<2x256xf32>
    %1207 = vector.broadcast %129 : f32 to vector<2x256xf32>
    %1208 = arith.mulf %1207, %1004 : vector<2x256xf32>
    %1209 = arith.addf %1206, %1208 : vector<2x256xf32>
    %1210 = vector.broadcast %130 : f32 to vector<2x256xf32>
    %1211 = arith.mulf %1210, %1016 : vector<2x256xf32>
    %1212 = arith.addf %1209, %1211 : vector<2x256xf32>
    %1213 = vector.broadcast %131 : f32 to vector<2x256xf32>
    %1214 = arith.mulf %1213, %1028 : vector<2x256xf32>
    %1215 = arith.addf %1212, %1214 : vector<2x256xf32>
    %1216 = vector.broadcast %132 : f32 to vector<2x256xf32>
    %1217 = arith.mulf %1216, %1012 : vector<2x256xf32>
    %1218 = arith.addf %1215, %1217 : vector<2x256xf32>
    %1219 = vector.broadcast %133 : f32 to vector<2x256xf32>
    %1220 = arith.mulf %1219, %1024 : vector<2x256xf32>
    %1221 = arith.addf %1218, %1220 : vector<2x256xf32>
    %1222 = vector.broadcast %134 : f32 to vector<2x256xf32>
    %1223 = arith.mulf %1222, %1036 : vector<2x256xf32>
    %1224 = arith.addf %1221, %1223 : vector<2x256xf32>
    %1225 = vector.broadcast %135 : f32 to vector<2x256xf32>
    %1226 = arith.mulf %1225, %1009 : vector<2x256xf32>
    %1227 = arith.addf %1224, %1226 : vector<2x256xf32>
    %1228 = vector.broadcast %136 : f32 to vector<2x256xf32>
    %1229 = arith.mulf %1228, %1021 : vector<2x256xf32>
    %1230 = arith.addf %1227, %1229 : vector<2x256xf32>
    %1231 = vector.broadcast %137 : f32 to vector<2x256xf32>
    %1232 = arith.mulf %1231, %1033 : vector<2x256xf32>
    %1233 = arith.addf %1230, %1232 : vector<2x256xf32>
    %1234 = vector.broadcast %138 : f32 to vector<2x256xf32>
    %1235 = arith.mulf %1234, %1005 : vector<2x256xf32>
    %1236 = arith.addf %1233, %1235 : vector<2x256xf32>
    %1237 = vector.broadcast %139 : f32 to vector<2x256xf32>
    %1238 = arith.mulf %1237, %1017 : vector<2x256xf32>
    %1239 = arith.addf %1236, %1238 : vector<2x256xf32>
    %1240 = vector.broadcast %140 : f32 to vector<2x256xf32>
    %1241 = arith.mulf %1240, %1029 : vector<2x256xf32>
    %1242 = arith.addf %1239, %1241 : vector<2x256xf32>
    %1243 = vector.broadcast %141 : f32 to vector<2x256xf32>
    %1244 = arith.mulf %1243, %1013 : vector<2x256xf32>
    %1245 = arith.addf %1242, %1244 : vector<2x256xf32>
    %1246 = vector.broadcast %142 : f32 to vector<2x256xf32>
    %1247 = arith.mulf %1246, %1025 : vector<2x256xf32>
    %1248 = arith.addf %1245, %1247 : vector<2x256xf32>
    %1249 = vector.broadcast %143 : f32 to vector<2x256xf32>
    %1250 = arith.mulf %1249, %1037 : vector<2x256xf32>
    %1251 = arith.addf %1248, %1250 : vector<2x256xf32>
    %1252 = vector.broadcast %144 : f32 to vector<2x256xf32>
    %1253 = arith.addf %1144, %1252 : vector<2x256xf32>
    %1254 = vector.broadcast %145 : f32 to vector<2x256xf32>
    %1255 = arith.addf %1251, %1254 : vector<2x256xf32>
    %1256 = tpu.concatenate %1253, %1255 in 0 : vector<2x256xf32>, vector<2x256xf32> -> vector<4x256xf32>
    %1257 = vector.broadcast %147 : vector<4x1xf32> to vector<4x256xf32>
    %1258 = arith.mulf %1257, %747 : vector<4x256xf32>
    %1259 = arith.addf %1256, %1258 : vector<4x256xf32>
    %1260 = arith.addf %749, %1259 : vector<4x256xf32>
    %cst_56 = arith.constant 5.000000e-02 : f32
    %1261 = vector.broadcast %cst_56 : f32 to vector<4x256xf32>
    %1262 = arith.mulf %1261, %1260 : vector<4x256xf32>
    %1263 = arith.addf %716, %1262 : vector<4x256xf32>
    %c1_57 = arith.constant 1 : index
    %c0_58 = arith.constant 0 : index
    %c0_59 = arith.constant 0 : index
    %1264 = vector.load %arg4[%c1_57, %c0_58, %c0_59] : memref<3x4x256xf32, #tpu.memory_space<vmem>>, vector<1x4x256xf32>
    %1265 = vector.shape_cast %1264 : vector<1x4x256xf32> to vector<4x256xf32>
    %1266 = vector.shape_cast %1263 : vector<4x256xf32> to vector<1x4x256xf32>
    tpu.vector_store %arg4[%c1_57, %c0_58, %c0_59], %1266 {strides = array<i32>} : memref<3x4x256xf32, #tpu.memory_space<vmem>>, vector<1x4x256xf32>,
    %1267 = arith.mulf %1259, %1259 : vector<4x256xf32>
    %1268 = arith.addf %721, %1267 : vector<4x256xf32>
    %1269 = arith.mulf %749, %1259 : vector<4x256xf32>
    %1270 = arith.addf %723, %1269 : vector<4x256xf32>
    %c1_i32_60 = arith.constant 1 : i32
    %1271 = tpu.dynamic_rotate %1263 by %c1_i32_60 dim 1 : vector<4x256xf32>, i32 -> vector<4x256xf32>
    %1272 = arith.select %157, %1263, %1271 : vector<4x256xi1>, vector<4x256xf32>
    %c255_i32_61 = arith.constant 255 : i32
    %1273 = tpu.dynamic_rotate %1263 by %c255_i32_61 dim 1 : vector<4x256xf32>, i32 -> vector<4x256xf32>
    %1274 = arith.select %159, %1263, %1273 : vector<4x256xi1>, vector<4x256xf32>
    %c16_i32_62 = arith.constant 16 : i32
    %1275 = tpu.dynamic_rotate %1272 by %c16_i32_62 dim 1 : vector<4x256xf32>, i32 -> vector<4x256xf32>
    %1276 = arith.select %161, %1272, %1275 : vector<4x256xi1>, vector<4x256xf32>
    %c240_i32_63 = arith.constant 240 : i32
    %1277 = tpu.dynamic_rotate %1272 by %c240_i32_63 dim 1 : vector<4x256xf32>, i32 -> vector<4x256xf32>
    %1278 = arith.select %163, %1272, %1277 : vector<4x256xi1>, vector<4x256xf32>
    %c16_i32_64 = arith.constant 16 : i32
    %1279 = tpu.dynamic_rotate %1263 by %c16_i32_64 dim 1 : vector<4x256xf32>, i32 -> vector<4x256xf32>
    %1280 = arith.select %161, %1263, %1279 : vector<4x256xi1>, vector<4x256xf32>
    %c240_i32_65 = arith.constant 240 : i32
    %1281 = tpu.dynamic_rotate %1263 by %c240_i32_65 dim 1 : vector<4x256xf32>, i32 -> vector<4x256xf32>
    %1282 = arith.select %163, %1263, %1281 : vector<4x256xi1>, vector<4x256xf32>
    %c16_i32_66 = arith.constant 16 : i32
    %1283 = tpu.dynamic_rotate %1274 by %c16_i32_66 dim 1 : vector<4x256xf32>, i32 -> vector<4x256xf32>
    %1284 = arith.select %161, %1274, %1283 : vector<4x256xi1>, vector<4x256xf32>
    %c240_i32_67 = arith.constant 240 : i32
    %1285 = tpu.dynamic_rotate %1274 by %c240_i32_67 dim 1 : vector<4x256xf32>, i32 -> vector<4x256xf32>
    %1286 = arith.select %163, %1274, %1285 : vector<4x256xi1>, vector<4x256xf32>
    %1287 = arith.addf %1280, %1282 : vector<4x256xf32>
    %1288 = arith.addf %1287, %1272 : vector<4x256xf32>
    %1289 = arith.addf %1288, %1274 : vector<4x256xf32>
    %cst_68 = arith.constant 4.000000e+00 : f32
    %1290 = vector.broadcast %cst_68 : f32 to vector<4x256xf32>
    %1291 = arith.mulf %1290, %1263 : vector<4x256xf32>
    %1292 = arith.subf %1289, %1291 : vector<4x256xf32>
    %cst_69 = arith.constant 1.000000e+00 : f32
    %1293 = vector.broadcast %cst_69 : f32 to vector<4x256xf32>
    %1294 = arith.mulf %1292, %1293 : vector<4x256xf32>
    %1295 = vector.broadcast %146 : vector<4x1xf32> to vector<4x256xf32>
    %1296 = arith.mulf %1295, %1294 : vector<4x256xf32>
    %1297 = vector.extract_strided_slice %1272 {offsets = [0, 0], sizes = [2, 256], strides = [1, 1]} : vector<4x256xf32> to vector<2x256xf32>
    %1298 = vector.extract_strided_slice %1272 {offsets = [2, 0], sizes = [2, 256], strides = [1, 1]} : vector<4x256xf32> to vector<2x256xf32>
    %1299 = vector.extract_strided_slice %1276 {offsets = [0, 0], sizes = [2, 256], strides = [1, 1]} : vector<4x256xf32> to vector<2x256xf32>
    %1300 = vector.extract_strided_slice %1276 {offsets = [2, 0], sizes = [2, 256], strides = [1, 1]} : vector<4x256xf32> to vector<2x256xf32>
    %1301 = vector.extract_strided_slice %1278 {offsets = [0, 0], sizes = [2, 256], strides = [1, 1]} : vector<4x256xf32> to vector<2x256xf32>
    %1302 = vector.extract_strided_slice %1278 {offsets = [2, 0], sizes = [2, 256], strides = [1, 1]} : vector<4x256xf32> to vector<2x256xf32>
    %1303 = vector.extract_strided_slice %1263 {offsets = [0, 0], sizes = [2, 256], strides = [1, 1]} : vector<4x256xf32> to vector<2x256xf32>
    %1304 = vector.extract_strided_slice %1263 {offsets = [2, 0], sizes = [2, 256], strides = [1, 1]} : vector<4x256xf32> to vector<2x256xf32>
    %1305 = vector.extract_strided_slice %1280 {offsets = [0, 0], sizes = [2, 256], strides = [1, 1]} : vector<4x256xf32> to vector<2x256xf32>
    %1306 = vector.extract_strided_slice %1280 {offsets = [2, 0], sizes = [2, 256], strides = [1, 1]} : vector<4x256xf32> to vector<2x256xf32>
    %1307 = vector.extract_strided_slice %1282 {offsets = [0, 0], sizes = [2, 256], strides = [1, 1]} : vector<4x256xf32> to vector<2x256xf32>
    %1308 = vector.extract_strided_slice %1282 {offsets = [2, 0], sizes = [2, 256], strides = [1, 1]} : vector<4x256xf32> to vector<2x256xf32>
    %1309 = vector.extract_strided_slice %1274 {offsets = [0, 0], sizes = [2, 256], strides = [1, 1]} : vector<4x256xf32> to vector<2x256xf32>
    %1310 = vector.extract_strided_slice %1274 {offsets = [2, 0], sizes = [2, 256], strides = [1, 1]} : vector<4x256xf32> to vector<2x256xf32>
    %1311 = vector.extract_strided_slice %1284 {offsets = [0, 0], sizes = [2, 256], strides = [1, 1]} : vector<4x256xf32> to vector<2x256xf32>
    %1312 = vector.extract_strided_slice %1284 {offsets = [2, 0], sizes = [2, 256], strides = [1, 1]} : vector<4x256xf32> to vector<2x256xf32>
    %1313 = vector.extract_strided_slice %1286 {offsets = [0, 0], sizes = [2, 256], strides = [1, 1]} : vector<4x256xf32> to vector<2x256xf32>
    %1314 = vector.extract_strided_slice %1286 {offsets = [2, 0], sizes = [2, 256], strides = [1, 1]} : vector<4x256xf32> to vector<2x256xf32>
    %1315 = vector.broadcast %0 : f32 to vector<2x256xf32>
    %1316 = arith.mulf %1315, %1299 : vector<2x256xf32>
    %1317 = vector.broadcast %1 : f32 to vector<2x256xf32>
    %1318 = arith.mulf %1317, %1305 : vector<2x256xf32>
    %1319 = arith.addf %1316, %1318 : vector<2x256xf32>
    %1320 = vector.broadcast %2 : f32 to vector<2x256xf32>
    %1321 = arith.mulf %1320, %1311 : vector<2x256xf32>
    %1322 = arith.addf %1319, %1321 : vector<2x256xf32>
    %1323 = vector.broadcast %3 : f32 to vector<2x256xf32>
    %1324 = arith.mulf %1323, %1297 : vector<2x256xf32>
    %1325 = arith.addf %1322, %1324 : vector<2x256xf32>
    %1326 = vector.broadcast %4 : f32 to vector<2x256xf32>
    %1327 = arith.mulf %1326, %1303 : vector<2x256xf32>
    %1328 = arith.addf %1325, %1327 : vector<2x256xf32>
    %1329 = vector.broadcast %5 : f32 to vector<2x256xf32>
    %1330 = arith.mulf %1329, %1309 : vector<2x256xf32>
    %1331 = arith.addf %1328, %1330 : vector<2x256xf32>
    %1332 = vector.broadcast %6 : f32 to vector<2x256xf32>
    %1333 = arith.mulf %1332, %1301 : vector<2x256xf32>
    %1334 = arith.addf %1331, %1333 : vector<2x256xf32>
    %1335 = vector.broadcast %7 : f32 to vector<2x256xf32>
    %1336 = arith.mulf %1335, %1307 : vector<2x256xf32>
    %1337 = arith.addf %1334, %1336 : vector<2x256xf32>
    %1338 = vector.broadcast %8 : f32 to vector<2x256xf32>
    %1339 = arith.mulf %1338, %1313 : vector<2x256xf32>
    %1340 = arith.addf %1337, %1339 : vector<2x256xf32>
    %1341 = vector.broadcast %9 : f32 to vector<2x256xf32>
    %1342 = arith.mulf %1341, %1300 : vector<2x256xf32>
    %1343 = arith.addf %1340, %1342 : vector<2x256xf32>
    %1344 = vector.broadcast %10 : f32 to vector<2x256xf32>
    %1345 = arith.mulf %1344, %1306 : vector<2x256xf32>
    %1346 = arith.addf %1343, %1345 : vector<2x256xf32>
    %1347 = vector.broadcast %11 : f32 to vector<2x256xf32>
    %1348 = arith.mulf %1347, %1312 : vector<2x256xf32>
    %1349 = arith.addf %1346, %1348 : vector<2x256xf32>
    %1350 = vector.broadcast %12 : f32 to vector<2x256xf32>
    %1351 = arith.mulf %1350, %1298 : vector<2x256xf32>
    %1352 = arith.addf %1349, %1351 : vector<2x256xf32>
    %1353 = vector.broadcast %13 : f32 to vector<2x256xf32>
    %1354 = arith.mulf %1353, %1304 : vector<2x256xf32>
    %1355 = arith.addf %1352, %1354 : vector<2x256xf32>
    %1356 = vector.broadcast %14 : f32 to vector<2x256xf32>
    %1357 = arith.mulf %1356, %1310 : vector<2x256xf32>
    %1358 = arith.addf %1355, %1357 : vector<2x256xf32>
    %1359 = vector.broadcast %15 : f32 to vector<2x256xf32>
    %1360 = arith.mulf %1359, %1302 : vector<2x256xf32>
    %1361 = arith.addf %1358, %1360 : vector<2x256xf32>
    %1362 = vector.broadcast %16 : f32 to vector<2x256xf32>
    %1363 = arith.mulf %1362, %1308 : vector<2x256xf32>
    %1364 = arith.addf %1361, %1363 : vector<2x256xf32>
    %1365 = vector.broadcast %17 : f32 to vector<2x256xf32>
    %1366 = arith.mulf %1365, %1314 : vector<2x256xf32>
    %1367 = arith.addf %1364, %1366 : vector<2x256xf32>
    %1368 = vector.broadcast %18 : f32 to vector<2x256xf32>
    %1369 = arith.mulf %1368, %1299 : vector<2x256xf32>
    %1370 = vector.broadcast %19 : f32 to vector<2x256xf32>
    %1371 = arith.mulf %1370, %1305 : vector<2x256xf32>
    %1372 = arith.addf %1369, %1371 : vector<2x256xf32>
    %1373 = vector.broadcast %20 : f32 to vector<2x256xf32>
    %1374 = arith.mulf %1373, %1311 : vector<2x256xf32>
    %1375 = arith.addf %1372, %1374 : vector<2x256xf32>
    %1376 = vector.broadcast %21 : f32 to vector<2x256xf32>
    %1377 = arith.mulf %1376, %1297 : vector<2x256xf32>
    %1378 = arith.addf %1375, %1377 : vector<2x256xf32>
    %1379 = vector.broadcast %22 : f32 to vector<2x256xf32>
    %1380 = arith.mulf %1379, %1303 : vector<2x256xf32>
    %1381 = arith.addf %1378, %1380 : vector<2x256xf32>
    %1382 = vector.broadcast %23 : f32 to vector<2x256xf32>
    %1383 = arith.mulf %1382, %1309 : vector<2x256xf32>
    %1384 = arith.addf %1381, %1383 : vector<2x256xf32>
    %1385 = vector.broadcast %24 : f32 to vector<2x256xf32>
    %1386 = arith.mulf %1385, %1301 : vector<2x256xf32>
    %1387 = arith.addf %1384, %1386 : vector<2x256xf32>
    %1388 = vector.broadcast %25 : f32 to vector<2x256xf32>
    %1389 = arith.mulf %1388, %1307 : vector<2x256xf32>
    %1390 = arith.addf %1387, %1389 : vector<2x256xf32>
    %1391 = vector.broadcast %26 : f32 to vector<2x256xf32>
    %1392 = arith.mulf %1391, %1313 : vector<2x256xf32>
    %1393 = arith.addf %1390, %1392 : vector<2x256xf32>
    %1394 = vector.broadcast %27 : f32 to vector<2x256xf32>
    %1395 = arith.mulf %1394, %1300 : vector<2x256xf32>
    %1396 = arith.addf %1393, %1395 : vector<2x256xf32>
    %1397 = vector.broadcast %28 : f32 to vector<2x256xf32>
    %1398 = arith.mulf %1397, %1306 : vector<2x256xf32>
    %1399 = arith.addf %1396, %1398 : vector<2x256xf32>
    %1400 = vector.broadcast %29 : f32 to vector<2x256xf32>
    %1401 = arith.mulf %1400, %1312 : vector<2x256xf32>
    %1402 = arith.addf %1399, %1401 : vector<2x256xf32>
    %1403 = vector.broadcast %30 : f32 to vector<2x256xf32>
    %1404 = arith.mulf %1403, %1298 : vector<2x256xf32>
    %1405 = arith.addf %1402, %1404 : vector<2x256xf32>
    %1406 = vector.broadcast %31 : f32 to vector<2x256xf32>
    %1407 = arith.mulf %1406, %1304 : vector<2x256xf32>
    %1408 = arith.addf %1405, %1407 : vector<2x256xf32>
    %1409 = vector.broadcast %32 : f32 to vector<2x256xf32>
    %1410 = arith.mulf %1409, %1310 : vector<2x256xf32>
    %1411 = arith.addf %1408, %1410 : vector<2x256xf32>
    %1412 = vector.broadcast %33 : f32 to vector<2x256xf32>
    %1413 = arith.mulf %1412, %1302 : vector<2x256xf32>
    %1414 = arith.addf %1411, %1413 : vector<2x256xf32>
    %1415 = vector.broadcast %34 : f32 to vector<2x256xf32>
    %1416 = arith.mulf %1415, %1308 : vector<2x256xf32>
    %1417 = arith.addf %1414, %1416 : vector<2x256xf32>
    %1418 = vector.broadcast %35 : f32 to vector<2x256xf32>
    %1419 = arith.mulf %1418, %1314 : vector<2x256xf32>
    %1420 = arith.addf %1417, %1419 : vector<2x256xf32>
    %1421 = vector.broadcast %36 : f32 to vector<2x256xf32>
    %1422 = arith.mulf %1421, %1299 : vector<2x256xf32>
    %1423 = vector.broadcast %37 : f32 to vector<2x256xf32>
    %1424 = arith.mulf %1423, %1305 : vector<2x256xf32>
    %1425 = arith.addf %1422, %1424 : vector<2x256xf32>
    %1426 = vector.broadcast %38 : f32 to vector<2x256xf32>
    %1427 = arith.mulf %1426, %1311 : vector<2x256xf32>
    %1428 = arith.addf %1425, %1427 : vector<2x256xf32>
    %1429 = vector.broadcast %39 : f32 to vector<2x256xf32>
    %1430 = arith.mulf %1429, %1297 : vector<2x256xf32>
    %1431 = arith.addf %1428, %1430 : vector<2x256xf32>
    %1432 = vector.broadcast %40 : f32 to vector<2x256xf32>
    %1433 = arith.mulf %1432, %1303 : vector<2x256xf32>
    %1434 = arith.addf %1431, %1433 : vector<2x256xf32>
    %1435 = vector.broadcast %41 : f32 to vector<2x256xf32>
    %1436 = arith.mulf %1435, %1309 : vector<2x256xf32>
    %1437 = arith.addf %1434, %1436 : vector<2x256xf32>
    %1438 = vector.broadcast %42 : f32 to vector<2x256xf32>
    %1439 = arith.mulf %1438, %1301 : vector<2x256xf32>
    %1440 = arith.addf %1437, %1439 : vector<2x256xf32>
    %1441 = vector.broadcast %43 : f32 to vector<2x256xf32>
    %1442 = arith.mulf %1441, %1307 : vector<2x256xf32>
    %1443 = arith.addf %1440, %1442 : vector<2x256xf32>
    %1444 = vector.broadcast %44 : f32 to vector<2x256xf32>
    %1445 = arith.mulf %1444, %1313 : vector<2x256xf32>
    %1446 = arith.addf %1443, %1445 : vector<2x256xf32>
    %1447 = vector.broadcast %45 : f32 to vector<2x256xf32>
    %1448 = arith.mulf %1447, %1300 : vector<2x256xf32>
    %1449 = arith.addf %1446, %1448 : vector<2x256xf32>
    %1450 = vector.broadcast %46 : f32 to vector<2x256xf32>
    %1451 = arith.mulf %1450, %1306 : vector<2x256xf32>
    %1452 = arith.addf %1449, %1451 : vector<2x256xf32>
    %1453 = vector.broadcast %47 : f32 to vector<2x256xf32>
    %1454 = arith.mulf %1453, %1312 : vector<2x256xf32>
    %1455 = arith.addf %1452, %1454 : vector<2x256xf32>
    %1456 = vector.broadcast %48 : f32 to vector<2x256xf32>
    %1457 = arith.mulf %1456, %1298 : vector<2x256xf32>
    %1458 = arith.addf %1455, %1457 : vector<2x256xf32>
    %1459 = vector.broadcast %49 : f32 to vector<2x256xf32>
    %1460 = arith.mulf %1459, %1304 : vector<2x256xf32>
    %1461 = arith.addf %1458, %1460 : vector<2x256xf32>
    %1462 = vector.broadcast %50 : f32 to vector<2x256xf32>
    %1463 = arith.mulf %1462, %1310 : vector<2x256xf32>
    %1464 = arith.addf %1461, %1463 : vector<2x256xf32>
    %1465 = vector.broadcast %51 : f32 to vector<2x256xf32>
    %1466 = arith.mulf %1465, %1302 : vector<2x256xf32>
    %1467 = arith.addf %1464, %1466 : vector<2x256xf32>
    %1468 = vector.broadcast %52 : f32 to vector<2x256xf32>
    %1469 = arith.mulf %1468, %1308 : vector<2x256xf32>
    %1470 = arith.addf %1467, %1469 : vector<2x256xf32>
    %1471 = vector.broadcast %53 : f32 to vector<2x256xf32>
    %1472 = arith.mulf %1471, %1314 : vector<2x256xf32>
    %1473 = arith.addf %1470, %1472 : vector<2x256xf32>
    %1474 = vector.broadcast %54 : f32 to vector<2x256xf32>
    %1475 = arith.mulf %1474, %1299 : vector<2x256xf32>
    %1476 = vector.broadcast %55 : f32 to vector<2x256xf32>
    %1477 = arith.mulf %1476, %1305 : vector<2x256xf32>
    %1478 = arith.addf %1475, %1477 : vector<2x256xf32>
    %1479 = vector.broadcast %56 : f32 to vector<2x256xf32>
    %1480 = arith.mulf %1479, %1311 : vector<2x256xf32>
    %1481 = arith.addf %1478, %1480 : vector<2x256xf32>
    %1482 = vector.broadcast %57 : f32 to vector<2x256xf32>
    %1483 = arith.mulf %1482, %1297 : vector<2x256xf32>
    %1484 = arith.addf %1481, %1483 : vector<2x256xf32>
    %1485 = vector.broadcast %58 : f32 to vector<2x256xf32>
    %1486 = arith.mulf %1485, %1303 : vector<2x256xf32>
    %1487 = arith.addf %1484, %1486 : vector<2x256xf32>
    %1488 = vector.broadcast %59 : f32 to vector<2x256xf32>
    %1489 = arith.mulf %1488, %1309 : vector<2x256xf32>
    %1490 = arith.addf %1487, %1489 : vector<2x256xf32>
    %1491 = vector.broadcast %60 : f32 to vector<2x256xf32>
    %1492 = arith.mulf %1491, %1301 : vector<2x256xf32>
    %1493 = arith.addf %1490, %1492 : vector<2x256xf32>
    %1494 = vector.broadcast %61 : f32 to vector<2x256xf32>
    %1495 = arith.mulf %1494, %1307 : vector<2x256xf32>
    %1496 = arith.addf %1493, %1495 : vector<2x256xf32>
    %1497 = vector.broadcast %62 : f32 to vector<2x256xf32>
    %1498 = arith.mulf %1497, %1313 : vector<2x256xf32>
    %1499 = arith.addf %1496, %1498 : vector<2x256xf32>
    %1500 = vector.broadcast %63 : f32 to vector<2x256xf32>
    %1501 = arith.mulf %1500, %1300 : vector<2x256xf32>
    %1502 = arith.addf %1499, %1501 : vector<2x256xf32>
    %1503 = vector.broadcast %64 : f32 to vector<2x256xf32>
    %1504 = arith.mulf %1503, %1306 : vector<2x256xf32>
    %1505 = arith.addf %1502, %1504 : vector<2x256xf32>
    %1506 = vector.broadcast %65 : f32 to vector<2x256xf32>
    %1507 = arith.mulf %1506, %1312 : vector<2x256xf32>
    %1508 = arith.addf %1505, %1507 : vector<2x256xf32>
    %1509 = vector.broadcast %66 : f32 to vector<2x256xf32>
    %1510 = arith.mulf %1509, %1298 : vector<2x256xf32>
    %1511 = arith.addf %1508, %1510 : vector<2x256xf32>
    %1512 = vector.broadcast %67 : f32 to vector<2x256xf32>
    %1513 = arith.mulf %1512, %1304 : vector<2x256xf32>
    %1514 = arith.addf %1511, %1513 : vector<2x256xf32>
    %1515 = vector.broadcast %68 : f32 to vector<2x256xf32>
    %1516 = arith.mulf %1515, %1310 : vector<2x256xf32>
    %1517 = arith.addf %1514, %1516 : vector<2x256xf32>
    %1518 = vector.broadcast %69 : f32 to vector<2x256xf32>
    %1519 = arith.mulf %1518, %1302 : vector<2x256xf32>
    %1520 = arith.addf %1517, %1519 : vector<2x256xf32>
    %1521 = vector.broadcast %70 : f32 to vector<2x256xf32>
    %1522 = arith.mulf %1521, %1308 : vector<2x256xf32>
    %1523 = arith.addf %1520, %1522 : vector<2x256xf32>
    %1524 = vector.broadcast %71 : f32 to vector<2x256xf32>
    %1525 = arith.mulf %1524, %1314 : vector<2x256xf32>
    %1526 = arith.addf %1523, %1525 : vector<2x256xf32>
    %1527 = tpu.concatenate %1367, %1420, %1473, %1526 in 0 : vector<2x256xf32>, vector<2x256xf32>, vector<2x256xf32>, vector<2x256xf32> -> vector<8x256xf32>
    %cst_70 = arith.constant 0.000000e+00 : f32
    %1528 = vector.broadcast %cst_70 : f32 to vector<8x256xf32>
    %1529 = arith.cmpf oge, %1527, %1528 : vector<8x256xf32>
    %cst_71 = arith.constant 0.00999999977 : f32
    %1530 = vector.broadcast %cst_71 : f32 to vector<8x256xf32>
    %1531 = arith.mulf %1530, %1527 : vector<8x256xf32>
    %1532 = arith.select %1529, %1527, %1531 : vector<8x256xi1>, vector<8x256xf32>
    %c1_i32_72 = arith.constant 1 : i32
    %1533 = tpu.dynamic_rotate %1532 by %c1_i32_72 dim 1 : vector<8x256xf32>, i32 -> vector<8x256xf32>
    %1534 = arith.select %432, %1532, %1533 : vector<8x256xi1>, vector<8x256xf32>
    %c255_i32_73 = arith.constant 255 : i32
    %1535 = tpu.dynamic_rotate %1532 by %c255_i32_73 dim 1 : vector<8x256xf32>, i32 -> vector<8x256xf32>
    %1536 = arith.select %434, %1532, %1535 : vector<8x256xi1>, vector<8x256xf32>
    %c16_i32_74 = arith.constant 16 : i32
    %1537 = tpu.dynamic_rotate %1534 by %c16_i32_74 dim 1 : vector<8x256xf32>, i32 -> vector<8x256xf32>
    %1538 = arith.select %436, %1534, %1537 : vector<8x256xi1>, vector<8x256xf32>
    %c240_i32_75 = arith.constant 240 : i32
    %1539 = tpu.dynamic_rotate %1534 by %c240_i32_75 dim 1 : vector<8x256xf32>, i32 -> vector<8x256xf32>
    %1540 = arith.select %438, %1534, %1539 : vector<8x256xi1>, vector<8x256xf32>
    %c16_i32_76 = arith.constant 16 : i32
    %1541 = tpu.dynamic_rotate %1532 by %c16_i32_76 dim 1 : vector<8x256xf32>, i32 -> vector<8x256xf32>
    %1542 = arith.select %436, %1532, %1541 : vector<8x256xi1>, vector<8x256xf32>
    %c240_i32_77 = arith.constant 240 : i32
    %1543 = tpu.dynamic_rotate %1532 by %c240_i32_77 dim 1 : vector<8x256xf32>, i32 -> vector<8x256xf32>
    %1544 = arith.select %438, %1532, %1543 : vector<8x256xi1>, vector<8x256xf32>
    %c16_i32_78 = arith.constant 16 : i32
    %1545 = tpu.dynamic_rotate %1536 by %c16_i32_78 dim 1 : vector<8x256xf32>, i32 -> vector<8x256xf32>
    %1546 = arith.select %436, %1536, %1545 : vector<8x256xi1>, vector<8x256xf32>
    %c240_i32_79 = arith.constant 240 : i32
    %1547 = tpu.dynamic_rotate %1536 by %c240_i32_79 dim 1 : vector<8x256xf32>, i32 -> vector<8x256xf32>
    %1548 = arith.select %438, %1536, %1547 : vector<8x256xi1>, vector<8x256xf32>
    %1549 = vector.extract_strided_slice %1534 {offsets = [0, 0], sizes = [2, 256], strides = [1, 1]} : vector<8x256xf32> to vector<2x256xf32>
    %1550 = vector.extract_strided_slice %1534 {offsets = [2, 0], sizes = [2, 256], strides = [1, 1]} : vector<8x256xf32> to vector<2x256xf32>
    %1551 = vector.extract_strided_slice %1534 {offsets = [4, 0], sizes = [2, 256], strides = [1, 1]} : vector<8x256xf32> to vector<2x256xf32>
    %1552 = vector.extract_strided_slice %1534 {offsets = [6, 0], sizes = [2, 256], strides = [1, 1]} : vector<8x256xf32> to vector<2x256xf32>
    %1553 = vector.extract_strided_slice %1538 {offsets = [0, 0], sizes = [2, 256], strides = [1, 1]} : vector<8x256xf32> to vector<2x256xf32>
    %1554 = vector.extract_strided_slice %1538 {offsets = [2, 0], sizes = [2, 256], strides = [1, 1]} : vector<8x256xf32> to vector<2x256xf32>
    %1555 = vector.extract_strided_slice %1538 {offsets = [4, 0], sizes = [2, 256], strides = [1, 1]} : vector<8x256xf32> to vector<2x256xf32>
    %1556 = vector.extract_strided_slice %1538 {offsets = [6, 0], sizes = [2, 256], strides = [1, 1]} : vector<8x256xf32> to vector<2x256xf32>
    %1557 = vector.extract_strided_slice %1540 {offsets = [0, 0], sizes = [2, 256], strides = [1, 1]} : vector<8x256xf32> to vector<2x256xf32>
    %1558 = vector.extract_strided_slice %1540 {offsets = [2, 0], sizes = [2, 256], strides = [1, 1]} : vector<8x256xf32> to vector<2x256xf32>
    %1559 = vector.extract_strided_slice %1540 {offsets = [4, 0], sizes = [2, 256], strides = [1, 1]} : vector<8x256xf32> to vector<2x256xf32>
    %1560 = vector.extract_strided_slice %1540 {offsets = [6, 0], sizes = [2, 256], strides = [1, 1]} : vector<8x256xf32> to vector<2x256xf32>
    %1561 = vector.extract_strided_slice %1532 {offsets = [0, 0], sizes = [2, 256], strides = [1, 1]} : vector<8x256xf32> to vector<2x256xf32>
    %1562 = vector.extract_strided_slice %1532 {offsets = [2, 0], sizes = [2, 256], strides = [1, 1]} : vector<8x256xf32> to vector<2x256xf32>
    %1563 = vector.extract_strided_slice %1532 {offsets = [4, 0], sizes = [2, 256], strides = [1, 1]} : vector<8x256xf32> to vector<2x256xf32>
    %1564 = vector.extract_strided_slice %1532 {offsets = [6, 0], sizes = [2, 256], strides = [1, 1]} : vector<8x256xf32> to vector<2x256xf32>
    %1565 = vector.extract_strided_slice %1542 {offsets = [0, 0], sizes = [2, 256], strides = [1, 1]} : vector<8x256xf32> to vector<2x256xf32>
    %1566 = vector.extract_strided_slice %1542 {offsets = [2, 0], sizes = [2, 256], strides = [1, 1]} : vector<8x256xf32> to vector<2x256xf32>
    %1567 = vector.extract_strided_slice %1542 {offsets = [4, 0], sizes = [2, 256], strides = [1, 1]} : vector<8x256xf32> to vector<2x256xf32>
    %1568 = vector.extract_strided_slice %1542 {offsets = [6, 0], sizes = [2, 256], strides = [1, 1]} : vector<8x256xf32> to vector<2x256xf32>
    %1569 = vector.extract_strided_slice %1544 {offsets = [0, 0], sizes = [2, 256], strides = [1, 1]} : vector<8x256xf32> to vector<2x256xf32>
    %1570 = vector.extract_strided_slice %1544 {offsets = [2, 0], sizes = [2, 256], strides = [1, 1]} : vector<8x256xf32> to vector<2x256xf32>
    %1571 = vector.extract_strided_slice %1544 {offsets = [4, 0], sizes = [2, 256], strides = [1, 1]} : vector<8x256xf32> to vector<2x256xf32>
    %1572 = vector.extract_strided_slice %1544 {offsets = [6, 0], sizes = [2, 256], strides = [1, 1]} : vector<8x256xf32> to vector<2x256xf32>
    %1573 = vector.extract_strided_slice %1536 {offsets = [0, 0], sizes = [2, 256], strides = [1, 1]} : vector<8x256xf32> to vector<2x256xf32>
    %1574 = vector.extract_strided_slice %1536 {offsets = [2, 0], sizes = [2, 256], strides = [1, 1]} : vector<8x256xf32> to vector<2x256xf32>
    %1575 = vector.extract_strided_slice %1536 {offsets = [4, 0], sizes = [2, 256], strides = [1, 1]} : vector<8x256xf32> to vector<2x256xf32>
    %1576 = vector.extract_strided_slice %1536 {offsets = [6, 0], sizes = [2, 256], strides = [1, 1]} : vector<8x256xf32> to vector<2x256xf32>
    %1577 = vector.extract_strided_slice %1546 {offsets = [0, 0], sizes = [2, 256], strides = [1, 1]} : vector<8x256xf32> to vector<2x256xf32>
    %1578 = vector.extract_strided_slice %1546 {offsets = [2, 0], sizes = [2, 256], strides = [1, 1]} : vector<8x256xf32> to vector<2x256xf32>
    %1579 = vector.extract_strided_slice %1546 {offsets = [4, 0], sizes = [2, 256], strides = [1, 1]} : vector<8x256xf32> to vector<2x256xf32>
    %1580 = vector.extract_strided_slice %1546 {offsets = [6, 0], sizes = [2, 256], strides = [1, 1]} : vector<8x256xf32> to vector<2x256xf32>
    %1581 = vector.extract_strided_slice %1548 {offsets = [0, 0], sizes = [2, 256], strides = [1, 1]} : vector<8x256xf32> to vector<2x256xf32>
    %1582 = vector.extract_strided_slice %1548 {offsets = [2, 0], sizes = [2, 256], strides = [1, 1]} : vector<8x256xf32> to vector<2x256xf32>
    %1583 = vector.extract_strided_slice %1548 {offsets = [4, 0], sizes = [2, 256], strides = [1, 1]} : vector<8x256xf32> to vector<2x256xf32>
    %1584 = vector.extract_strided_slice %1548 {offsets = [6, 0], sizes = [2, 256], strides = [1, 1]} : vector<8x256xf32> to vector<2x256xf32>
    %1585 = vector.broadcast %72 : f32 to vector<2x256xf32>
    %1586 = arith.mulf %1585, %1553 : vector<2x256xf32>
    %1587 = vector.broadcast %73 : f32 to vector<2x256xf32>
    %1588 = arith.mulf %1587, %1565 : vector<2x256xf32>
    %1589 = arith.addf %1586, %1588 : vector<2x256xf32>
    %1590 = vector.broadcast %74 : f32 to vector<2x256xf32>
    %1591 = arith.mulf %1590, %1577 : vector<2x256xf32>
    %1592 = arith.addf %1589, %1591 : vector<2x256xf32>
    %1593 = vector.broadcast %75 : f32 to vector<2x256xf32>
    %1594 = arith.mulf %1593, %1549 : vector<2x256xf32>
    %1595 = arith.addf %1592, %1594 : vector<2x256xf32>
    %1596 = vector.broadcast %76 : f32 to vector<2x256xf32>
    %1597 = arith.mulf %1596, %1561 : vector<2x256xf32>
    %1598 = arith.addf %1595, %1597 : vector<2x256xf32>
    %1599 = vector.broadcast %77 : f32 to vector<2x256xf32>
    %1600 = arith.mulf %1599, %1573 : vector<2x256xf32>
    %1601 = arith.addf %1598, %1600 : vector<2x256xf32>
    %1602 = vector.broadcast %78 : f32 to vector<2x256xf32>
    %1603 = arith.mulf %1602, %1557 : vector<2x256xf32>
    %1604 = arith.addf %1601, %1603 : vector<2x256xf32>
    %1605 = vector.broadcast %79 : f32 to vector<2x256xf32>
    %1606 = arith.mulf %1605, %1569 : vector<2x256xf32>
    %1607 = arith.addf %1604, %1606 : vector<2x256xf32>
    %1608 = vector.broadcast %80 : f32 to vector<2x256xf32>
    %1609 = arith.mulf %1608, %1581 : vector<2x256xf32>
    %1610 = arith.addf %1607, %1609 : vector<2x256xf32>
    %1611 = vector.broadcast %81 : f32 to vector<2x256xf32>
    %1612 = arith.mulf %1611, %1554 : vector<2x256xf32>
    %1613 = arith.addf %1610, %1612 : vector<2x256xf32>
    %1614 = vector.broadcast %82 : f32 to vector<2x256xf32>
    %1615 = arith.mulf %1614, %1566 : vector<2x256xf32>
    %1616 = arith.addf %1613, %1615 : vector<2x256xf32>
    %1617 = vector.broadcast %83 : f32 to vector<2x256xf32>
    %1618 = arith.mulf %1617, %1578 : vector<2x256xf32>
    %1619 = arith.addf %1616, %1618 : vector<2x256xf32>
    %1620 = vector.broadcast %84 : f32 to vector<2x256xf32>
    %1621 = arith.mulf %1620, %1550 : vector<2x256xf32>
    %1622 = arith.addf %1619, %1621 : vector<2x256xf32>
    %1623 = vector.broadcast %85 : f32 to vector<2x256xf32>
    %1624 = arith.mulf %1623, %1562 : vector<2x256xf32>
    %1625 = arith.addf %1622, %1624 : vector<2x256xf32>
    %1626 = vector.broadcast %86 : f32 to vector<2x256xf32>
    %1627 = arith.mulf %1626, %1574 : vector<2x256xf32>
    %1628 = arith.addf %1625, %1627 : vector<2x256xf32>
    %1629 = vector.broadcast %87 : f32 to vector<2x256xf32>
    %1630 = arith.mulf %1629, %1558 : vector<2x256xf32>
    %1631 = arith.addf %1628, %1630 : vector<2x256xf32>
    %1632 = vector.broadcast %88 : f32 to vector<2x256xf32>
    %1633 = arith.mulf %1632, %1570 : vector<2x256xf32>
    %1634 = arith.addf %1631, %1633 : vector<2x256xf32>
    %1635 = vector.broadcast %89 : f32 to vector<2x256xf32>
    %1636 = arith.mulf %1635, %1582 : vector<2x256xf32>
    %1637 = arith.addf %1634, %1636 : vector<2x256xf32>
    %1638 = vector.broadcast %90 : f32 to vector<2x256xf32>
    %1639 = arith.mulf %1638, %1555 : vector<2x256xf32>
    %1640 = arith.addf %1637, %1639 : vector<2x256xf32>
    %1641 = vector.broadcast %91 : f32 to vector<2x256xf32>
    %1642 = arith.mulf %1641, %1567 : vector<2x256xf32>
    %1643 = arith.addf %1640, %1642 : vector<2x256xf32>
    %1644 = vector.broadcast %92 : f32 to vector<2x256xf32>
    %1645 = arith.mulf %1644, %1579 : vector<2x256xf32>
    %1646 = arith.addf %1643, %1645 : vector<2x256xf32>
    %1647 = vector.broadcast %93 : f32 to vector<2x256xf32>
    %1648 = arith.mulf %1647, %1551 : vector<2x256xf32>
    %1649 = arith.addf %1646, %1648 : vector<2x256xf32>
    %1650 = vector.broadcast %94 : f32 to vector<2x256xf32>
    %1651 = arith.mulf %1650, %1563 : vector<2x256xf32>
    %1652 = arith.addf %1649, %1651 : vector<2x256xf32>
    %1653 = vector.broadcast %95 : f32 to vector<2x256xf32>
    %1654 = arith.mulf %1653, %1575 : vector<2x256xf32>
    %1655 = arith.addf %1652, %1654 : vector<2x256xf32>
    %1656 = vector.broadcast %96 : f32 to vector<2x256xf32>
    %1657 = arith.mulf %1656, %1559 : vector<2x256xf32>
    %1658 = arith.addf %1655, %1657 : vector<2x256xf32>
    %1659 = vector.broadcast %97 : f32 to vector<2x256xf32>
    %1660 = arith.mulf %1659, %1571 : vector<2x256xf32>
    %1661 = arith.addf %1658, %1660 : vector<2x256xf32>
    %1662 = vector.broadcast %98 : f32 to vector<2x256xf32>
    %1663 = arith.mulf %1662, %1583 : vector<2x256xf32>
    %1664 = arith.addf %1661, %1663 : vector<2x256xf32>
    %1665 = vector.broadcast %99 : f32 to vector<2x256xf32>
    %1666 = arith.mulf %1665, %1556 : vector<2x256xf32>
    %1667 = arith.addf %1664, %1666 : vector<2x256xf32>
    %1668 = vector.broadcast %100 : f32 to vector<2x256xf32>
    %1669 = arith.mulf %1668, %1568 : vector<2x256xf32>
    %1670 = arith.addf %1667, %1669 : vector<2x256xf32>
    %1671 = vector.broadcast %101 : f32 to vector<2x256xf32>
    %1672 = arith.mulf %1671, %1580 : vector<2x256xf32>
    %1673 = arith.addf %1670, %1672 : vector<2x256xf32>
    %1674 = vector.broadcast %102 : f32 to vector<2x256xf32>
    %1675 = arith.mulf %1674, %1552 : vector<2x256xf32>
    %1676 = arith.addf %1673, %1675 : vector<2x256xf32>
    %1677 = vector.broadcast %103 : f32 to vector<2x256xf32>
    %1678 = arith.mulf %1677, %1564 : vector<2x256xf32>
    %1679 = arith.addf %1676, %1678 : vector<2x256xf32>
    %1680 = vector.broadcast %104 : f32 to vector<2x256xf32>
    %1681 = arith.mulf %1680, %1576 : vector<2x256xf32>
    %1682 = arith.addf %1679, %1681 : vector<2x256xf32>
    %1683 = vector.broadcast %105 : f32 to vector<2x256xf32>
    %1684 = arith.mulf %1683, %1560 : vector<2x256xf32>
    %1685 = arith.addf %1682, %1684 : vector<2x256xf32>
    %1686 = vector.broadcast %106 : f32 to vector<2x256xf32>
    %1687 = arith.mulf %1686, %1572 : vector<2x256xf32>
    %1688 = arith.addf %1685, %1687 : vector<2x256xf32>
    %1689 = vector.broadcast %107 : f32 to vector<2x256xf32>
    %1690 = arith.mulf %1689, %1584 : vector<2x256xf32>
    %1691 = arith.addf %1688, %1690 : vector<2x256xf32>
    %1692 = vector.broadcast %108 : f32 to vector<2x256xf32>
    %1693 = arith.mulf %1692, %1553 : vector<2x256xf32>
    %1694 = vector.broadcast %109 : f32 to vector<2x256xf32>
    %1695 = arith.mulf %1694, %1565 : vector<2x256xf32>
    %1696 = arith.addf %1693, %1695 : vector<2x256xf32>
    %1697 = vector.broadcast %110 : f32 to vector<2x256xf32>
    %1698 = arith.mulf %1697, %1577 : vector<2x256xf32>
    %1699 = arith.addf %1696, %1698 : vector<2x256xf32>
    %1700 = vector.broadcast %111 : f32 to vector<2x256xf32>
    %1701 = arith.mulf %1700, %1549 : vector<2x256xf32>
    %1702 = arith.addf %1699, %1701 : vector<2x256xf32>
    %1703 = vector.broadcast %112 : f32 to vector<2x256xf32>
    %1704 = arith.mulf %1703, %1561 : vector<2x256xf32>
    %1705 = arith.addf %1702, %1704 : vector<2x256xf32>
    %1706 = vector.broadcast %113 : f32 to vector<2x256xf32>
    %1707 = arith.mulf %1706, %1573 : vector<2x256xf32>
    %1708 = arith.addf %1705, %1707 : vector<2x256xf32>
    %1709 = vector.broadcast %114 : f32 to vector<2x256xf32>
    %1710 = arith.mulf %1709, %1557 : vector<2x256xf32>
    %1711 = arith.addf %1708, %1710 : vector<2x256xf32>
    %1712 = vector.broadcast %115 : f32 to vector<2x256xf32>
    %1713 = arith.mulf %1712, %1569 : vector<2x256xf32>
    %1714 = arith.addf %1711, %1713 : vector<2x256xf32>
    %1715 = vector.broadcast %116 : f32 to vector<2x256xf32>
    %1716 = arith.mulf %1715, %1581 : vector<2x256xf32>
    %1717 = arith.addf %1714, %1716 : vector<2x256xf32>
    %1718 = vector.broadcast %117 : f32 to vector<2x256xf32>
    %1719 = arith.mulf %1718, %1554 : vector<2x256xf32>
    %1720 = arith.addf %1717, %1719 : vector<2x256xf32>
    %1721 = vector.broadcast %118 : f32 to vector<2x256xf32>
    %1722 = arith.mulf %1721, %1566 : vector<2x256xf32>
    %1723 = arith.addf %1720, %1722 : vector<2x256xf32>
    %1724 = vector.broadcast %119 : f32 to vector<2x256xf32>
    %1725 = arith.mulf %1724, %1578 : vector<2x256xf32>
    %1726 = arith.addf %1723, %1725 : vector<2x256xf32>
    %1727 = vector.broadcast %120 : f32 to vector<2x256xf32>
    %1728 = arith.mulf %1727, %1550 : vector<2x256xf32>
    %1729 = arith.addf %1726, %1728 : vector<2x256xf32>
    %1730 = vector.broadcast %121 : f32 to vector<2x256xf32>
    %1731 = arith.mulf %1730, %1562 : vector<2x256xf32>
    %1732 = arith.addf %1729, %1731 : vector<2x256xf32>
    %1733 = vector.broadcast %122 : f32 to vector<2x256xf32>
    %1734 = arith.mulf %1733, %1574 : vector<2x256xf32>
    %1735 = arith.addf %1732, %1734 : vector<2x256xf32>
    %1736 = vector.broadcast %123 : f32 to vector<2x256xf32>
    %1737 = arith.mulf %1736, %1558 : vector<2x256xf32>
    %1738 = arith.addf %1735, %1737 : vector<2x256xf32>
    %1739 = vector.broadcast %124 : f32 to vector<2x256xf32>
    %1740 = arith.mulf %1739, %1570 : vector<2x256xf32>
    %1741 = arith.addf %1738, %1740 : vector<2x256xf32>
    %1742 = vector.broadcast %125 : f32 to vector<2x256xf32>
    %1743 = arith.mulf %1742, %1582 : vector<2x256xf32>
    %1744 = arith.addf %1741, %1743 : vector<2x256xf32>
    %1745 = vector.broadcast %126 : f32 to vector<2x256xf32>
    %1746 = arith.mulf %1745, %1555 : vector<2x256xf32>
    %1747 = arith.addf %1744, %1746 : vector<2x256xf32>
    %1748 = vector.broadcast %127 : f32 to vector<2x256xf32>
    %1749 = arith.mulf %1748, %1567 : vector<2x256xf32>
    %1750 = arith.addf %1747, %1749 : vector<2x256xf32>
    %1751 = vector.broadcast %128 : f32 to vector<2x256xf32>
    %1752 = arith.mulf %1751, %1579 : vector<2x256xf32>
    %1753 = arith.addf %1750, %1752 : vector<2x256xf32>
    %1754 = vector.broadcast %129 : f32 to vector<2x256xf32>
    %1755 = arith.mulf %1754, %1551 : vector<2x256xf32>
    %1756 = arith.addf %1753, %1755 : vector<2x256xf32>
    %1757 = vector.broadcast %130 : f32 to vector<2x256xf32>
    %1758 = arith.mulf %1757, %1563 : vector<2x256xf32>
    %1759 = arith.addf %1756, %1758 : vector<2x256xf32>
    %1760 = vector.broadcast %131 : f32 to vector<2x256xf32>
    %1761 = arith.mulf %1760, %1575 : vector<2x256xf32>
    %1762 = arith.addf %1759, %1761 : vector<2x256xf32>
    %1763 = vector.broadcast %132 : f32 to vector<2x256xf32>
    %1764 = arith.mulf %1763, %1559 : vector<2x256xf32>
    %1765 = arith.addf %1762, %1764 : vector<2x256xf32>
    %1766 = vector.broadcast %133 : f32 to vector<2x256xf32>
    %1767 = arith.mulf %1766, %1571 : vector<2x256xf32>
    %1768 = arith.addf %1765, %1767 : vector<2x256xf32>
    %1769 = vector.broadcast %134 : f32 to vector<2x256xf32>
    %1770 = arith.mulf %1769, %1583 : vector<2x256xf32>
    %1771 = arith.addf %1768, %1770 : vector<2x256xf32>
    %1772 = vector.broadcast %135 : f32 to vector<2x256xf32>
    %1773 = arith.mulf %1772, %1556 : vector<2x256xf32>
    %1774 = arith.addf %1771, %1773 : vector<2x256xf32>
    %1775 = vector.broadcast %136 : f32 to vector<2x256xf32>
    %1776 = arith.mulf %1775, %1568 : vector<2x256xf32>
    %1777 = arith.addf %1774, %1776 : vector<2x256xf32>
    %1778 = vector.broadcast %137 : f32 to vector<2x256xf32>
    %1779 = arith.mulf %1778, %1580 : vector<2x256xf32>
    %1780 = arith.addf %1777, %1779 : vector<2x256xf32>
    %1781 = vector.broadcast %138 : f32 to vector<2x256xf32>
    %1782 = arith.mulf %1781, %1552 : vector<2x256xf32>
    %1783 = arith.addf %1780, %1782 : vector<2x256xf32>
    %1784 = vector.broadcast %139 : f32 to vector<2x256xf32>
    %1785 = arith.mulf %1784, %1564 : vector<2x256xf32>
    %1786 = arith.addf %1783, %1785 : vector<2x256xf32>
    %1787 = vector.broadcast %140 : f32 to vector<2x256xf32>
    %1788 = arith.mulf %1787, %1576 : vector<2x256xf32>
    %1789 = arith.addf %1786, %1788 : vector<2x256xf32>
    %1790 = vector.broadcast %141 : f32 to vector<2x256xf32>
    %1791 = arith.mulf %1790, %1560 : vector<2x256xf32>
    %1792 = arith.addf %1789, %1791 : vector<2x256xf32>
    %1793 = vector.broadcast %142 : f32 to vector<2x256xf32>
    %1794 = arith.mulf %1793, %1572 : vector<2x256xf32>
    %1795 = arith.addf %1792, %1794 : vector<2x256xf32>
    %1796 = vector.broadcast %143 : f32 to vector<2x256xf32>
    %1797 = arith.mulf %1796, %1584 : vector<2x256xf32>
    %1798 = arith.addf %1795, %1797 : vector<2x256xf32>
    %1799 = vector.broadcast %144 : f32 to vector<2x256xf32>
    %1800 = arith.addf %1691, %1799 : vector<2x256xf32>
    %1801 = vector.broadcast %145 : f32 to vector<2x256xf32>
    %1802 = arith.addf %1798, %1801 : vector<2x256xf32>
    %1803 = tpu.concatenate %1800, %1802 in 0 : vector<2x256xf32>, vector<2x256xf32> -> vector<4x256xf32>
    %1804 = vector.broadcast %147 : vector<4x1xf32> to vector<4x256xf32>
    %1805 = arith.mulf %1804, %1294 : vector<4x256xf32>
    %1806 = arith.addf %1803, %1805 : vector<4x256xf32>
    %1807 = arith.addf %1296, %1806 : vector<4x256xf32>
    %cst_80 = arith.constant 5.000000e-02 : f32
    %1808 = vector.broadcast %cst_80 : f32 to vector<4x256xf32>
    %1809 = arith.mulf %1808, %1807 : vector<4x256xf32>
    %1810 = arith.addf %1263, %1809 : vector<4x256xf32>
    %c2_81 = arith.constant 2 : index
    %c0_82 = arith.constant 0 : index
    %c0_83 = arith.constant 0 : index
    %1811 = vector.load %arg4[%c2_81, %c0_82, %c0_83] : memref<3x4x256xf32, #tpu.memory_space<vmem>>, vector<1x4x256xf32>
    %1812 = vector.shape_cast %1811 : vector<1x4x256xf32> to vector<4x256xf32>
    %1813 = vector.shape_cast %1810 : vector<4x256xf32> to vector<1x4x256xf32>
    tpu.vector_store %arg4[%c2_81, %c0_82, %c0_83], %1813 {strides = array<i32>} : memref<3x4x256xf32, #tpu.memory_space<vmem>>, vector<1x4x256xf32>,
    %1814 = arith.mulf %1806, %1806 : vector<4x256xf32>
    %1815 = arith.addf %1268, %1814 : vector<4x256xf32>
    %1816 = arith.mulf %1296, %1806 : vector<4x256xf32>
    %1817 = arith.addf %1270, %1816 : vector<4x256xf32>
    %1818 = vector.shape_cast %1815 : vector<4x256xf32> to vector<1x4x256xf32>
    %cst_84 = arith.constant dense<0.000000e+00> : vector<1xf32>
    %1819 = vector.multi_reduction <add>, %1818, %cst_84 [1, 2] : vector<1x4x256xf32> to vector<1xf32>
    %1820 = vector.shape_cast %1819 : vector<1xf32> to vector<1x1x1xf32>
    %1821 = vector.extract %1820[0, 0, 0] : f32 from vector<1x1x1xf32>
    %1822 = vector.broadcast %1821 : f32 to vector<1x1xf32>
    %c0_85 = arith.constant 0 : index
    %c0_86 = arith.constant 0 : index
    %1823 = vector.load %arg5[%c0_85, %c0_86] : memref<1x1xf32, #tpu.memory_space<vmem>>, vector<1x1xf32>
    tpu.vector_store %arg5[%c0_85, %c0_86], %1822 {strides = array<i32>} : memref<1x1xf32, #tpu.memory_space<vmem>>, vector<1x1xf32>,
    %1824 = vector.shape_cast %1817 : vector<4x256xf32> to vector<1x4x256xf32>
    %cst_87 = arith.constant dense<0.000000e+00> : vector<1xf32>
    %1825 = vector.multi_reduction <add>, %1824, %cst_87 [1, 2] : vector<1x4x256xf32> to vector<1xf32>
    %1826 = vector.shape_cast %1825 : vector<1xf32> to vector<1x1x1xf32>
    %1827 = vector.extract %1826[0, 0, 0] : f32 from vector<1x1x1xf32>
    %1828 = vector.broadcast %1827 : f32 to vector<1x1xf32>
    %c0_88 = arith.constant 0 : index
    %c0_89 = arith.constant 0 : index
    %1829 = vector.load %arg6[%c0_88, %c0_89] : memref<1x1xf32, #tpu.memory_space<vmem>>, vector<1x1xf32>
    tpu.vector_store %arg6[%c0_88, %c0_89], %1828 {strides = array<i32>} : memref<1x1xf32, #tpu.memory_space<vmem>>, vector<1x1xf32>,
    return
  }
}

</mosaic_0001>

<llo_original>
// kernel: _lambda_.1
$region0: #{_lambda_.1}
  #allocation0 [shape = 'u32[]', space=smem, size = 0x4, offset = 0x4, fixed_abs, tag = 'smem constant byte address 0x4 - core index']
  #allocation1 [shape = 'u32[72,128]{1,0:T(1,128)}', space=vmem, size = 0x9000, scoped, tag = 'internal scratch']
  %s0 = inlined_call_operand.vmem [shape: f32[146], index: 0, kind: input, shape index: {}]
  %s1 = inlined_call_operand.vmem [shape: f32[4,1], index: 1, kind: input, shape index: {}]
  %s2 = inlined_call_operand.vmem [shape: f32[4,1], index: 2, kind: input, shape index: {}]
  %s3 = inlined_call_operand.vmem [shape: f32[4,256], index: 3, kind: input, shape index: {}]
  %s4 = inlined_call_operand.vmem [shape: f32[3,4,256], index: 4, kind: output, shape index: {0}]
  %s5 = inlined_call_operand.hbm [shape: f32[1,1], index: 5, kind: output, shape index: {1}]
  %s6 = inlined_call_operand.hbm [shape: f32[1,1], index: 6, kind: output, shape index: {2}]
  %7 = xla_tuple %s4, %s5, %s6
  %s8 = sld [smem:[#allocation0]]
  $region46: #{_lambda_.1} parent=0
    _
  %s10 = ssub.s32 1, %s8
  %s11 = scalar_select 0, %s10, %s8
  $region1: #{_lambda_.1} parent=0
    #allocation2 [shape = 'u8[1024]{0}', space=smem, size = 0x400, scoped, tag = 'input window, operand 0, single buffered']
    #allocation3 [shape = 's32[1]{0}', space=sflag, size = 0x4, scoped, tag = 'scoped memory for _lambda_.1']
    #allocation4 [shape = 's32[1]{0}', space=sflag, size = 0x4, scoped, tag = 'scoped memory for _lambda_.1']
    #allocation5 [shape = 'u8[512]{0}', space=vmem, size = 0x400, scoped, tag = 'output window, operand 1, single buffered']
    #allocation6 [shape = 'u8[512]{0}', space=vmem, size = 0x400, scoped, tag = 'output window, operand 2, single buffered']
    #allocation7 [shape = 's32[1]{0}', space=sflag, size = 0x4, scoped, tag = 'scoped memory for _lambda_.1']
    %12 = vsyncpa [#allocation4], 0
    %13 = vsyncpa [#allocation3], 0
    %14 = vsyncpa [#allocation7], 0
    // Predicated region
    $region2: #{_lambda_.1} parent=1 // pred_check
      _
    $region3: #{_lambda_.1} parent=1 // pred_check_branch
      %16 = sbr.rel (0) target = $region5
    $region4: #{_lambda_.1} parent=1 // pred_region
      %18 = vsyncadd [#allocation4], 0
      %s20 = sshll.u32 %s0, 4
      %s21 = int_to_ptr.vmem [resolvable:$true] %s20
      %23 = dma.vmem_to_smem %s21, 32, [#allocation2], [#allocation4]
    $region5: #{_lambda_.1} parent=1 // pred_fallthru
      _
    // Predicated region
    $region6: #{_lambda_.1} parent=1 // pred_check
      _
    $region7: #{_lambda_.1} parent=1 // pred_check_branch
      %25 = sbr.rel (0) target = $region9
    $region8: #{_lambda_.1} parent=1 // pred_region
      _
    $region9: #{_lambda_.1} parent=1 // pred_fallthru
      _
    // Predicated region
    $region10: #{_lambda_.1} parent=1 // pred_check
      _
    $region11: #{_lambda_.1} parent=1 // pred_check_branch
      %27 = sbr.rel (0) target = $region13
    $region12: #{_lambda_.1} parent=1 // pred_region
      _
    $region13: #{_lambda_.1} parent=1 // pred_fallthru
      _
    // Predicated region
    $region14: #{_lambda_.1} parent=1 // pred_check
      _
    $region15: #{_lambda_.1} parent=1 // pred_check_branch
      %29 = sbr.rel (0) target = $region17
    $region16: #{_lambda_.1} parent=1 // pred_region
      _
    $region17: #{_lambda_.1} parent=1 // pred_fallthru
      _
    // Predicated region
    $region18: #{_lambda_.1} parent=1 // pred_check
      _
    $region19: #{_lambda_.1} parent=1 // pred_check_branch
      %31 = sbr.rel (0) target = $region21
    $region20: #{_lambda_.1} parent=1 // pred_region
      %33 = dma.done [#allocation4], 32
    $region21: #{_lambda_.1} parent=1 // pred_fallthru
      _
    %34 = sfence
    %s35 = sld [smem:[#allocation2]]
    %s36 = sld [smem:[#allocation2 + $0x1]]
    %s37 = sld [smem:[#allocation2 + $0x2]]
    %s38 = sld [smem:[#allocation2 + $0x3]]
    %s39 = sld [smem:[#allocation2 + $0x4]]
    %s40 = sld [smem:[#allocation2 + $0x5]]
    %s41 = sld [smem:[#allocation2 + $0x6]]
    %s42 = sld [smem:[#allocation2 + $0x7]]
    %s43 = sld [smem:[#allocation2 + $0x8]]
    %s44 = sld [smem:[#allocation2 + $0x9]]
    %s45 = sld [smem:[#allocation2 + $0xa]]
    %s46 = sld [smem:[#allocation2 + $0xb]]
    %s47 = sld [smem:[#allocation2 + $0xc]]
    %s48 = sld [smem:[#allocation2 + $0xd]]
    %s49 = sld [smem:[#allocation2 + $0xe]]
    %s50 = sld [smem:[#allocation2 + $0xf]]
    %s51 = sld [smem:[#allocation2 + $0x10]]
    %s52 = sld [smem:[#allocation2 + $0x11]]
    %s53 = sld [smem:[#allocation2 + $0x12]]
    %s54 = sld [smem:[#allocation2 + $0x13]]
    %s55 = sld [smem:[#allocation2 + $0x14]]
    %s56 = sld [smem:[#allocation2 + $0x15]]
    %s57 = sld [smem:[#allocation2 + $0x16]]
    %s58 = sld [smem:[#allocation2 + $0x17]]
    %s59 = sld [smem:[#allocation2 + $0x18]]
    %s60 = sld [smem:[#allocation2 + $0x19]]
    %s61 = sld [smem:[#allocation2 + $0x1a]]
    %s62 = sld [smem:[#allocation2 + $0x1b]]
    %s63 = sld [smem:[#allocation2 + $0x1c]]
    %s64 = sld [smem:[#allocation2 + $0x1d]]
    %s65 = sld [smem:[#allocation2 + $0x1e]]
    %s66 = sld [smem:[#allocation2 + $0x1f]]
    %s67 = sld [smem:[#allocation2 + $0x20]]
    %s68 = sld [smem:[#allocation2 + $0x21]]
    %s69 = sld [smem:[#allocation2 + $0x22]]
    %s70 = sld [smem:[#allocation2 + $0x23]]
    %s71 = sld [smem:[#allocation2 + $0x24]]
    %s72 = sld [smem:[#allocation2 + $0x25]]
    %s73 = sld [smem:[#allocation2 + $0x26]]
    %s74 = sld [smem:[#allocation2 + $0x27]]
    %s75 = sld [smem:[#allocation2 + $0x28]]
    %s76 = sld [smem:[#allocation2 + $0x29]]
    %s77 = sld [smem:[#allocation2 + $0x2a]]
    %s78 = sld [smem:[#allocation2 + $0x2b]]
    %s79 = sld [smem:[#allocation2 + $0x2c]]
    %s80 = sld [smem:[#allocation2 + $0x2d]]
    %s81 = sld [smem:[#allocation2 + $0x2e]]
    %s82 = sld [smem:[#allocation2 + $0x2f]]
    %s83 = sld [smem:[#allocation2 + $0x30]]
    %s84 = sld [smem:[#allocation2 + $0x31]]
    %s85 = sld [smem:[#allocation2 + $0x32]]
    %s86 = sld [smem:[#allocation2 + $0x33]]
    %s87 = sld [smem:[#allocation2 + $0x34]]
    %s88 = sld [smem:[#allocation2 + $0x35]]
    %s89 = sld [smem:[#allocation2 + $0x36]]
    %s90 = sld [smem:[#allocation2 + $0x37]]
    %s91 = sld [smem:[#allocation2 + $0x38]]
    %s92 = sld [smem:[#allocation2 + $0x39]]
    %s93 = sld [smem:[#allocation2 + $0x3a]]
    %s94 = sld [smem:[#allocation2 + $0x3b]]
    %s95 = sld [smem:[#allocation2 + $0x3c]]
    %s96 = sld [smem:[#allocation2 + $0x3d]]
    %s97 = sld [smem:[#allocation2 + $0x3e]]
    %s98 = sld [smem:[#allocation2 + $0x3f]]
    %s99 = sld [smem:[#allocation2 + $0x40]]
    %s100 = sld [smem:[#allocation2 + $0x41]]
    %s101 = sld [smem:[#allocation2 + $0x42]]
    %s102 = sld [smem:[#allocation2 + $0x43]]
    %s103 = sld [smem:[#allocation2 + $0x44]]
    %s104 = sld [smem:[#allocation2 + $0x45]]
    %s105 = sld [smem:[#allocation2 + $0x46]]
    %s106 = sld [smem:[#allocation2 + $0x47]]
    %s107 = sld [smem:[#allocation2 + $0x48]]
    %s108 = sld [smem:[#allocation2 + $0x49]]
    %s109 = sld [smem:[#allocation2 + $0x4a]]
    %s110 = sld [smem:[#allocation2 + $0x4b]]
    %s111 = sld [smem:[#allocation2 + $0x4c]]
    %s112 = sld [smem:[#allocation2 + $0x4d]]
    %s113 = sld [smem:[#allocation2 + $0x4e]]
    %s114 = sld [smem:[#allocation2 + $0x4f]]
    %s115 = sld [smem:[#allocation2 + $0x50]]
    %s116 = sld [smem:[#allocation2 + $0x51]]
    %s117 = sld [smem:[#allocation2 + $0x52]]
    %s118 = sld [smem:[#allocation2 + $0x53]]
    %s119 = sld [smem:[#allocation2 + $0x54]]
    %s120 = sld [smem:[#allocation2 + $0x55]]
    %s121 = sld [smem:[#allocation2 + $0x56]]
    %s122 = sld [smem:[#allocation2 + $0x57]]
    %s123 = sld [smem:[#allocation2 + $0x58]]
    %s124 = sld [smem:[#allocation2 + $0x59]]
    %s125 = sld [smem:[#allocation2 + $0x5a]]
    %s126 = sld [smem:[#allocation2 + $0x5b]]
    %s127 = sld [smem:[#allocation2 + $0x5c]]
    %s128 = sld [smem:[#allocation2 + $0x5d]]
    %s129 = sld [smem:[#allocation2 + $0x5e]]
    %s130 = sld [smem:[#allocation2 + $0x5f]]
    %s131 = sld [smem:[#allocation2 + $0x60]]
    %s132 = sld [smem:[#allocation2 + $0x61]]
    %s133 = sld [smem:[#allocation2 + $0x62]]
    %s134 = sld [smem:[#allocation2 + $0x63]]
    %s135 = sld [smem:[#allocation2 + $0x64]]
    %s136 = sld [smem:[#allocation2 + $0x65]]
    %s137 = sld [smem:[#allocation2 + $0x66]]
    %s138 = sld [smem:[#allocation2 + $0x67]]
    %s139 = sld [smem:[#allocation2 + $0x68]]
    %s140 = sld [smem:[#allocation2 + $0x69]]
    %s141 = sld [smem:[#allocation2 + $0x6a]]
    %s142 = sld [smem:[#allocation2 + $0x6b]]
    %s143 = sld [smem:[#allocation2 + $0x6c]]
    %s144 = sld [smem:[#allocation2 + $0x6d]]
    %s145 = sld [smem:[#allocation2 + $0x6e]]
    %s146 = sld [smem:[#allocation2 + $0x6f]]
    %s147 = sld [smem:[#allocation2 + $0x70]]
    %s148 = sld [smem:[#allocation2 + $0x71]]
    %s149 = sld [smem:[#allocation2 + $0x72]]
    %s150 = sld [smem:[#allocation2 + $0x73]]
    %s151 = sld [smem:[#allocation2 + $0x74]]
    %s152 = sld [smem:[#allocation2 + $0x75]]
    %s153 = sld [smem:[#allocation2 + $0x76]]
    %s154 = sld [smem:[#allocation2 + $0x77]]
    %s155 = sld [smem:[#allocation2 + $0x78]]
    %s156 = sld [smem:[#allocation2 + $0x79]]
    %s157 = sld [smem:[#allocation2 + $0x7a]]
    %s158 = sld [smem:[#allocation2 + $0x7b]]
    %s159 = sld [smem:[#allocation2 + $0x7c]]
    %s160 = sld [smem:[#allocation2 + $0x7d]]
    %s161 = sld [smem:[#allocation2 + $0x7e]]
    %s162 = sld [smem:[#allocation2 + $0x7f]]
    %s163 = sld [smem:[#allocation2 + $0x80]]
    %s164 = sld [smem:[#allocation2 + $0x81]]
    %s165 = sld [smem:[#allocation2 + $0x82]]
    %s166 = sld [smem:[#allocation2 + $0x83]]
    %s167 = sld [smem:[#allocation2 + $0x84]]
    %s168 = sld [smem:[#allocation2 + $0x85]]
    %s169 = sld [smem:[#allocation2 + $0x86]]
    %s170 = sld [smem:[#allocation2 + $0x87]]
    %s171 = sld [smem:[#allocation2 + $0x88]]
    %s172 = sld [smem:[#allocation2 + $0x89]]
    %s173 = sld [smem:[#allocation2 + $0x8a]]
    %s174 = sld [smem:[#allocation2 + $0x8b]]
    %s175 = sld [smem:[#allocation2 + $0x8c]]
    %s176 = sld [smem:[#allocation2 + $0x8d]]
    %s177 = sld [smem:[#allocation2 + $0x8e]]
    %s178 = sld [smem:[#allocation2 + $0x8f]]
    %s179 = sld [smem:[#allocation2 + $0x90]]
    %s180 = sld [smem:[#allocation2 + $0x91]]
    %v181 = vld [vmem:[%s1] sm:$0xf]
    %v182 = vld [vmem:[%s2] sm:$0xf]
    %v183 = vld [vmem:[%s3] sm:$0xff]
    %v184 = vlaneseq
    %v185 = vand.u32 %v184, 127
    %v186 = vadd.s32 %v185, 128
    %v187 = vand.u32 %v185, 15
    %v188 = vand.u32 %v186, 15
    %v189 = vshra.s32 %v185, 4
    %v190 = vshra.s32 %v186, 4
    %vm191 = vcmp.eq.s32.totalorder %v187, 0
    %vm192 = vcmp.eq.s32.totalorder %v188, 0
    %vm193 = vcmp.eq.s32.totalorder %v187, 15
    %vm194 = vcmp.eq.s32.totalorder %v188, 15
    %vm195 = vcmp.eq.s32.totalorder %v189, 0
    %vm196 = vcmp.eq.s32.totalorder %v190, 0
    %vm197 = vcmp.eq.s32.totalorder %v189, 15
    %vm198 = vcmp.eq.s32.totalorder %v190, 15
    %200 = vst [vmem:[#allocation1] ss:$2 sm:$0xff] %v183
    %v201 = vld.sshfl [vmem:[#allocation1] sm:$0xff pattern:$0x75316420]
    %v202 = vld.sshfl [vmem:[#allocation1 + $0x8] sm:$0xff pattern:$0x75316420]
    %205 = vrot.lane.b32.xlu0 %v201, 1
    %v206 = vpop.permute.xlu0 %205
    %207 = vrot.lane.b32.xlu0 %v202, 1
    %v208 = vpop.permute.xlu0 %207
    %vm209 = vcmp.lt.s32.totalorder %v185, 1
    %v210 = vsel %vm209, %v206, %v208
    %v211 = vsel %vm209, %v208, %v206
    %212 = vst [vmem:[#allocation1] ss:$2 sm:$0xff] %v183
    %v213 = vld.sshfl [vmem:[#allocation1] sm:$0xff pattern:$0x75316420]
    %v214 = vld.sshfl [vmem:[#allocation1 + $0x8] sm:$0xff pattern:$0x75316420]
    %v217 = vsel %vm191, %v213, %v211
    %v218 = vsel %vm192, %v214, %v210
    %219 = vst [vmem:[#allocation1] ss:$2 sm:$0xff] %v183
    %v220 = vld.sshfl [vmem:[#allocation1] sm:$0xff pattern:$0x75316420]
    %v221 = vld.sshfl [vmem:[#allocation1 + $0x8] sm:$0xff pattern:$0x75316420]
    %224 = vrot.lane.b32.xlu0 %v220, 127
    %v225 = vpop.permute.xlu0 %224
    %226 = vrot.lane.b32.xlu0 %v221, 127
    %v227 = vpop.permute.xlu0 %226
    %vm228 = vcmp.lt.s32.totalorder %v185, 127
    %v229 = vsel %vm228, %v225, %v227
    %v230 = vsel %vm228, %v227, %v225
    %231 = vst [vmem:[#allocation1] ss:$2 sm:$0xff] %v183
    %v232 = vld.sshfl [vmem:[#allocation1] sm:$0xff pattern:$0x75316420]
    %v233 = vld.sshfl [vmem:[#allocation1 + $0x8] sm:$0xff pattern:$0x75316420]
    %v236 = vsel %vm193, %v232, %v229
    %v237 = vsel %vm194, %v233, %v230
    %238 = vrot.lane.b32.xlu0 %v217, 16
    %v239 = vpop.permute.xlu0 %238
    %240 = vrot.lane.b32.xlu0 %v218, 16
    %v241 = vpop.permute.xlu0 %240
    %vm242 = vcmp.lt.s32.totalorder %v185, 16
    %v243 = vsel %vm242, %v239, %v241
    %v244 = vsel %vm242, %v241, %v239
    %v245 = vsel %vm195, %v217, %v244
    %v246 = vsel %vm196, %v218, %v243
    %247 = vrot.lane.b32.xlu0 %v217, 112
    %v248 = vpop.permute.xlu0 %247
    %249 = vrot.lane.b32.xlu0 %v218, 112
    %v250 = vpop.permute.xlu0 %249
    %vm251 = vcmp.lt.s32.totalorder %v185, 112
    %v252 = vsel %vm251, %v248, %v250
    %v253 = vsel %vm251, %v250, %v248
    %v254 = vsel %vm197, %v217, %v252
    %v255 = vsel %vm198, %v218, %v253
    %256 = vst [vmem:[#allocation1] ss:$2 sm:$0xff] %v183
    %v257 = vld.sshfl [vmem:[#allocation1] sm:$0xff pattern:$0x75316420]
    %v258 = vld.sshfl [vmem:[#allocation1 + $0x8] sm:$0xff pattern:$0x75316420]
    %261 = vrot.lane.b32.xlu0 %v257, 16
    %v262 = vpop.permute.xlu0 %261
    %263 = vrot.lane.b32.xlu0 %v258, 16
    %v264 = vpop.permute.xlu0 %263
    %v265 = vsel %vm242, %v262, %v264
    %v266 = vsel %vm242, %v264, %v262
    %267 = vst [vmem:[#allocation1] ss:$2 sm:$0xff] %v183
    %v268 = vld.sshfl [vmem:[#allocation1] sm:$0xff pattern:$0x75316420]
    %v269 = vld.sshfl [vmem:[#allocation1 + $0x8] sm:$0xff pattern:$0x75316420]
    %v272 = vsel %vm195, %v268, %v266
    %v273 = vsel %vm196, %v269, %v265
    %274 = vst [vmem:[#allocation1] ss:$2 sm:$0xff] %v183
    %v275 = vld.sshfl [vmem:[#allocation1] sm:$0xff pattern:$0x75316420]
    %v276 = vld.sshfl [vmem:[#allocation1 + $0x8] sm:$0xff pattern:$0x75316420]
    %279 = vrot.lane.b32.xlu0 %v275, 112
    %v280 = vpop.permute.xlu0 %279
    %281 = vrot.lane.b32.xlu0 %v276, 112
    %v282 = vpop.permute.xlu0 %281
    %v283 = vsel %vm251, %v280, %v282
    %v284 = vsel %vm251, %v282, %v280
    %285 = vst [vmem:[#allocation1] ss:$2 sm:$0xff] %v183
    %v286 = vld.sshfl [vmem:[#allocation1] sm:$0xff pattern:$0x75316420]
    %v287 = vld.sshfl [vmem:[#allocation1 + $0x8] sm:$0xff pattern:$0x75316420]
    %v290 = vsel %vm197, %v286, %v283
    %v291 = vsel %vm198, %v287, %v284
    %292 = vrot.lane.b32.xlu0 %v236, 16
    %v293 = vpop.permute.xlu0 %292
    %294 = vrot.lane.b32.xlu0 %v237, 16
    %v295 = vpop.permute.xlu0 %294
    %v296 = vsel %vm242, %v293, %v295
    %v297 = vsel %vm242, %v295, %v293
    %v298 = vsel %vm195, %v236, %v297
    %v299 = vsel %vm196, %v237, %v296
    %300 = vrot.lane.b32.xlu0 %v236, 112
    %v301 = vpop.permute.xlu0 %300
    %302 = vrot.lane.b32.xlu0 %v237, 112
    %v303 = vpop.permute.xlu0 %302
    %v304 = vsel %vm251, %v301, %v303
    %v305 = vsel %vm251, %v303, %v301
    %v306 = vsel %vm197, %v236, %v304
    %v307 = vsel %vm198, %v237, %v305
    %v308 = vadd.f32 %v272, %v290
    %v309 = vadd.f32 %v273, %v291
    %v310 = vadd.f32 %v308, %v217
    %v311 = vadd.f32 %v309, %v218
    %v312 = vadd.f32 %v310, %v236
    %v313 = vadd.f32 %v311, %v237
    %v314 = vmul.f32 %v183, 4.0
    %316 = vst [vmem:[#allocation1] ss:$2 sm:$0xff] %v314
    %v317 = vld.sshfl [vmem:[#allocation1] sm:$0xff pattern:$0x75316420]
    %v318 = vld.sshfl [vmem:[#allocation1 + $0x8] sm:$0xff pattern:$0x75316420]
    %v321 = vsub.f32 %v312, %v317
    %v322 = vsub.f32 %v313, %v318
    %324 = vset.pattern.permute.xlu0 0
    %325 = vperm.xlu0 %324, %v181
    %v326 = vpop.permute.xlu0 %325
    %v328 = vmul.f32 %v326, %v321
    %v329 = vmul.f32 %v326, %v322
    %v330 = vstv %s35
    %v331 = vmul.f32 %v330, %v245
    %v332 = vmul.f32 %v330, %v246
    %v333 = vstv %s36
    %v334 = vmul.f32 %v333, %v272
    %v335 = vmul.f32 %v333, %v273
    %v336 = vadd.f32 %v331, %v334
    %v337 = vadd.f32 %v332, %v335
    %v338 = vstv %s37
    %v339 = vmul.f32 %v338, %v298
    %v340 = vmul.f32 %v338, %v299
    %v341 = vadd.f32 %v336, %v339
    %v342 = vadd.f32 %v337, %v340
    %v343 = vstv %s38
    %v344 = vmul.f32 %v343, %v217
    %v345 = vmul.f32 %v343, %v218
    %v346 = vadd.f32 %v341, %v344
    %v347 = vadd.f32 %v342, %v345
    %v348 = vstv %s39
    %v349 = vmul.f32 %v348, %v183
    %351 = vst [vmem:[#allocation1] ss:$2 sm:$0xff] %v349
    %v352 = vld.sshfl [vmem:[#allocation1] sm:$0xff pattern:$0x75316420]
    %v353 = vld.sshfl [vmem:[#allocation1 + $0x8] sm:$0xff pattern:$0x75316420]
    %v356 = vadd.f32 %v346, %v352
    %v357 = vadd.f32 %v347, %v353
    %v358 = vstv %s40
    %v359 = vmul.f32 %v358, %v236
    %v360 = vmul.f32 %v358, %v237
    %v361 = vadd.f32 %v356, %v359
    %v362 = vadd.f32 %v357, %v360
    %v363 = vstv %s41
    %v364 = vmul.f32 %v363, %v254
    %v365 = vmul.f32 %v363, %v255
    %v366 = vadd.f32 %v361, %v364
    %v367 = vadd.f32 %v362, %v365
    %v368 = vstv %s42
    %v369 = vmul.f32 %v368, %v290
    %v370 = vmul.f32 %v368, %v291
    %v371 = vadd.f32 %v366, %v369
    %v372 = vadd.f32 %v367, %v370
    %v373 = vstv %s43
    %v374 = vmul.f32 %v373, %v306
    %v375 = vmul.f32 %v373, %v307
    %v376 = vadd.f32 %v371, %v374
    %v377 = vadd.f32 %v372, %v375
    %v378 = vstv %s44
    %v379 = vmul.f32 %v378, %v245
    %v380 = vmul.f32 %v378, %v246
    %v383 = vrot.slane %v379, 2
    %v384 = vrot.slane %v380, 2
    %v387 = vadd.f32 %v376, %v383
    %v388 = vadd.f32 %v377, %v384
    %v389 = vstv %s45
    %v390 = vmul.f32 %v389, %v272
    %v391 = vmul.f32 %v389, %v273
    %v394 = vrot.slane %v390, 2
    %v395 = vrot.slane %v391, 2
    %v398 = vadd.f32 %v387, %v394
    %v399 = vadd.f32 %v388, %v395
    %v400 = vstv %s46
    %v401 = vmul.f32 %v400, %v298
    %v402 = vmul.f32 %v400, %v299
    %v405 = vrot.slane %v401, 2
    %v406 = vrot.slane %v402, 2
    %v409 = vadd.f32 %v398, %v405
    %v410 = vadd.f32 %v399, %v406
    %v411 = vstv %s47
    %v412 = vmul.f32 %v411, %v217
    %v413 = vmul.f32 %v411, %v218
    %v416 = vrot.slane %v412, 2
    %v417 = vrot.slane %v413, 2
    %v420 = vadd.f32 %v409, %v416
    %v421 = vadd.f32 %v410, %v417
    %v422 = vstv %s48
    %v423 = vmul.f32 %v422, %v183
    %425 = vst [vmem:[#allocation1] ss:$2 sm:$0xff] %v423
    %v426 = vld.sshfl [vmem:[#allocation1] sm:$0xff pattern:$0x75316420]
    %v427 = vld.sshfl [vmem:[#allocation1 + $0x8] sm:$0xff pattern:$0x75316420]
    %v428 = vrot.slane %v426, 2
    %v429 = vrot.slane %v427, 2
    %v432 = vadd.f32 %v420, %v428
    %v433 = vadd.f32 %v421, %v429
    %v434 = vstv %s49
    %v435 = vmul.f32 %v434, %v236
    %v436 = vmul.f32 %v434, %v237
    %v439 = vrot.slane %v435, 2
    %v440 = vrot.slane %v436, 2
    %v443 = vadd.f32 %v432, %v439
    %v444 = vadd.f32 %v433, %v440
    %v445 = vstv %s50
    %v446 = vmul.f32 %v445, %v254
    %v447 = vmul.f32 %v445, %v255
    %v450 = vrot.slane %v446, 2
    %v451 = vrot.slane %v447, 2
    %v454 = vadd.f32 %v443, %v450
    %v455 = vadd.f32 %v444, %v451
    %v456 = vstv %s51
    %v457 = vmul.f32 %v456, %v290
    %v458 = vmul.f32 %v456, %v291
    %v461 = vrot.slane %v457, 2
    %v462 = vrot.slane %v458, 2
    %v465 = vadd.f32 %v454, %v461
    %v466 = vadd.f32 %v455, %v462
    %v467 = vstv %s52
    %v468 = vmul.f32 %v467, %v306
    %v469 = vmul.f32 %v467, %v307
    %v472 = vrot.slane %v468, 2
    %v473 = vrot.slane %v469, 2
    %v476 = vadd.f32 %v465, %v472
    %v477 = vadd.f32 %v466, %v473
    %v478 = vstv %s53
    %v479 = vmul.f32 %v478, %v245
    %v480 = vmul.f32 %v478, %v246
    %v481 = vstv %s54
    %v482 = vmul.f32 %v481, %v272
    %v483 = vmul.f32 %v481, %v273
    %v484 = vadd.f32 %v479, %v482
    %v485 = vadd.f32 %v480, %v483
    %v486 = vstv %s55
    %v487 = vmul.f32 %v486, %v298
    %v488 = vmul.f32 %v486, %v299
    %v489 = vadd.f32 %v484, %v487
    %v490 = vadd.f32 %v485, %v488
    %v491 = vstv %s56
    %v492 = vmul.f32 %v491, %v217
    %v493 = vmul.f32 %v491, %v218
    %v494 = vadd.f32 %v489, %v492
    %v495 = vadd.f32 %v490, %v493
    %v496 = vstv %s57
    %v497 = vmul.f32 %v496, %v183
    %499 = vst [vmem:[#allocation1] ss:$2 sm:$0xff] %v497
    %v500 = vld.sshfl [vmem:[#allocation1] sm:$0xff pattern:$0x75316420]
    %v501 = vld.sshfl [vmem:[#allocation1 + $0x8] sm:$0xff pattern:$0x75316420]
    %v504 = vadd.f32 %v494, %v500
    %v505 = vadd.f32 %v495, %v501
    %v506 = vstv %s58
    %v507 = vmul.f32 %v506, %v236
    %v508 = vmul.f32 %v506, %v237
    %v509 = vadd.f32 %v504, %v507
    %v510 = vadd.f32 %v505, %v508
    %v511 = vstv %s59
    %v512 = vmul.f32 %v511, %v254
    %v513 = vmul.f32 %v511, %v255
    %v514 = vadd.f32 %v509, %v512
    %v515 = vadd.f32 %v510, %v513
    %v516 = vstv %s60
    %v517 = vmul.f32 %v516, %v290
    %v518 = vmul.f32 %v516, %v291
    %v519 = vadd.f32 %v514, %v517
    %v520 = vadd.f32 %v515, %v518
    %v521 = vstv %s61
    %v522 = vmul.f32 %v521, %v306
    %v523 = vmul.f32 %v521, %v307
    %v524 = vadd.f32 %v519, %v522
    %v525 = vadd.f32 %v520, %v523
    %v526 = vstv %s62
    %v527 = vmul.f32 %v526, %v245
    %v528 = vmul.f32 %v526, %v246
    %v531 = vrot.slane %v527, 2
    %v532 = vrot.slane %v528, 2
    %v535 = vadd.f32 %v524, %v531
    %v536 = vadd.f32 %v525, %v532
    %v537 = vstv %s63
    %v538 = vmul.f32 %v537, %v272
    %v539 = vmul.f32 %v537, %v273
    %v542 = vrot.slane %v538, 2
    %v543 = vrot.slane %v539, 2
    %v546 = vadd.f32 %v535, %v542
    %v547 = vadd.f32 %v536, %v543
    %v548 = vstv %s64
    %v549 = vmul.f32 %v548, %v298
    %v550 = vmul.f32 %v548, %v299
    %v553 = vrot.slane %v549, 2
    %v554 = vrot.slane %v550, 2
    %v557 = vadd.f32 %v546, %v553
    %v558 = vadd.f32 %v547, %v554
    %v559 = vstv %s65
    %v560 = vmul.f32 %v559, %v217
    %v561 = vmul.f32 %v559, %v218
    %v564 = vrot.slane %v560, 2
    %v565 = vrot.slane %v561, 2
    %v568 = vadd.f32 %v557, %v564
    %v569 = vadd.f32 %v558, %v565
    %v570 = vstv %s66
    %v571 = vmul.f32 %v570, %v183
    %573 = vst [vmem:[#allocation1] ss:$2 sm:$0xff] %v571
    %v574 = vld.sshfl [vmem:[#allocation1] sm:$0xff pattern:$0x75316420]
    %v575 = vld.sshfl [vmem:[#allocation1 + $0x8] sm:$0xff pattern:$0x75316420]
    %v576 = vrot.slane %v574, 2
    %v577 = vrot.slane %v575, 2
    %v580 = vadd.f32 %v568, %v576
    %v581 = vadd.f32 %v569, %v577
    %v582 = vstv %s67
    %v583 = vmul.f32 %v582, %v236
    %v584 = vmul.f32 %v582, %v237
    %v587 = vrot.slane %v583, 2
    %v588 = vrot.slane %v584, 2
    %v591 = vadd.f32 %v580, %v587
    %v592 = vadd.f32 %v581, %v588
    %v593 = vstv %s68
    %v594 = vmul.f32 %v593, %v254
    %v595 = vmul.f32 %v593, %v255
    %v598 = vrot.slane %v594, 2
    %v599 = vrot.slane %v595, 2
    %v602 = vadd.f32 %v591, %v598
    %v603 = vadd.f32 %v592, %v599
    %v604 = vstv %s69
    %v605 = vmul.f32 %v604, %v290
    %v606 = vmul.f32 %v604, %v291
    %v609 = vrot.slane %v605, 2
    %v610 = vrot.slane %v606, 2
    %v613 = vadd.f32 %v602, %v609
    %v614 = vadd.f32 %v603, %v610
    %v615 = vstv %s70
    %v616 = vmul.f32 %v615, %v306
    %v617 = vmul.f32 %v615, %v307
    %v620 = vrot.slane %v616, 2
    %v621 = vrot.slane %v617, 2
    %v624 = vadd.f32 %v613, %v620
    %v625 = vadd.f32 %v614, %v621
    %v626 = vstv %s71
    %v627 = vmul.f32 %v626, %v245
    %v628 = vmul.f32 %v626, %v246
    %v629 = vstv %s72
    %v630 = vmul.f32 %v629, %v272
    %v631 = vmul.f32 %v629, %v273
    %v632 = vadd.f32 %v627, %v630
    %v633 = vadd.f32 %v628, %v631
    %v634 = vstv %s73
    %v635 = vmul.f32 %v634, %v298
    %v636 = vmul.f32 %v634, %v299
    %v637 = vadd.f32 %v632, %v635
    %v638 = vadd.f32 %v633, %v636
    %v639 = vstv %s74
    %v640 = vmul.f32 %v639, %v217
    %v641 = vmul.f32 %v639, %v218
    %v642 = vadd.f32 %v637, %v640
    %v643 = vadd.f32 %v638, %v641
    %v644 = vstv %s75
    %v645 = vmul.f32 %v644, %v183
    %647 = vst [vmem:[#allocation1] ss:$2 sm:$0xff] %v645
    %v648 = vld.sshfl [vmem:[#allocation1] sm:$0xff pattern:$0x75316420]
    %v649 = vld.sshfl [vmem:[#allocation1 + $0x8] sm:$0xff pattern:$0x75316420]
    %v652 = vadd.f32 %v642, %v648
    %v653 = vadd.f32 %v643, %v649
    %v654 = vstv %s76
    %v655 = vmul.f32 %v654, %v236
    %v656 = vmul.f32 %v654, %v237
    %v657 = vadd.f32 %v652, %v655
    %v658 = vadd.f32 %v653, %v656
    %v659 = vstv %s77
    %v660 = vmul.f32 %v659, %v254
    %v661 = vmul.f32 %v659, %v255
    %v662 = vadd.f32 %v657, %v660
    %v663 = vadd.f32 %v658, %v661
    %v664 = vstv %s78
    %v665 = vmul.f32 %v664, %v290
    %v666 = vmul.f32 %v664, %v291
    %v667 = vadd.f32 %v662, %v665
    %v668 = vadd.f32 %v663, %v666
    %v669 = vstv %s79
    %v670 = vmul.f32 %v669, %v306
    %v671 = vmul.f32 %v669, %v307
    %v672 = vadd.f32 %v667, %v670
    %v673 = vadd.f32 %v668, %v671
    %v674 = vstv %s80
    %v675 = vmul.f32 %v674, %v245
    %v676 = vmul.f32 %v674, %v246
    %v679 = vrot.slane %v675, 2
    %v680 = vrot.slane %v676, 2
    %v683 = vadd.f32 %v672, %v679
    %v684 = vadd.f32 %v673, %v680
    %v685 = vstv %s81
    %v686 = vmul.f32 %v685, %v272
    %v687 = vmul.f32 %v685, %v273
    %v690 = vrot.slane %v686, 2
    %v691 = vrot.slane %v687, 2
    %v694 = vadd.f32 %v683, %v690
    %v695 = vadd.f32 %v684, %v691
    %v696 = vstv %s82
    %v697 = vmul.f32 %v696, %v298
    %v698 = vmul.f32 %v696, %v299
    %v701 = vrot.slane %v697, 2
    %v702 = vrot.slane %v698, 2
    %v705 = vadd.f32 %v694, %v701
    %v706 = vadd.f32 %v695, %v702
    %v707 = vstv %s83
    %v708 = vmul.f32 %v707, %v217
    %v709 = vmul.f32 %v707, %v218
    %v712 = vrot.slane %v708, 2
    %v713 = vrot.slane %v709, 2
    %v716 = vadd.f32 %v705, %v712
    %v717 = vadd.f32 %v706, %v713
    %v718 = vstv %s84
    %v719 = vmul.f32 %v718, %v183
    %721 = vst [vmem:[#allocation1] ss:$2 sm:$0xff] %v719
    %v722 = vld.sshfl [vmem:[#allocation1] sm:$0xff pattern:$0x75316420]
    %v723 = vld.sshfl [vmem:[#allocation1 + $0x8] sm:$0xff pattern:$0x75316420]
    %v724 = vrot.slane %v722, 2
    %v725 = vrot.slane %v723, 2
    %v728 = vadd.f32 %v716, %v724
    %v729 = vadd.f32 %v717, %v725
    %v730 = vstv %s85
    %v731 = vmul.f32 %v730, %v236
    %v732 = vmul.f32 %v730, %v237
    %v735 = vrot.slane %v731, 2
    %v736 = vrot.slane %v732, 2
    %v739 = vadd.f32 %v728, %v735
    %v740 = vadd.f32 %v729, %v736
    %v741 = vstv %s86
    %v742 = vmul.f32 %v741, %v254
    %v743 = vmul.f32 %v741, %v255
    %v746 = vrot.slane %v742, 2
    %v747 = vrot.slane %v743, 2
    %v750 = vadd.f32 %v739, %v746
    %v751 = vadd.f32 %v740, %v747
    %v752 = vstv %s87
    %v753 = vmul.f32 %v752, %v290
    %v754 = vmul.f32 %v752, %v291
    %v757 = vrot.slane %v753, 2
    %v758 = vrot.slane %v754, 2
    %v761 = vadd.f32 %v750, %v757
    %v762 = vadd.f32 %v751, %v758
    %v763 = vstv %s88
    %v764 = vmul.f32 %v763, %v306
    %v765 = vmul.f32 %v763, %v307
    %v768 = vrot.slane %v764, 2
    %v769 = vrot.slane %v765, 2
    %v772 = vadd.f32 %v761, %v768
    %v773 = vadd.f32 %v762, %v769
    %v774 = vstv %s89
    %v775 = vmul.f32 %v774, %v245
    %v776 = vmul.f32 %v774, %v246
    %v777 = vstv %s90
    %v778 = vmul.f32 %v777, %v272
    %v779 = vmul.f32 %v777, %v273
    %v780 = vadd.f32 %v775, %v778
    %v781 = vadd.f32 %v776, %v779
    %v782 = vstv %s91
    %v783 = vmul.f32 %v782, %v298
    %v784 = vmul.f32 %v782, %v299
    %v785 = vadd.f32 %v780, %v783
    %v786 = vadd.f32 %v781, %v784
    %v787 = vstv %s92
    %v788 = vmul.f32 %v787, %v217
    %v789 = vmul.f32 %v787, %v218
    %v790 = vadd.f32 %v785, %v788
    %v791 = vadd.f32 %v786, %v789
    %v792 = vstv %s93
    %v793 = vmul.f32 %v792, %v183
    %795 = vst [vmem:[#allocation1] ss:$2 sm:$0xff] %v793
    %v796 = vld.sshfl [vmem:[#allocation1] sm:$0xff pattern:$0x75316420]
    %v797 = vld.sshfl [vmem:[#allocation1 + $0x8] sm:$0xff pattern:$0x75316420]
    %v800 = vadd.f32 %v790, %v796
    %v801 = vadd.f32 %v791, %v797
    %v802 = vstv %s94
    %v803 = vmul.f32 %v802, %v236
    %v804 = vmul.f32 %v802, %v237
    %v805 = vadd.f32 %v800, %v803
    %v806 = vadd.f32 %v801, %v804
    %v807 = vstv %s95
    %v808 = vmul.f32 %v807, %v254
    %v809 = vmul.f32 %v807, %v255
    %v810 = vadd.f32 %v805, %v808
    %v811 = vadd.f32 %v806, %v809
    %v812 = vstv %s96
    %v813 = vmul.f32 %v812, %v290
    %v814 = vmul.f32 %v812, %v291
    %v815 = vadd.f32 %v810, %v813
    %v816 = vadd.f32 %v811, %v814
    %v817 = vstv %s97
    %v818 = vmul.f32 %v817, %v306
    %v819 = vmul.f32 %v817, %v307
    %v820 = vadd.f32 %v815, %v818
    %v821 = vadd.f32 %v816, %v819
    %v822 = vstv %s98
    %v823 = vmul.f32 %v822, %v245
    %v824 = vmul.f32 %v822, %v246
    %v827 = vrot.slane %v823, 2
    %v828 = vrot.slane %v824, 2
    %v831 = vadd.f32 %v820, %v827
    %v832 = vadd.f32 %v821, %v828
    %v833 = vstv %s99
    %v834 = vmul.f32 %v833, %v272
    %v835 = vmul.f32 %v833, %v273
    %v838 = vrot.slane %v834, 2
    %v839 = vrot.slane %v835, 2
    %v842 = vadd.f32 %v831, %v838
    %v843 = vadd.f32 %v832, %v839
    %v844 = vstv %s100
    %v845 = vmul.f32 %v844, %v298
    %v846 = vmul.f32 %v844, %v299
    %v849 = vrot.slane %v845, 2
    %v850 = vrot.slane %v846, 2
    %v853 = vadd.f32 %v842, %v849
    %v854 = vadd.f32 %v843, %v850
    %v855 = vstv %s101
    %v856 = vmul.f32 %v855, %v217
    %v857 = vmul.f32 %v855, %v218
    %v860 = vrot.slane %v856, 2
    %v861 = vrot.slane %v857, 2
    %v864 = vadd.f32 %v853, %v860
    %v865 = vadd.f32 %v854, %v861
    %v866 = vstv %s102
    %v867 = vmul.f32 %v866, %v183
    %869 = vst [vmem:[#allocation1] ss:$2 sm:$0xff] %v867
    %v870 = vld.sshfl [vmem:[#allocation1] sm:$0xff pattern:$0x75316420]
    %v871 = vld.sshfl [vmem:[#allocation1 + $0x8] sm:$0xff pattern:$0x75316420]
    %v872 = vrot.slane %v870, 2
    %v873 = vrot.slane %v871, 2
    %v876 = vadd.f32 %v864, %v872
    %v877 = vadd.f32 %v865, %v873
    %v878 = vstv %s103
    %v879 = vmul.f32 %v878, %v236
    %v880 = vmul.f32 %v878, %v237
    %v883 = vrot.slane %v879, 2
    %v884 = vrot.slane %v880, 2
    %v887 = vadd.f32 %v876, %v883
    %v888 = vadd.f32 %v877, %v884
    %v889 = vstv %s104
    %v890 = vmul.f32 %v889, %v254
    %v891 = vmul.f32 %v889, %v255
    %v894 = vrot.slane %v890, 2
    %v895 = vrot.slane %v891, 2
    %v898 = vadd.f32 %v887, %v894
    %v899 = vadd.f32 %v888, %v895
    %v900 = vstv %s105
    %v901 = vmul.f32 %v900, %v290
    %v902 = vmul.f32 %v900, %v291
    %v905 = vrot.slane %v901, 2
    %v906 = vrot.slane %v902, 2
    %v909 = vadd.f32 %v898, %v905
    %v910 = vadd.f32 %v899, %v906
    %v911 = vstv %s106
    %v912 = vmul.f32 %v911, %v306
    %v913 = vmul.f32 %v911, %v307
    %v916 = vrot.slane %v912, 2
    %v917 = vrot.slane %v913, 2
    %v920 = vadd.f32 %v909, %v916
    %v921 = vadd.f32 %v910, %v917
    %v924 = vrot.slane %v624, 6
    %v925 = vrot.slane %v625, 6
    %v930 = vrot.slane %v772, 4
    %v931 = vrot.slane %v773, 4
    %v936 = vrot.slane %v920, 2
    %v937 = vrot.slane %v921, 2
    %vm940 = vcmask 1041408
    %v941 = vsel %vm940, %v476, %v924
    %v942 = vsel %vm940, %v477, %v925
    %vm943 = vcmask 1043456
    %v944 = vsel %vm943, %v941, %v930
    %v945 = vsel %vm943, %v942, %v931
    %vm946 = vcmask 1045504
    %v947 = vsel %vm946, %v944, %v936
    %v948 = vsel %vm946, %v945, %v937
    %vm949 = vcmp.ge.f32.partialorder %v947, 0.0
    %vm950 = vcmp.ge.f32.partialorder %v948, 0.0
    %v951 = vmul.f32 %v947, 0.01
    %v952 = vmul.f32 %v948, 0.01
    %v953 = vsel %vm949, %v947, %v951
    %v954 = vsel %vm950, %v948, %v952
    %955 = vrot.lane.b32.xlu0 %v953, 1
    %v956 = vpop.permute.xlu0 %955
    %957 = vrot.lane.b32.xlu0 %v954, 1
    %v958 = vpop.permute.xlu0 %957
    %v959 = vsel %vm209, %v956, %v958
    %v960 = vsel %vm209, %v958, %v956
    %v961 = vsel %vm191, %v953, %v960
    %v962 = vsel %vm192, %v954, %v959
    %963 = vrot.lane.b32.xlu0 %v953, 127
    %v964 = vpop.permute.xlu0 %963
    %965 = vrot.lane.b32.xlu0 %v954, 127
    %v966 = vpop.permute.xlu0 %965
    %v967 = vsel %vm228, %v964, %v966
    %v968 = vsel %vm228, %v966, %v964
    %v969 = vsel %vm193, %v953, %v967
    %v970 = vsel %vm194, %v954, %v968
    %971 = vrot.lane.b32.xlu0 %v961, 16
    %v972 = vpop.permute.xlu0 %971
    %973 = vrot.lane.b32.xlu0 %v962, 16
    %v974 = vpop.permute.xlu0 %973
    %v975 = vsel %vm242, %v972, %v974
    %v976 = vsel %vm242, %v974, %v972
    %v977 = vsel %vm195, %v961, %v976
    %v978 = vsel %vm196, %v962, %v975
    %979 = vrot.lane.b32.xlu0 %v961, 112
    %v980 = vpop.permute.xlu0 %979
    %981 = vrot.lane.b32.xlu0 %v962, 112
    %v982 = vpop.permute.xlu0 %981
    %v983 = vsel %vm251, %v980, %v982
    %v984 = vsel %vm251, %v982, %v980
    %v985 = vsel %vm197, %v961, %v983
    %v986 = vsel %vm198, %v962, %v984
    %987 = vrot.lane.b32.xlu0 %v953, 16
    %v988 = vpop.permute.xlu0 %987
    %989 = vrot.lane.b32.xlu0 %v954, 16
    %v990 = vpop.permute.xlu0 %989
    %v991 = vsel %vm242, %v988, %v990
    %v992 = vsel %vm242, %v990, %v988
    %v993 = vsel %vm195, %v953, %v992
    %v994 = vsel %vm196, %v954, %v991
    %995 = vrot.lane.b32.xlu0 %v953, 112
    %v996 = vpop.permute.xlu0 %995
    %997 = vrot.lane.b32.xlu0 %v954, 112
    %v998 = vpop.permute.xlu0 %997
    %v999 = vsel %vm251, %v996, %v998
    %v1000 = vsel %vm251, %v998, %v996
    %v1001 = vsel %vm197, %v953, %v999
    %v1002 = vsel %vm198, %v954, %v1000
    %1003 = vrot.lane.b32.xlu0 %v969, 16
    %v1004 = vpop.permute.xlu0 %1003
    %1005 = vrot.lane.b32.xlu0 %v970, 16
    %v1006 = vpop.permute.xlu0 %1005
    %v1007 = vsel %vm242, %v1004, %v1006
    %v1008 = vsel %vm242, %v1006, %v1004
    %v1009 = vsel %vm195, %v969, %v1008
    %v1010 = vsel %vm196, %v970, %v1007
    %1011 = vrot.lane.b32.xlu0 %v969, 112
    %v1012 = vpop.permute.xlu0 %1011
    %1013 = vrot.lane.b32.xlu0 %v970, 112
    %v1014 = vpop.permute.xlu0 %1013
    %v1015 = vsel %vm251, %v1012, %v1014
    %v1016 = vsel %vm251, %v1014, %v1012
    %v1017 = vsel %vm197, %v969, %v1015
    %v1018 = vsel %vm198, %v970, %v1016
    %v1019 = vstv %s107
    %v1020 = vmul.f32 %v1019, %v977
    %v1021 = vmul.f32 %v1019, %v978
    %v1022 = vstv %s108
    %v1023 = vmul.f32 %v1022, %v993
    %v1024 = vmul.f32 %v1022, %v994
    %v1025 = vadd.f32 %v1020, %v1023
    %v1026 = vadd.f32 %v1021, %v1024
    %v1027 = vstv %s109
    %v1028 = vmul.f32 %v1027, %v1009
    %v1029 = vmul.f32 %v1027, %v1010
    %v1030 = vadd.f32 %v1025, %v1028
    %v1031 = vadd.f32 %v1026, %v1029
    %v1032 = vstv %s110
    %v1033 = vmul.f32 %v1032, %v961
    %v1034 = vmul.f32 %v1032, %v962
    %v1035 = vadd.f32 %v1030, %v1033
    %v1036 = vadd.f32 %v1031, %v1034
    %v1037 = vstv %s111
    %v1038 = vmul.f32 %v1037, %v953
    %v1039 = vmul.f32 %v1037, %v954
    %v1040 = vadd.f32 %v1035, %v1038
    %v1041 = vadd.f32 %v1036, %v1039
    %v1042 = vstv %s112
    %v1043 = vmul.f32 %v1042, %v969
    %v1044 = vmul.f32 %v1042, %v970
    %v1045 = vadd.f32 %v1040, %v1043
    %v1046 = vadd.f32 %v1041, %v1044
    %v1047 = vstv %s113
    %v1048 = vmul.f32 %v1047, %v985
    %v1049 = vmul.f32 %v1047, %v986
    %v1050 = vadd.f32 %v1045, %v1048
    %v1051 = vadd.f32 %v1046, %v1049
    %v1052 = vstv %s114
    %v1053 = vmul.f32 %v1052, %v1001
    %v1054 = vmul.f32 %v1052, %v1002
    %v1055 = vadd.f32 %v1050, %v1053
    %v1056 = vadd.f32 %v1051, %v1054
    %v1057 = vstv %s115
    %v1058 = vmul.f32 %v1057, %v1017
    %v1059 = vmul.f32 %v1057, %v1018
    %v1060 = vadd.f32 %v1055, %v1058
    %v1061 = vadd.f32 %v1056, %v1059
    %v1062 = vstv %s116
    %v1063 = vmul.f32 %v1062, %v977
    %v1064 = vmul.f32 %v1062, %v978
    %v1067 = vrot.slane %v1063, 2
    %v1068 = vrot.slane %v1064, 2
    %v1071 = vadd.f32 %v1060, %v1067
    %v1072 = vadd.f32 %v1061, %v1068
    %v1073 = vstv %s117
    %v1074 = vmul.f32 %v1073, %v993
    %v1075 = vmul.f32 %v1073, %v994
    %v1078 = vrot.slane %v1074, 2
    %v1079 = vrot.slane %v1075, 2
    %v1082 = vadd.f32 %v1071, %v1078
    %v1083 = vadd.f32 %v1072, %v1079
    %v1084 = vstv %s118
    %v1085 = vmul.f32 %v1084, %v1009
    %v1086 = vmul.f32 %v1084, %v1010
    %v1089 = vrot.slane %v1085, 2
    %v1090 = vrot.slane %v1086, 2
    %v1093 = vadd.f32 %v1082, %v1089
    %v1094 = vadd.f32 %v1083, %v1090
    %v1095 = vstv %s119
    %v1096 = vmul.f32 %v1095, %v961
    %v1097 = vmul.f32 %v1095, %v962
    %v1100 = vrot.slane %v1096, 2
    %v1101 = vrot.slane %v1097, 2
    %v1104 = vadd.f32 %v1093, %v1100
    %v1105 = vadd.f32 %v1094, %v1101
    %v1106 = vstv %s120
    %v1107 = vmul.f32 %v1106, %v953
    %v1108 = vmul.f32 %v1106, %v954
    %v1111 = vrot.slane %v1107, 2
    %v1112 = vrot.slane %v1108, 2
    %v1115 = vadd.f32 %v1104, %v1111
    %v1116 = vadd.f32 %v1105, %v1112
    %v1117 = vstv %s121
    %v1118 = vmul.f32 %v1117, %v969
    %v1119 = vmul.f32 %v1117, %v970
    %v1122 = vrot.slane %v1118, 2
    %v1123 = vrot.slane %v1119, 2
    %v1126 = vadd.f32 %v1115, %v1122
    %v1127 = vadd.f32 %v1116, %v1123
    %v1128 = vstv %s122
    %v1129 = vmul.f32 %v1128, %v985
    %v1130 = vmul.f32 %v1128, %v986
    %v1133 = vrot.slane %v1129, 2
    %v1134 = vrot.slane %v1130, 2
    %v1137 = vadd.f32 %v1126, %v1133
    %v1138 = vadd.f32 %v1127, %v1134
    %v1139 = vstv %s123
    %v1140 = vmul.f32 %v1139, %v1001
    %v1141 = vmul.f32 %v1139, %v1002
    %v1144 = vrot.slane %v1140, 2
    %v1145 = vrot.slane %v1141, 2
    %v1148 = vadd.f32 %v1137, %v1144
    %v1149 = vadd.f32 %v1138, %v1145
    %v1150 = vstv %s124
    %v1151 = vmul.f32 %v1150, %v1017
    %v1152 = vmul.f32 %v1150, %v1018
    %v1155 = vrot.slane %v1151, 2
    %v1156 = vrot.slane %v1152, 2
    %v1159 = vadd.f32 %v1148, %v1155
    %v1160 = vadd.f32 %v1149, %v1156
    %v1161 = vstv %s125
    %v1162 = vmul.f32 %v1161, %v977
    %v1163 = vmul.f32 %v1161, %v978
    %v1166 = vrot.slane %v1162, 4
    %v1167 = vrot.slane %v1163, 4
    %v1170 = vadd.f32 %v1159, %v1166
    %v1171 = vadd.f32 %v1160, %v1167
    %v1172 = vstv %s126
    %v1173 = vmul.f32 %v1172, %v993
    %v1174 = vmul.f32 %v1172, %v994
    %v1177 = vrot.slane %v1173, 4
    %v1178 = vrot.slane %v1174, 4
    %v1181 = vadd.f32 %v1170, %v1177
    %v1182 = vadd.f32 %v1171, %v1178
    %v1183 = vstv %s127
    %v1184 = vmul.f32 %v1183, %v1009
    %v1185 = vmul.f32 %v1183, %v1010
    %v1188 = vrot.slane %v1184, 4
    %v1189 = vrot.slane %v1185, 4
    %v1192 = vadd.f32 %v1181, %v1188
    %v1193 = vadd.f32 %v1182, %v1189
    %v1194 = vstv %s128
    %v1195 = vmul.f32 %v1194, %v961
    %v1196 = vmul.f32 %v1194, %v962
    %v1199 = vrot.slane %v1195, 4
    %v1200 = vrot.slane %v1196, 4
    %v1203 = vadd.f32 %v1192, %v1199
    %v1204 = vadd.f32 %v1193, %v1200
    %v1205 = vstv %s129
    %v1206 = vmul.f32 %v1205, %v953
    %v1207 = vmul.f32 %v1205, %v954
    %v1210 = vrot.slane %v1206, 4
    %v1211 = vrot.slane %v1207, 4
    %v1214 = vadd.f32 %v1203, %v1210
    %v1215 = vadd.f32 %v1204, %v1211
    %v1216 = vstv %s130
    %v1217 = vmul.f32 %v1216, %v969
    %v1218 = vmul.f32 %v1216, %v970
    %v1221 = vrot.slane %v1217, 4
    %v1222 = vrot.slane %v1218, 4
    %v1225 = vadd.f32 %v1214, %v1221
    %v1226 = vadd.f32 %v1215, %v1222
    %v1227 = vstv %s131
    %v1228 = vmul.f32 %v1227, %v985
    %v1229 = vmul.f32 %v1227, %v986
    %v1232 = vrot.slane %v1228, 4
    %v1233 = vrot.slane %v1229, 4
    %v1236 = vadd.f32 %v1225, %v1232
    %v1237 = vadd.f32 %v1226, %v1233
    %v1238 = vstv %s132
    %v1239 = vmul.f32 %v1238, %v1001
    %v1240 = vmul.f32 %v1238, %v1002
    %v1243 = vrot.slane %v1239, 4
    %v1244 = vrot.slane %v1240, 4
    %v1247 = vadd.f32 %v1236, %v1243
    %v1248 = vadd.f32 %v1237, %v1244
    %v1249 = vstv %s133
    %v1250 = vmul.f32 %v1249, %v1017
    %v1251 = vmul.f32 %v1249, %v1018
    %v1254 = vrot.slane %v1250, 4
    %v1255 = vrot.slane %v1251, 4
    %v1258 = vadd.f32 %v1247, %v1254
    %v1259 = vadd.f32 %v1248, %v1255
    %v1260 = vstv %s134
    %v1261 = vmul.f32 %v1260, %v977
    %v1262 = vmul.f32 %v1260, %v978
    %v1265 = vrot.slane %v1261, 6
    %v1266 = vrot.slane %v1262, 6
    %v1269 = vadd.f32 %v1258, %v1265
    %v1270 = vadd.f32 %v1259, %v1266
    %v1271 = vstv %s135
    %v1272 = vmul.f32 %v1271, %v993
    %v1273 = vmul.f32 %v1271, %v994
    %v1276 = vrot.slane %v1272, 6
    %v1277 = vrot.slane %v1273, 6
    %v1280 = vadd.f32 %v1269, %v1276
    %v1281 = vadd.f32 %v1270, %v1277
    %v1282 = vstv %s136
    %v1283 = vmul.f32 %v1282, %v1009
    %v1284 = vmul.f32 %v1282, %v1010
    %v1287 = vrot.slane %v1283, 6
    %v1288 = vrot.slane %v1284, 6
    %v1291 = vadd.f32 %v1280, %v1287
    %v1292 = vadd.f32 %v1281, %v1288
    %v1293 = vstv %s137
    %v1294 = vmul.f32 %v1293, %v961
    %v1295 = vmul.f32 %v1293, %v962
    %v1298 = vrot.slane %v1294, 6
    %v1299 = vrot.slane %v1295, 6
    %v1302 = vadd.f32 %v1291, %v1298
    %v1303 = vadd.f32 %v1292, %v1299
    %v1304 = vstv %s138
    %v1305 = vmul.f32 %v1304, %v953
    %v1306 = vmul.f32 %v1304, %v954
    %v1309 = vrot.slane %v1305, 6
    %v1310 = vrot.slane %v1306, 6
    %v1313 = vadd.f32 %v1302, %v1309
    %v1314 = vadd.f32 %v1303, %v1310
    %v1315 = vstv %s139
    %v1316 = vmul.f32 %v1315, %v969
    %v1317 = vmul.f32 %v1315, %v970
    %v1320 = vrot.slane %v1316, 6
    %v1321 = vrot.slane %v1317, 6
    %v1324 = vadd.f32 %v1313, %v1320
    %v1325 = vadd.f32 %v1314, %v1321
    %v1326 = vstv %s140
    %v1327 = vmul.f32 %v1326, %v985
    %v1328 = vmul.f32 %v1326, %v986
    %v1331 = vrot.slane %v1327, 6
    %v1332 = vrot.slane %v1328, 6
    %v1335 = vadd.f32 %v1324, %v1331
    %v1336 = vadd.f32 %v1325, %v1332
    %v1337 = vstv %s141
    %v1338 = vmul.f32 %v1337, %v1001
    %v1339 = vmul.f32 %v1337, %v1002
    %v1342 = vrot.slane %v1338, 6
    %v1343 = vrot.slane %v1339, 6
    %v1346 = vadd.f32 %v1335, %v1342
    %v1347 = vadd.f32 %v1336, %v1343
    %v1348 = vstv %s142
    %v1349 = vmul.f32 %v1348, %v1017
    %v1350 = vmul.f32 %v1348, %v1018
    %v1353 = vrot.slane %v1349, 6
    %v1354 = vrot.slane %v1350, 6
    %v1357 = vadd.f32 %v1346, %v1353
    %v1358 = vadd.f32 %v1347, %v1354
    %v1359 = vstv %s143
    %v1360 = vmul.f32 %v1359, %v977
    %v1361 = vmul.f32 %v1359, %v978
    %v1362 = vstv %s144
    %v1363 = vmul.f32 %v1362, %v993
    %v1364 = vmul.f32 %v1362, %v994
    %v1365 = vadd.f32 %v1360, %v1363
    %v1366 = vadd.f32 %v1361, %v1364
    %v1367 = vstv %s145
    %v1368 = vmul.f32 %v1367, %v1009
    %v1369 = vmul.f32 %v1367, %v1010
    %v1370 = vadd.f32 %v1365, %v1368
    %v1371 = vadd.f32 %v1366, %v1369
    %v1372 = vstv %s146
    %v1373 = vmul.f32 %v1372, %v961
    %v1374 = vmul.f32 %v1372, %v962
    %v1375 = vadd.f32 %v1370, %v1373
    %v1376 = vadd.f32 %v1371, %v1374
    %v1377 = vstv %s147
    %v1378 = vmul.f32 %v1377, %v953
    %v1379 = vmul.f32 %v1377, %v954
    %v1380 = vadd.f32 %v1375, %v1378
    %v1381 = vadd.f32 %v1376, %v1379
    %v1382 = vstv %s148
    %v1383 = vmul.f32 %v1382, %v969
    %v1384 = vmul.f32 %v1382, %v970
    %v1385 = vadd.f32 %v1380, %v1383
    %v1386 = vadd.f32 %v1381, %v1384
    %v1387 = vstv %s149
    %v1388 = vmul.f32 %v1387, %v985
    %v1389 = vmul.f32 %v1387, %v986
    %v1390 = vadd.f32 %v1385, %v1388
    %v1391 = vadd.f32 %v1386, %v1389
    %v1392 = vstv %s150
    %v1393 = vmul.f32 %v1392, %v1001
    %v1394 = vmul.f32 %v1392, %v1002
    %v1395 = vadd.f32 %v1390, %v1393
    %v1396 = vadd.f32 %v1391, %v1394
    %v1397 = vstv %s151
    %v1398 = vmul.f32 %v1397, %v1017
    %v1399 = vmul.f32 %v1397, %v1018
    %v1400 = vadd.f32 %v1395, %v1398
    %v1401 = vadd.f32 %v1396, %v1399
    %v1402 = vstv %s152
    %v1403 = vmul.f32 %v1402, %v977
    %v1404 = vmul.f32 %v1402, %v978
    %v1407 = vrot.slane %v1403, 2
    %v1408 = vrot.slane %v1404, 2
    %v1411 = vadd.f32 %v1400, %v1407
    %v1412 = vadd.f32 %v1401, %v1408
    %v1413 = vstv %s153
    %v1414 = vmul.f32 %v1413, %v993
    %v1415 = vmul.f32 %v1413, %v994
    %v1418 = vrot.slane %v1414, 2
    %v1419 = vrot.slane %v1415, 2
    %v1422 = vadd.f32 %v1411, %v1418
    %v1423 = vadd.f32 %v1412, %v1419
    %v1424 = vstv %s154
    %v1425 = vmul.f32 %v1424, %v1009
    %v1426 = vmul.f32 %v1424, %v1010
    %v1429 = vrot.slane %v1425, 2
    %v1430 = vrot.slane %v1426, 2
    %v1433 = vadd.f32 %v1422, %v1429
    %v1434 = vadd.f32 %v1423, %v1430
    %v1435 = vstv %s155
    %v1436 = vmul.f32 %v1435, %v961
    %v1437 = vmul.f32 %v1435, %v962
    %v1440 = vrot.slane %v1436, 2
    %v1441 = vrot.slane %v1437, 2
    %v1444 = vadd.f32 %v1433, %v1440
    %v1445 = vadd.f32 %v1434, %v1441
    %v1446 = vstv %s156
    %v1447 = vmul.f32 %v1446, %v953
    %v1448 = vmul.f32 %v1446, %v954
    %v1451 = vrot.slane %v1447, 2
    %v1452 = vrot.slane %v1448, 2
    %v1455 = vadd.f32 %v1444, %v1451
    %v1456 = vadd.f32 %v1445, %v1452
    %v1457 = vstv %s157
    %v1458 = vmul.f32 %v1457, %v969
    %v1459 = vmul.f32 %v1457, %v970
    %v1462 = vrot.slane %v1458, 2
    %v1463 = vrot.slane %v1459, 2
    %v1466 = vadd.f32 %v1455, %v1462
    %v1467 = vadd.f32 %v1456, %v1463
    %v1468 = vstv %s158
    %v1469 = vmul.f32 %v1468, %v985
    %v1470 = vmul.f32 %v1468, %v986
    %v1473 = vrot.slane %v1469, 2
    %v1474 = vrot.slane %v1470, 2
    %v1477 = vadd.f32 %v1466, %v1473
    %v1478 = vadd.f32 %v1467, %v1474
    %v1479 = vstv %s159
    %v1480 = vmul.f32 %v1479, %v1001
    %v1481 = vmul.f32 %v1479, %v1002
    %v1484 = vrot.slane %v1480, 2
    %v1485 = vrot.slane %v1481, 2
    %v1488 = vadd.f32 %v1477, %v1484
    %v1489 = vadd.f32 %v1478, %v1485
    %v1490 = vstv %s160
    %v1491 = vmul.f32 %v1490, %v1017
    %v1492 = vmul.f32 %v1490, %v1018
    %v1495 = vrot.slane %v1491, 2
    %v1496 = vrot.slane %v1492, 2
    %v1499 = vadd.f32 %v1488, %v1495
    %v1500 = vadd.f32 %v1489, %v1496
    %v1501 = vstv %s161
    %v1502 = vmul.f32 %v1501, %v977
    %v1503 = vmul.f32 %v1501, %v978
    %v1506 = vrot.slane %v1502, 4
    %v1507 = vrot.slane %v1503, 4
    %v1510 = vadd.f32 %v1499, %v1506
    %v1511 = vadd.f32 %v1500, %v1507
    %v1512 = vstv %s162
    %v1513 = vmul.f32 %v1512, %v993
    %v1514 = vmul.f32 %v1512, %v994
    %v1517 = vrot.slane %v1513, 4
    %v1518 = vrot.slane %v1514, 4
    %v1521 = vadd.f32 %v1510, %v1517
    %v1522 = vadd.f32 %v1511, %v1518
    %v1523 = vstv %s163
    %v1524 = vmul.f32 %v1523, %v1009
    %v1525 = vmul.f32 %v1523, %v1010
    %v1528 = vrot.slane %v1524, 4
    %v1529 = vrot.slane %v1525, 4
    %v1532 = vadd.f32 %v1521, %v1528
    %v1533 = vadd.f32 %v1522, %v1529
    %v1534 = vstv %s164
    %v1535 = vmul.f32 %v1534, %v961
    %v1536 = vmul.f32 %v1534, %v962
    %v1539 = vrot.slane %v1535, 4
    %v1540 = vrot.slane %v1536, 4
    %v1543 = vadd.f32 %v1532, %v1539
    %v1544 = vadd.f32 %v1533, %v1540
    %v1545 = vstv %s165
    %v1546 = vmul.f32 %v1545, %v953
    %v1547 = vmul.f32 %v1545, %v954
    %v1550 = vrot.slane %v1546, 4
    %v1551 = vrot.slane %v1547, 4
    %v1554 = vadd.f32 %v1543, %v1550
    %v1555 = vadd.f32 %v1544, %v1551
    %v1556 = vstv %s166
    %v1557 = vmul.f32 %v1556, %v969
    %v1558 = vmul.f32 %v1556, %v970
    %v1561 = vrot.slane %v1557, 4
    %v1562 = vrot.slane %v1558, 4
    %v1565 = vadd.f32 %v1554, %v1561
    %v1566 = vadd.f32 %v1555, %v1562
    %v1567 = vstv %s167
    %v1568 = vmul.f32 %v1567, %v985
    %v1569 = vmul.f32 %v1567, %v986
    %v1572 = vrot.slane %v1568, 4
    %v1573 = vrot.slane %v1569, 4
    %v1576 = vadd.f32 %v1565, %v1572
    %v1577 = vadd.f32 %v1566, %v1573
    %v1578 = vstv %s168
    %v1579 = vmul.f32 %v1578, %v1001
    %v1580 = vmul.f32 %v1578, %v1002
    %v1583 = vrot.slane %v1579, 4
    %v1584 = vrot.slane %v1580, 4
    %v1587 = vadd.f32 %v1576, %v1583
    %v1588 = vadd.f32 %v1577, %v1584
    %v1589 = vstv %s169
    %v1590 = vmul.f32 %v1589, %v1017
    %v1591 = vmul.f32 %v1589, %v1018
    %v1594 = vrot.slane %v1590, 4
    %v1595 = vrot.slane %v1591, 4
    %v1598 = vadd.f32 %v1587, %v1594
    %v1599 = vadd.f32 %v1588, %v1595
    %v1600 = vstv %s170
    %v1601 = vmul.f32 %v1600, %v977
    %v1602 = vmul.f32 %v1600, %v978
    %v1605 = vrot.slane %v1601, 6
    %v1606 = vrot.slane %v1602, 6
    %v1609 = vadd.f32 %v1598, %v1605
    %v1610 = vadd.f32 %v1599, %v1606
    %v1611 = vstv %s171
    %v1612 = vmul.f32 %v1611, %v993
    %v1613 = vmul.f32 %v1611, %v994
    %v1616 = vrot.slane %v1612, 6
    %v1617 = vrot.slane %v1613, 6
    %v1620 = vadd.f32 %v1609, %v1616
    %v1621 = vadd.f32 %v1610, %v1617
    %v1622 = vstv %s172
    %v1623 = vmul.f32 %v1622, %v1009
    %v1624 = vmul.f32 %v1622, %v1010
    %v1627 = vrot.slane %v1623, 6
    %v1628 = vrot.slane %v1624, 6
    %v1631 = vadd.f32 %v1620, %v1627
    %v1632 = vadd.f32 %v1621, %v1628
    %v1633 = vstv %s173
    %v1634 = vmul.f32 %v1633, %v961
    %v1635 = vmul.f32 %v1633, %v962
    %v1638 = vrot.slane %v1634, 6
    %v1639 = vrot.slane %v1635, 6
    %v1642 = vadd.f32 %v1631, %v1638
    %v1643 = vadd.f32 %v1632, %v1639
    %v1644 = vstv %s174
    %v1645 = vmul.f32 %v1644, %v953
    %v1646 = vmul.f32 %v1644, %v954
    %v1649 = vrot.slane %v1645, 6
    %v1650 = vrot.slane %v1646, 6
    %v1653 = vadd.f32 %v1642, %v1649
    %v1654 = vadd.f32 %v1643, %v1650
    %v1655 = vstv %s175
    %v1656 = vmul.f32 %v1655, %v969
    %v1657 = vmul.f32 %v1655, %v970
    %v1660 = vrot.slane %v1656, 6
    %v1661 = vrot.slane %v1657, 6
    %v1664 = vadd.f32 %v1653, %v1660
    %v1665 = vadd.f32 %v1654, %v1661
    %v1666 = vstv %s176
    %v1667 = vmul.f32 %v1666, %v985
    %v1668 = vmul.f32 %v1666, %v986
    %v1671 = vrot.slane %v1667, 6
    %v1672 = vrot.slane %v1668, 6
    %v1675 = vadd.f32 %v1664, %v1671
    %v1676 = vadd.f32 %v1665, %v1672
    %v1677 = vstv %s177
    %v1678 = vmul.f32 %v1677, %v1001
    %v1679 = vmul.f32 %v1677, %v1002
    %v1682 = vrot.slane %v1678, 6
    %v1683 = vrot.slane %v1679, 6
    %v1686 = vadd.f32 %v1675, %v1682
    %v1687 = vadd.f32 %v1676, %v1683
    %v1688 = vstv %s178
    %v1689 = vmul.f32 %v1688, %v1017
    %v1690 = vmul.f32 %v1688, %v1018
    %v1693 = vrot.slane %v1689, 6
    %v1694 = vrot.slane %v1690, 6
    %v1697 = vadd.f32 %v1686, %v1693
    %v1698 = vadd.f32 %v1687, %v1694
    %v1699 = vstv %s179
    %v1700 = vadd.f32 %v1357, %v1699
    %v1701 = vadd.f32 %v1358, %v1699
    %v1702 = vstv %s180
    %v1703 = vadd.f32 %v1697, %v1702
    %v1704 = vadd.f32 %v1698, %v1702
    %v1707 = vrot.slane %v1703, 6
    %v1708 = vrot.slane %v1704, 6
    %v1711 = vsel %vm940, %v1700, %v1707
    %v1712 = vsel %vm940, %v1701, %v1708
    %1714 = vset.pattern.permute.xlu0 0
    %1715 = vperm.xlu0 %1714, %v182
    %v1716 = vpop.permute.xlu0 %1715
    %v1718 = vmul.f32 %v1716, %v321
    %v1719 = vmul.f32 %v1716, %v322
    %v1720 = vadd.f32 %v1711, %v1718
    %v1721 = vadd.f32 %v1712, %v1719
    %v1722 = vadd.f32 %v328, %v1720
    %v1723 = vadd.f32 %v329, %v1721
    %v1724 = vmul.f32 %v1722, 0.05
    %v1725 = vmul.f32 %v1723, 0.05
    %v1728 = vrot.slane %v1725, 4
    %v1729 = vsel %vm943, %v1724, %v1728
    %v1731 = vadd.f32 %v183, %v1729
    %1732 = vst [vmem:[%s4] sm:$0xff] %v1731
    %v1733 = vmul.f32 %v1720, %v1720
    %v1734 = vmul.f32 %v1721, %v1721
    %v1735 = vadd.f32 %v1733, 0.0
    %v1736 = vadd.f32 %v1734, 0.0
    %v1737 = vmul.f32 %v328, %v1720
    %v1738 = vmul.f32 %v329, %v1721
    %v1739 = vadd.f32 %v1737, 0.0
    %v1740 = vadd.f32 %v1738, 0.0
    %1742 = vst [vmem:[#allocation1] ss:$2 sm:$0xff] %v1731
    %v1743 = vld.sshfl [vmem:[#allocation1] sm:$0xff pattern:$0x75316420]
    %v1744 = vld.sshfl [vmem:[#allocation1 + $0x8] sm:$0xff pattern:$0x75316420]
    %1747 = vrot.lane.b32.xlu0 %v1743, 1
    %v1748 = vpop.permute.xlu0 %1747
    %1749 = vrot.lane.b32.xlu0 %v1744, 1
    %v1750 = vpop.permute.xlu0 %1749
    %v1751 = vsel %vm209, %v1748, %v1750
    %v1752 = vsel %vm209, %v1750, %v1748
    %1753 = vst [vmem:[#allocation1] ss:$2 sm:$0xff] %v1731
    %v1754 = vld.sshfl [vmem:[#allocation1] sm:$0xff pattern:$0x75316420]
    %v1755 = vld.sshfl [vmem:[#allocation1 + $0x8] sm:$0xff pattern:$0x75316420]
    %v1758 = vsel %vm191, %v1754, %v1752
    %v1759 = vsel %vm192, %v1755, %v1751
    %1760 = vst [vmem:[#allocation1] ss:$2 sm:$0xff] %v1731
    %v1761 = vld.sshfl [vmem:[#allocation1] sm:$0xff pattern:$0x75316420]
    %v1762 = vld.sshfl [vmem:[#allocation1 + $0x8] sm:$0xff pattern:$0x75316420]
    %1765 = vrot.lane.b32.xlu0 %v1761, 127
    %v1766 = vpop.permute.xlu0 %1765
    %1767 = vrot.lane.b32.xlu0 %v1762, 127
    %v1768 = vpop.permute.xlu0 %1767
    %v1769 = vsel %vm228, %v1766, %v1768
    %v1770 = vsel %vm228, %v1768, %v1766
    %1771 = vst [vmem:[#allocation1] ss:$2 sm:$0xff] %v1731
    %v1772 = vld.sshfl [vmem:[#allocation1] sm:$0xff pattern:$0x75316420]
    %v1773 = vld.sshfl [vmem:[#allocation1 + $0x8] sm:$0xff pattern:$0x75316420]
    %v1776 = vsel %vm193, %v1772, %v1769
    %v1777 = vsel %vm194, %v1773, %v1770
    %1778 = vrot.lane.b32.xlu0 %v1758, 16
    %v1779 = vpop.permute.xlu0 %1778
    %1780 = vrot.lane.b32.xlu0 %v1759, 16
    %v1781 = vpop.permute.xlu0 %1780
    %v1782 = vsel %vm242, %v1779, %v1781
    %v1783 = vsel %vm242, %v1781, %v1779
    %v1784 = vsel %vm195, %v1758, %v1783
    %v1785 = vsel %vm196, %v1759, %v1782
    %1786 = vrot.lane.b32.xlu0 %v1758, 112
    %v1787 = vpop.permute.xlu0 %1786
    %1788 = vrot.lane.b32.xlu0 %v1759, 112
    %v1789 = vpop.permute.xlu0 %1788
    %v1790 = vsel %vm251, %v1787, %v1789
    %v1791 = vsel %vm251, %v1789, %v1787
    %v1792 = vsel %vm197, %v1758, %v1790
    %v1793 = vsel %vm198, %v1759, %v1791
    %1794 = vst [vmem:[#allocation1] ss:$2 sm:$0xff] %v1731
    %v1795 = vld.sshfl [vmem:[#allocation1] sm:$0xff pattern:$0x75316420]
    %v1796 = vld.sshfl [vmem:[#allocation1 + $0x8] sm:$0xff pattern:$0x75316420]
    %1799 = vrot.lane.b32.xlu0 %v1795, 16
    %v1800 = vpop.permute.xlu0 %1799
    %1801 = vrot.lane.b32.xlu0 %v1796, 16
    %v1802 = vpop.permute.xlu0 %1801
    %v1803 = vsel %vm242, %v1800, %v1802
    %v1804 = vsel %vm242, %v1802, %v1800
    %1805 = vst [vmem:[#allocation1] ss:$2 sm:$0xff] %v1731
    %v1806 = vld.sshfl [vmem:[#allocation1] sm:$0xff pattern:$0x75316420]
    %v1807 = vld.sshfl [vmem:[#allocation1 + $0x8] sm:$0xff pattern:$0x75316420]
    %v1810 = vsel %vm195, %v1806, %v1804
    %v1811 = vsel %vm196, %v1807, %v1803
    %1812 = vst [vmem:[#allocation1] ss:$2 sm:$0xff] %v1731
    %v1813 = vld.sshfl [vmem:[#allocation1] sm:$0xff pattern:$0x75316420]
    %v1814 = vld.sshfl [vmem:[#allocation1 + $0x8] sm:$0xff pattern:$0x75316420]
    %1817 = vrot.lane.b32.xlu0 %v1813, 112
    %v1818 = vpop.permute.xlu0 %1817
    %1819 = vrot.lane.b32.xlu0 %v1814, 112
    %v1820 = vpop.permute.xlu0 %1819
    %v1821 = vsel %vm251, %v1818, %v1820
    %v1822 = vsel %vm251, %v1820, %v1818
    %1823 = vst [vmem:[#allocation1] ss:$2 sm:$0xff] %v1731
    %v1824 = vld.sshfl [vmem:[#allocation1] sm:$0xff pattern:$0x75316420]
    %v1825 = vld.sshfl [vmem:[#allocation1 + $0x8] sm:$0xff pattern:$0x75316420]
    %v1828 = vsel %vm197, %v1824, %v1821
    %v1829 = vsel %vm198, %v1825, %v1822
    %1830 = vrot.lane.b32.xlu0 %v1776, 16
    %v1831 = vpop.permute.xlu0 %1830
    %1832 = vrot.lane.b32.xlu0 %v1777, 16
    %v1833 = vpop.permute.xlu0 %1832
    %v1834 = vsel %vm242, %v1831, %v1833
    %v1835 = vsel %vm242, %v1833, %v1831
    %v1836 = vsel %vm195, %v1776, %v1835
    %v1837 = vsel %vm196, %v1777, %v1834
    %1838 = vrot.lane.b32.xlu0 %v1776, 112
    %v1839 = vpop.permute.xlu0 %1838
    %1840 = vrot.lane.b32.xlu0 %v1777, 112
    %v1841 = vpop.permute.xlu0 %1840
    %v1842 = vsel %vm251, %v1839, %v1841
    %v1843 = vsel %vm251, %v1841, %v1839
    %v1844 = vsel %vm197, %v1776, %v1842
    %v1845 = vsel %vm198, %v1777, %v1843
    %v1846 = vadd.f32 %v1810, %v1828
    %v1847 = vadd.f32 %v1811, %v1829
    %v1848 = vadd.f32 %v1846, %v1758
    %v1849 = vadd.f32 %v1847, %v1759
    %v1850 = vadd.f32 %v1848, %v1776
    %v1851 = vadd.f32 %v1849, %v1777
    %v1852 = vmul.f32 %v1731, 4.0
    %1854 = vst [vmem:[#allocation1] ss:$2 sm:$0xff] %v1852
    %v1855 = vld.sshfl [vmem:[#allocation1] sm:$0xff pattern:$0x75316420]
    %v1856 = vld.sshfl [vmem:[#allocation1 + $0x8] sm:$0xff pattern:$0x75316420]
    %v1859 = vsub.f32 %v1850, %v1855
    %v1860 = vsub.f32 %v1851, %v1856
    %v1861 = vmul.f32 %v326, %v1859
    %v1862 = vmul.f32 %v326, %v1860
    %v1863 = vmul.f32 %v330, %v1784
    %v1864 = vmul.f32 %v330, %v1785
    %v1865 = vmul.f32 %v333, %v1810
    %v1866 = vmul.f32 %v333, %v1811
    %v1867 = vadd.f32 %v1863, %v1865
    %v1868 = vadd.f32 %v1864, %v1866
    %v1869 = vmul.f32 %v338, %v1836
    %v1870 = vmul.f32 %v338, %v1837
    %v1871 = vadd.f32 %v1867, %v1869
    %v1872 = vadd.f32 %v1868, %v1870
    %v1873 = vmul.f32 %v343, %v1758
    %v1874 = vmul.f32 %v343, %v1759
    %v1875 = vadd.f32 %v1871, %v1873
    %v1876 = vadd.f32 %v1872, %v1874
    %v1877 = vmul.f32 %v348, %v1731
    %1879 = vst [vmem:[#allocation1] ss:$2 sm:$0xff] %v1877
    %v1880 = vld.sshfl [vmem:[#allocation1] sm:$0xff pattern:$0x75316420]
    %v1881 = vld.sshfl [vmem:[#allocation1 + $0x8] sm:$0xff pattern:$0x75316420]
    %v1884 = vadd.f32 %v1875, %v1880
    %v1885 = vadd.f32 %v1876, %v1881
    %v1886 = vmul.f32 %v358, %v1776
    %v1887 = vmul.f32 %v358, %v1777
    %v1888 = vadd.f32 %v1884, %v1886
    %v1889 = vadd.f32 %v1885, %v1887
    %v1890 = vmul.f32 %v363, %v1792
    %v1891 = vmul.f32 %v363, %v1793
    %v1892 = vadd.f32 %v1888, %v1890
    %v1893 = vadd.f32 %v1889, %v1891
    %v1894 = vmul.f32 %v368, %v1828
    %v1895 = vmul.f32 %v368, %v1829
    %v1896 = vadd.f32 %v1892, %v1894
    %v1897 = vadd.f32 %v1893, %v1895
    %v1898 = vmul.f32 %v373, %v1844
    %v1899 = vmul.f32 %v373, %v1845
    %v1900 = vadd.f32 %v1896, %v1898
    %v1901 = vadd.f32 %v1897, %v1899
    %v1902 = vmul.f32 %v378, %v1784
    %v1903 = vmul.f32 %v378, %v1785
    %v1906 = vrot.slane %v1902, 2
    %v1907 = vrot.slane %v1903, 2
    %v1910 = vadd.f32 %v1900, %v1906
    %v1911 = vadd.f32 %v1901, %v1907
    %v1912 = vmul.f32 %v389, %v1810
    %v1913 = vmul.f32 %v389, %v1811
    %v1916 = vrot.slane %v1912, 2
    %v1917 = vrot.slane %v1913, 2
    %v1920 = vadd.f32 %v1910, %v1916
    %v1921 = vadd.f32 %v1911, %v1917
    %v1922 = vmul.f32 %v400, %v1836
    %v1923 = vmul.f32 %v400, %v1837
    %v1926 = vrot.slane %v1922, 2
    %v1927 = vrot.slane %v1923, 2
    %v1930 = vadd.f32 %v1920, %v1926
    %v1931 = vadd.f32 %v1921, %v1927
    %v1932 = vmul.f32 %v411, %v1758
    %v1933 = vmul.f32 %v411, %v1759
    %v1936 = vrot.slane %v1932, 2
    %v1937 = vrot.slane %v1933, 2
    %v1940 = vadd.f32 %v1930, %v1936
    %v1941 = vadd.f32 %v1931, %v1937
    %v1942 = vmul.f32 %v422, %v1731
    %1944 = vst [vmem:[#allocation1] ss:$2 sm:$0xff] %v1942
    %v1945 = vld.sshfl [vmem:[#allocation1] sm:$0xff pattern:$0x75316420]
    %v1946 = vld.sshfl [vmem:[#allocation1 + $0x8] sm:$0xff pattern:$0x75316420]
    %v1947 = vrot.slane %v1945, 2
    %v1948 = vrot.slane %v1946, 2
    %v1951 = vadd.f32 %v1940, %v1947
    %v1952 = vadd.f32 %v1941, %v1948
    %v1953 = vmul.f32 %v434, %v1776
    %v1954 = vmul.f32 %v434, %v1777
    %v1957 = vrot.slane %v1953, 2
    %v1958 = vrot.slane %v1954, 2
    %v1961 = vadd.f32 %v1951, %v1957
    %v1962 = vadd.f32 %v1952, %v1958
    %v1963 = vmul.f32 %v445, %v1792
    %v1964 = vmul.f32 %v445, %v1793
    %v1967 = vrot.slane %v1963, 2
    %v1968 = vrot.slane %v1964, 2
    %v1971 = vadd.f32 %v1961, %v1967
    %v1972 = vadd.f32 %v1962, %v1968
    %v1973 = vmul.f32 %v456, %v1828
    %v1974 = vmul.f32 %v456, %v1829
    %v1977 = vrot.slane %v1973, 2
    %v1978 = vrot.slane %v1974, 2
    %v1981 = vadd.f32 %v1971, %v1977
    %v1982 = vadd.f32 %v1972, %v1978
    %v1983 = vmul.f32 %v467, %v1844
    %v1984 = vmul.f32 %v467, %v1845
    %v1987 = vrot.slane %v1983, 2
    %v1988 = vrot.slane %v1984, 2
    %v1991 = vadd.f32 %v1981, %v1987
    %v1992 = vadd.f32 %v1982, %v1988
    %v1993 = vmul.f32 %v478, %v1784
    %v1994 = vmul.f32 %v478, %v1785
    %v1995 = vmul.f32 %v481, %v1810
    %v1996 = vmul.f32 %v481, %v1811
    %v1997 = vadd.f32 %v1993, %v1995
    %v1998 = vadd.f32 %v1994, %v1996
    %v1999 = vmul.f32 %v486, %v1836
    %v2000 = vmul.f32 %v486, %v1837
    %v2001 = vadd.f32 %v1997, %v1999
    %v2002 = vadd.f32 %v1998, %v2000
    %v2003 = vmul.f32 %v491, %v1758
    %v2004 = vmul.f32 %v491, %v1759
    %v2005 = vadd.f32 %v2001, %v2003
    %v2006 = vadd.f32 %v2002, %v2004
    %v2007 = vmul.f32 %v496, %v1731
    %2009 = vst [vmem:[#allocation1] ss:$2 sm:$0xff] %v2007
    %v2010 = vld.sshfl [vmem:[#allocation1] sm:$0xff pattern:$0x75316420]
    %v2011 = vld.sshfl [vmem:[#allocation1 + $0x8] sm:$0xff pattern:$0x75316420]
    %v2014 = vadd.f32 %v2005, %v2010
    %v2015 = vadd.f32 %v2006, %v2011
    %v2016 = vmul.f32 %v506, %v1776
    %v2017 = vmul.f32 %v506, %v1777
    %v2018 = vadd.f32 %v2014, %v2016
    %v2019 = vadd.f32 %v2015, %v2017
    %v2020 = vmul.f32 %v511, %v1792
    %v2021 = vmul.f32 %v511, %v1793
    %v2022 = vadd.f32 %v2018, %v2020
    %v2023 = vadd.f32 %v2019, %v2021
    %v2024 = vmul.f32 %v516, %v1828
    %v2025 = vmul.f32 %v516, %v1829
    %v2026 = vadd.f32 %v2022, %v2024
    %v2027 = vadd.f32 %v2023, %v2025
    %v2028 = vmul.f32 %v521, %v1844
    %v2029 = vmul.f32 %v521, %v1845
    %v2030 = vadd.f32 %v2026, %v2028
    %v2031 = vadd.f32 %v2027, %v2029
    %v2032 = vmul.f32 %v526, %v1784
    %v2033 = vmul.f32 %v526, %v1785
    %v2036 = vrot.slane %v2032, 2
    %v2037 = vrot.slane %v2033, 2
    %v2040 = vadd.f32 %v2030, %v2036
    %v2041 = vadd.f32 %v2031, %v2037
    %v2042 = vmul.f32 %v537, %v1810
    %v2043 = vmul.f32 %v537, %v1811
    %v2046 = vrot.slane %v2042, 2
    %v2047 = vrot.slane %v2043, 2
    %v2050 = vadd.f32 %v2040, %v2046
    %v2051 = vadd.f32 %v2041, %v2047
    %v2052 = vmul.f32 %v548, %v1836
    %v2053 = vmul.f32 %v548, %v1837
    %v2056 = vrot.slane %v2052, 2
    %v2057 = vrot.slane %v2053, 2
    %v2060 = vadd.f32 %v2050, %v2056
    %v2061 = vadd.f32 %v2051, %v2057
    %v2062 = vmul.f32 %v559, %v1758
    %v2063 = vmul.f32 %v559, %v1759
    %v2066 = vrot.slane %v2062, 2
    %v2067 = vrot.slane %v2063, 2
    %v2070 = vadd.f32 %v2060, %v2066
    %v2071 = vadd.f32 %v2061, %v2067
    %v2072 = vmul.f32 %v570, %v1731
    %2074 = vst [vmem:[#allocation1] ss:$2 sm:$0xff] %v2072
    %v2075 = vld.sshfl [vmem:[#allocation1] sm:$0xff pattern:$0x75316420]
    %v2076 = vld.sshfl [vmem:[#allocation1 + $0x8] sm:$0xff pattern:$0x75316420]
    %v2077 = vrot.slane %v2075, 2
    %v2078 = vrot.slane %v2076, 2
    %v2081 = vadd.f32 %v2070, %v2077
    %v2082 = vadd.f32 %v2071, %v2078
    %v2083 = vmul.f32 %v582, %v1776
    %v2084 = vmul.f32 %v582, %v1777
    %v2087 = vrot.slane %v2083, 2
    %v2088 = vrot.slane %v2084, 2
    %v2091 = vadd.f32 %v2081, %v2087
    %v2092 = vadd.f32 %v2082, %v2088
    %v2093 = vmul.f32 %v593, %v1792
    %v2094 = vmul.f32 %v593, %v1793
    %v2097 = vrot.slane %v2093, 2
    %v2098 = vrot.slane %v2094, 2
    %v2101 = vadd.f32 %v2091, %v2097
    %v2102 = vadd.f32 %v2092, %v2098
    %v2103 = vmul.f32 %v604, %v1828
    %v2104 = vmul.f32 %v604, %v1829
    %v2107 = vrot.slane %v2103, 2
    %v2108 = vrot.slane %v2104, 2
    %v2111 = vadd.f32 %v2101, %v2107
    %v2112 = vadd.f32 %v2102, %v2108
    %v2113 = vmul.f32 %v615, %v1844
    %v2114 = vmul.f32 %v615, %v1845
    %v2117 = vrot.slane %v2113, 2
    %v2118 = vrot.slane %v2114, 2
    %v2121 = vadd.f32 %v2111, %v2117
    %v2122 = vadd.f32 %v2112, %v2118
    %v2123 = vmul.f32 %v626, %v1784
    %v2124 = vmul.f32 %v626, %v1785
    %v2125 = vmul.f32 %v629, %v1810
    %v2126 = vmul.f32 %v629, %v1811
    %v2127 = vadd.f32 %v2123, %v2125
    %v2128 = vadd.f32 %v2124, %v2126
    %v2129 = vmul.f32 %v634, %v1836
    %v2130 = vmul.f32 %v634, %v1837
    %v2131 = vadd.f32 %v2127, %v2129
    %v2132 = vadd.f32 %v2128, %v2130
    %v2133 = vmul.f32 %v639, %v1758
    %v2134 = vmul.f32 %v639, %v1759
    %v2135 = vadd.f32 %v2131, %v2133
    %v2136 = vadd.f32 %v2132, %v2134
    %v2137 = vmul.f32 %v644, %v1731
    %2139 = vst [vmem:[#allocation1] ss:$2 sm:$0xff] %v2137
    %v2140 = vld.sshfl [vmem:[#allocation1] sm:$0xff pattern:$0x75316420]
    %v2141 = vld.sshfl [vmem:[#allocation1 + $0x8] sm:$0xff pattern:$0x75316420]
    %v2144 = vadd.f32 %v2135, %v2140
    %v2145 = vadd.f32 %v2136, %v2141
    %v2146 = vmul.f32 %v654, %v1776
    %v2147 = vmul.f32 %v654, %v1777
    %v2148 = vadd.f32 %v2144, %v2146
    %v2149 = vadd.f32 %v2145, %v2147
    %v2150 = vmul.f32 %v659, %v1792
    %v2151 = vmul.f32 %v659, %v1793
    %v2152 = vadd.f32 %v2148, %v2150
    %v2153 = vadd.f32 %v2149, %v2151
    %v2154 = vmul.f32 %v664, %v1828
    %v2155 = vmul.f32 %v664, %v1829
    %v2156 = vadd.f32 %v2152, %v2154
    %v2157 = vadd.f32 %v2153, %v2155
    %v2158 = vmul.f32 %v669, %v1844
    %v2159 = vmul.f32 %v669, %v1845
    %v2160 = vadd.f32 %v2156, %v2158
    %v2161 = vadd.f32 %v2157, %v2159
    %v2162 = vmul.f32 %v674, %v1784
    %v2163 = vmul.f32 %v674, %v1785
    %v2166 = vrot.slane %v2162, 2
    %v2167 = vrot.slane %v2163, 2
    %v2170 = vadd.f32 %v2160, %v2166
    %v2171 = vadd.f32 %v2161, %v2167
    %v2172 = vmul.f32 %v685, %v1810
    %v2173 = vmul.f32 %v685, %v1811
    %v2176 = vrot.slane %v2172, 2
    %v2177 = vrot.slane %v2173, 2
    %v2180 = vadd.f32 %v2170, %v2176
    %v2181 = vadd.f32 %v2171, %v2177
    %v2182 = vmul.f32 %v696, %v1836
    %v2183 = vmul.f32 %v696, %v1837
    %v2186 = vrot.slane %v2182, 2
    %v2187 = vrot.slane %v2183, 2
    %v2190 = vadd.f32 %v2180, %v2186
    %v2191 = vadd.f32 %v2181, %v2187
    %v2192 = vmul.f32 %v707, %v1758
    %v2193 = vmul.f32 %v707, %v1759
    %v2196 = vrot.slane %v2192, 2
    %v2197 = vrot.slane %v2193, 2
    %v2200 = vadd.f32 %v2190, %v2196
    %v2201 = vadd.f32 %v2191, %v2197
    %v2202 = vmul.f32 %v718, %v1731
    %2204 = vst [vmem:[#allocation1] ss:$2 sm:$0xff] %v2202
    %v2205 = vld.sshfl [vmem:[#allocation1] sm:$0xff pattern:$0x75316420]
    %v2206 = vld.sshfl [vmem:[#allocation1 + $0x8] sm:$0xff pattern:$0x75316420]
    %v2207 = vrot.slane %v2205, 2
    %v2208 = vrot.slane %v2206, 2
    %v2211 = vadd.f32 %v2200, %v2207
    %v2212 = vadd.f32 %v2201, %v2208
    %v2213 = vmul.f32 %v730, %v1776
    %v2214 = vmul.f32 %v730, %v1777
    %v2217 = vrot.slane %v2213, 2
    %v2218 = vrot.slane %v2214, 2
    %v2221 = vadd.f32 %v2211, %v2217
    %v2222 = vadd.f32 %v2212, %v2218
    %v2223 = vmul.f32 %v741, %v1792
    %v2224 = vmul.f32 %v741, %v1793
    %v2227 = vrot.slane %v2223, 2
    %v2228 = vrot.slane %v2224, 2
    %v2231 = vadd.f32 %v2221, %v2227
    %v2232 = vadd.f32 %v2222, %v2228
    %v2233 = vmul.f32 %v752, %v1828
    %v2234 = vmul.f32 %v752, %v1829
    %v2237 = vrot.slane %v2233, 2
    %v2238 = vrot.slane %v2234, 2
    %v2241 = vadd.f32 %v2231, %v2237
    %v2242 = vadd.f32 %v2232, %v2238
    %v2243 = vmul.f32 %v763, %v1844
    %v2244 = vmul.f32 %v763, %v1845
    %v2247 = vrot.slane %v2243, 2
    %v2248 = vrot.slane %v2244, 2
    %v2251 = vadd.f32 %v2241, %v2247
    %v2252 = vadd.f32 %v2242, %v2248
    %v2253 = vmul.f32 %v774, %v1784
    %v2254 = vmul.f32 %v774, %v1785
    %v2255 = vmul.f32 %v777, %v1810
    %v2256 = vmul.f32 %v777, %v1811
    %v2257 = vadd.f32 %v2253, %v2255
    %v2258 = vadd.f32 %v2254, %v2256
    %v2259 = vmul.f32 %v782, %v1836
    %v2260 = vmul.f32 %v782, %v1837
    %v2261 = vadd.f32 %v2257, %v2259
    %v2262 = vadd.f32 %v2258, %v2260
    %v2263 = vmul.f32 %v787, %v1758
    %v2264 = vmul.f32 %v787, %v1759
    %v2265 = vadd.f32 %v2261, %v2263
    %v2266 = vadd.f32 %v2262, %v2264
    %v2267 = vmul.f32 %v792, %v1731
    %2269 = vst [vmem:[#allocation1] ss:$2 sm:$0xff] %v2267
    %v2270 = vld.sshfl [vmem:[#allocation1] sm:$0xff pattern:$0x75316420]
    %v2271 = vld.sshfl [vmem:[#allocation1 + $0x8] sm:$0xff pattern:$0x75316420]
    %v2274 = vadd.f32 %v2265, %v2270
    %v2275 = vadd.f32 %v2266, %v2271
    %v2276 = vmul.f32 %v802, %v1776
    %v2277 = vmul.f32 %v802, %v1777
    %v2278 = vadd.f32 %v2274, %v2276
    %v2279 = vadd.f32 %v2275, %v2277
    %v2280 = vmul.f32 %v807, %v1792
    %v2281 = vmul.f32 %v807, %v1793
    %v2282 = vadd.f32 %v2278, %v2280
    %v2283 = vadd.f32 %v2279, %v2281
    %v2284 = vmul.f32 %v812, %v1828
    %v2285 = vmul.f32 %v812, %v1829
    %v2286 = vadd.f32 %v2282, %v2284
    %v2287 = vadd.f32 %v2283, %v2285
    %v2288 = vmul.f32 %v817, %v1844
    %v2289 = vmul.f32 %v817, %v1845
    %v2290 = vadd.f32 %v2286, %v2288
    %v2291 = vadd.f32 %v2287, %v2289
    %v2292 = vmul.f32 %v822, %v1784
    %v2293 = vmul.f32 %v822, %v1785
    %v2296 = vrot.slane %v2292, 2
    %v2297 = vrot.slane %v2293, 2
    %v2300 = vadd.f32 %v2290, %v2296
    %v2301 = vadd.f32 %v2291, %v2297
    %v2302 = vmul.f32 %v833, %v1810
    %v2303 = vmul.f32 %v833, %v1811
    %v2306 = vrot.slane %v2302, 2
    %v2307 = vrot.slane %v2303, 2
    %v2310 = vadd.f32 %v2300, %v2306
    %v2311 = vadd.f32 %v2301, %v2307
    %v2312 = vmul.f32 %v844, %v1836
    %v2313 = vmul.f32 %v844, %v1837
    %v2316 = vrot.slane %v2312, 2
    %v2317 = vrot.slane %v2313, 2
    %v2320 = vadd.f32 %v2310, %v2316
    %v2321 = vadd.f32 %v2311, %v2317
    %v2322 = vmul.f32 %v855, %v1758
    %v2323 = vmul.f32 %v855, %v1759
    %v2326 = vrot.slane %v2322, 2
    %v2327 = vrot.slane %v2323, 2
    %v2330 = vadd.f32 %v2320, %v2326
    %v2331 = vadd.f32 %v2321, %v2327
    %v2332 = vmul.f32 %v866, %v1731
    %2334 = vst [vmem:[#allocation1] ss:$2 sm:$0xff] %v2332
    %v2335 = vld.sshfl [vmem:[#allocation1] sm:$0xff pattern:$0x75316420]
    %v2336 = vld.sshfl [vmem:[#allocation1 + $0x8] sm:$0xff pattern:$0x75316420]
    %v2337 = vrot.slane %v2335, 2
    %v2338 = vrot.slane %v2336, 2
    %v2341 = vadd.f32 %v2330, %v2337
    %v2342 = vadd.f32 %v2331, %v2338
    %v2343 = vmul.f32 %v878, %v1776
    %v2344 = vmul.f32 %v878, %v1777
    %v2347 = vrot.slane %v2343, 2
    %v2348 = vrot.slane %v2344, 2
    %v2351 = vadd.f32 %v2341, %v2347
    %v2352 = vadd.f32 %v2342, %v2348
    %v2353 = vmul.f32 %v889, %v1792
    %v2354 = vmul.f32 %v889, %v1793
    %v2357 = vrot.slane %v2353, 2
    %v2358 = vrot.slane %v2354, 2
    %v2361 = vadd.f32 %v2351, %v2357
    %v2362 = vadd.f32 %v2352, %v2358
    %v2363 = vmul.f32 %v900, %v1828
    %v2364 = vmul.f32 %v900, %v1829
    %v2367 = vrot.slane %v2363, 2
    %v2368 = vrot.slane %v2364, 2
    %v2371 = vadd.f32 %v2361, %v2367
    %v2372 = vadd.f32 %v2362, %v2368
    %v2373 = vmul.f32 %v911, %v1844
    %v2374 = vmul.f32 %v911, %v1845
    %v2377 = vrot.slane %v2373, 2
    %v2378 = vrot.slane %v2374, 2
    %v2381 = vadd.f32 %v2371, %v2377
    %v2382 = vadd.f32 %v2372, %v2378
    %v2385 = vrot.slane %v2121, 6
    %v2386 = vrot.slane %v2122, 6
    %v2391 = vrot.slane %v2251, 4
    %v2392 = vrot.slane %v2252, 4
    %v2397 = vrot.slane %v2381, 2
    %v2398 = vrot.slane %v2382, 2
    %v2401 = vsel %vm940, %v1991, %v2385
    %v2402 = vsel %vm940, %v1992, %v2386
    %v2403 = vsel %vm943, %v2401, %v2391
    %v2404 = vsel %vm943, %v2402, %v2392
    %v2405 = vsel %vm946, %v2403, %v2397
    %v2406 = vsel %vm946, %v2404, %v2398
    %vm2407 = vcmp.ge.f32.partialorder %v2405, 0.0
    %vm2408 = vcmp.ge.f32.partialorder %v2406, 0.0
    %v2409 = vmul.f32 %v2405, 0.01
    %v2410 = vmul.f32 %v2406, 0.01
    %v2411 = vsel %vm2407, %v2405, %v2409
    %v2412 = vsel %vm2408, %v2406, %v2410
    %2413 = vrot.lane.b32.xlu0 %v2411, 1
    %v2414 = vpop.permute.xlu0 %2413
    %2415 = vrot.lane.b32.xlu0 %v2412, 1
    %v2416 = vpop.permute.xlu0 %2415
    %v2417 = vsel %vm209, %v2414, %v2416
    %v2418 = vsel %vm209, %v2416, %v2414
    %v2419 = vsel %vm191, %v2411, %v2418
    %v2420 = vsel %vm192, %v2412, %v2417
    %2421 = vrot.lane.b32.xlu0 %v2411, 127
    %v2422 = vpop.permute.xlu0 %2421
    %2423 = vrot.lane.b32.xlu0 %v2412, 127
    %v2424 = vpop.permute.xlu0 %2423
    %v2425 = vsel %vm228, %v2422, %v2424
    %v2426 = vsel %vm228, %v2424, %v2422
    %v2427 = vsel %vm193, %v2411, %v2425
    %v2428 = vsel %vm194, %v2412, %v2426
    %2429 = vrot.lane.b32.xlu0 %v2419, 16
    %v2430 = vpop.permute.xlu0 %2429
    %2431 = vrot.lane.b32.xlu0 %v2420, 16
    %v2432 = vpop.permute.xlu0 %2431
    %v2433 = vsel %vm242, %v2430, %v2432
    %v2434 = vsel %vm242, %v2432, %v2430
    %v2435 = vsel %vm195, %v2419, %v2434
    %v2436 = vsel %vm196, %v2420, %v2433
    %2437 = vrot.lane.b32.xlu0 %v2419, 112
    %v2438 = vpop.permute.xlu0 %2437
    %2439 = vrot.lane.b32.xlu0 %v2420, 112
    %v2440 = vpop.permute.xlu0 %2439
    %v2441 = vsel %vm251, %v2438, %v2440
    %v2442 = vsel %vm251, %v2440, %v2438
    %v2443 = vsel %vm197, %v2419, %v2441
    %v2444 = vsel %vm198, %v2420, %v2442
    %2445 = vrot.lane.b32.xlu0 %v2411, 16
    %v2446 = vpop.permute.xlu0 %2445
    %2447 = vrot.lane.b32.xlu0 %v2412, 16
    %v2448 = vpop.permute.xlu0 %2447
    %v2449 = vsel %vm242, %v2446, %v2448
    %v2450 = vsel %vm242, %v2448, %v2446
    %v2451 = vsel %vm195, %v2411, %v2450
    %v2452 = vsel %vm196, %v2412, %v2449
    %2453 = vrot.lane.b32.xlu0 %v2411, 112
    %v2454 = vpop.permute.xlu0 %2453
    %2455 = vrot.lane.b32.xlu0 %v2412, 112
    %v2456 = vpop.permute.xlu0 %2455
    %v2457 = vsel %vm251, %v2454, %v2456
    %v2458 = vsel %vm251, %v2456, %v2454
    %v2459 = vsel %vm197, %v2411, %v2457
    %v2460 = vsel %vm198, %v2412, %v2458
    %2461 = vrot.lane.b32.xlu0 %v2427, 16
    %v2462 = vpop.permute.xlu0 %2461
    %2463 = vrot.lane.b32.xlu0 %v2428, 16
    %v2464 = vpop.permute.xlu0 %2463
    %v2465 = vsel %vm242, %v2462, %v2464
    %v2466 = vsel %vm242, %v2464, %v2462
    %v2467 = vsel %vm195, %v2427, %v2466
    %v2468 = vsel %vm196, %v2428, %v2465
    %2469 = vrot.lane.b32.xlu0 %v2427, 112
    %v2470 = vpop.permute.xlu0 %2469
    %2471 = vrot.lane.b32.xlu0 %v2428, 112
    %v2472 = vpop.permute.xlu0 %2471
    %v2473 = vsel %vm251, %v2470, %v2472
    %v2474 = vsel %vm251, %v2472, %v2470
    %v2475 = vsel %vm197, %v2427, %v2473
    %v2476 = vsel %vm198, %v2428, %v2474
    %v2477 = vmul.f32 %v1019, %v2435
    %v2478 = vmul.f32 %v1019, %v2436
    %v2479 = vmul.f32 %v1022, %v2451
    %v2480 = vmul.f32 %v1022, %v2452
    %v2481 = vadd.f32 %v2477, %v2479
    %v2482 = vadd.f32 %v2478, %v2480
    %v2483 = vmul.f32 %v1027, %v2467
    %v2484 = vmul.f32 %v1027, %v2468
    %v2485 = vadd.f32 %v2481, %v2483
    %v2486 = vadd.f32 %v2482, %v2484
    %v2487 = vmul.f32 %v1032, %v2419
    %v2488 = vmul.f32 %v1032, %v2420
    %v2489 = vadd.f32 %v2485, %v2487
    %v2490 = vadd.f32 %v2486, %v2488
    %v2491 = vmul.f32 %v1037, %v2411
    %v2492 = vmul.f32 %v1037, %v2412
    %v2493 = vadd.f32 %v2489, %v2491
    %v2494 = vadd.f32 %v2490, %v2492
    %v2495 = vmul.f32 %v1042, %v2427
    %v2496 = vmul.f32 %v1042, %v2428
    %v2497 = vadd.f32 %v2493, %v2495
    %v2498 = vadd.f32 %v2494, %v2496
    %v2499 = vmul.f32 %v1047, %v2443
    %v2500 = vmul.f32 %v1047, %v2444
    %v2501 = vadd.f32 %v2497, %v2499
    %v2502 = vadd.f32 %v2498, %v2500
    %v2503 = vmul.f32 %v1052, %v2459
    %v2504 = vmul.f32 %v1052, %v2460
    %v2505 = vadd.f32 %v2501, %v2503
    %v2506 = vadd.f32 %v2502, %v2504
    %v2507 = vmul.f32 %v1057, %v2475
    %v2508 = vmul.f32 %v1057, %v2476
    %v2509 = vadd.f32 %v2505, %v2507
    %v2510 = vadd.f32 %v2506, %v2508
    %v2511 = vmul.f32 %v1062, %v2435
    %v2512 = vmul.f32 %v1062, %v2436
    %v2515 = vrot.slane %v2511, 2
    %v2516 = vrot.slane %v2512, 2
    %v2519 = vadd.f32 %v2509, %v2515
    %v2520 = vadd.f32 %v2510, %v2516
    %v2521 = vmul.f32 %v1073, %v2451
    %v2522 = vmul.f32 %v1073, %v2452
    %v2525 = vrot.slane %v2521, 2
    %v2526 = vrot.slane %v2522, 2
    %v2529 = vadd.f32 %v2519, %v2525
    %v2530 = vadd.f32 %v2520, %v2526
    %v2531 = vmul.f32 %v1084, %v2467
    %v2532 = vmul.f32 %v1084, %v2468
    %v2535 = vrot.slane %v2531, 2
    %v2536 = vrot.slane %v2532, 2
    %v2539 = vadd.f32 %v2529, %v2535
    %v2540 = vadd.f32 %v2530, %v2536
    %v2541 = vmul.f32 %v1095, %v2419
    %v2542 = vmul.f32 %v1095, %v2420
    %v2545 = vrot.slane %v2541, 2
    %v2546 = vrot.slane %v2542, 2
    %v2549 = vadd.f32 %v2539, %v2545
    %v2550 = vadd.f32 %v2540, %v2546
    %v2551 = vmul.f32 %v1106, %v2411
    %v2552 = vmul.f32 %v1106, %v2412
    %v2555 = vrot.slane %v2551, 2
    %v2556 = vrot.slane %v2552, 2
    %v2559 = vadd.f32 %v2549, %v2555
    %v2560 = vadd.f32 %v2550, %v2556
    %v2561 = vmul.f32 %v1117, %v2427
    %v2562 = vmul.f32 %v1117, %v2428
    %v2565 = vrot.slane %v2561, 2
    %v2566 = vrot.slane %v2562, 2
    %v2569 = vadd.f32 %v2559, %v2565
    %v2570 = vadd.f32 %v2560, %v2566
    %v2571 = vmul.f32 %v1128, %v2443
    %v2572 = vmul.f32 %v1128, %v2444
    %v2575 = vrot.slane %v2571, 2
    %v2576 = vrot.slane %v2572, 2
    %v2579 = vadd.f32 %v2569, %v2575
    %v2580 = vadd.f32 %v2570, %v2576
    %v2581 = vmul.f32 %v1139, %v2459
    %v2582 = vmul.f32 %v1139, %v2460
    %v2585 = vrot.slane %v2581, 2
    %v2586 = vrot.slane %v2582, 2
    %v2589 = vadd.f32 %v2579, %v2585
    %v2590 = vadd.f32 %v2580, %v2586
    %v2591 = vmul.f32 %v1150, %v2475
    %v2592 = vmul.f32 %v1150, %v2476
    %v2595 = vrot.slane %v2591, 2
    %v2596 = vrot.slane %v2592, 2
    %v2599 = vadd.f32 %v2589, %v2595
    %v2600 = vadd.f32 %v2590, %v2596
    %v2601 = vmul.f32 %v1161, %v2435
    %v2602 = vmul.f32 %v1161, %v2436
    %v2605 = vrot.slane %v2601, 4
    %v2606 = vrot.slane %v2602, 4
    %v2609 = vadd.f32 %v2599, %v2605
    %v2610 = vadd.f32 %v2600, %v2606
    %v2611 = vmul.f32 %v1172, %v2451
    %v2612 = vmul.f32 %v1172, %v2452
    %v2615 = vrot.slane %v2611, 4
    %v2616 = vrot.slane %v2612, 4
    %v2619 = vadd.f32 %v2609, %v2615
    %v2620 = vadd.f32 %v2610, %v2616
    %v2621 = vmul.f32 %v1183, %v2467
    %v2622 = vmul.f32 %v1183, %v2468
    %v2625 = vrot.slane %v2621, 4
    %v2626 = vrot.slane %v2622, 4
    %v2629 = vadd.f32 %v2619, %v2625
    %v2630 = vadd.f32 %v2620, %v2626
    %v2631 = vmul.f32 %v1194, %v2419
    %v2632 = vmul.f32 %v1194, %v2420
    %v2635 = vrot.slane %v2631, 4
    %v2636 = vrot.slane %v2632, 4
    %v2639 = vadd.f32 %v2629, %v2635
    %v2640 = vadd.f32 %v2630, %v2636
    %v2641 = vmul.f32 %v1205, %v2411
    %v2642 = vmul.f32 %v1205, %v2412
    %v2645 = vrot.slane %v2641, 4
    %v2646 = vrot.slane %v2642, 4
    %v2649 = vadd.f32 %v2639, %v2645
    %v2650 = vadd.f32 %v2640, %v2646
    %v2651 = vmul.f32 %v1216, %v2427
    %v2652 = vmul.f32 %v1216, %v2428
    %v2655 = vrot.slane %v2651, 4
    %v2656 = vrot.slane %v2652, 4
    %v2659 = vadd.f32 %v2649, %v2655
    %v2660 = vadd.f32 %v2650, %v2656
    %v2661 = vmul.f32 %v1227, %v2443
    %v2662 = vmul.f32 %v1227, %v2444
    %v2665 = vrot.slane %v2661, 4
    %v2666 = vrot.slane %v2662, 4
    %v2669 = vadd.f32 %v2659, %v2665
    %v2670 = vadd.f32 %v2660, %v2666
    %v2671 = vmul.f32 %v1238, %v2459
    %v2672 = vmul.f32 %v1238, %v2460
    %v2675 = vrot.slane %v2671, 4
    %v2676 = vrot.slane %v2672, 4
    %v2679 = vadd.f32 %v2669, %v2675
    %v2680 = vadd.f32 %v2670, %v2676
    %v2681 = vmul.f32 %v1249, %v2475
    %v2682 = vmul.f32 %v1249, %v2476
    %v2685 = vrot.slane %v2681, 4
    %v2686 = vrot.slane %v2682, 4
    %v2689 = vadd.f32 %v2679, %v2685
    %v2690 = vadd.f32 %v2680, %v2686
    %v2691 = vmul.f32 %v1260, %v2435
    %v2692 = vmul.f32 %v1260, %v2436
    %v2695 = vrot.slane %v2691, 6
    %v2696 = vrot.slane %v2692, 6
    %v2699 = vadd.f32 %v2689, %v2695
    %v2700 = vadd.f32 %v2690, %v2696
    %v2701 = vmul.f32 %v1271, %v2451
    %v2702 = vmul.f32 %v1271, %v2452
    %v2705 = vrot.slane %v2701, 6
    %v2706 = vrot.slane %v2702, 6
    %v2709 = vadd.f32 %v2699, %v2705
    %v2710 = vadd.f32 %v2700, %v2706
    %v2711 = vmul.f32 %v1282, %v2467
    %v2712 = vmul.f32 %v1282, %v2468
    %v2715 = vrot.slane %v2711, 6
    %v2716 = vrot.slane %v2712, 6
    %v2719 = vadd.f32 %v2709, %v2715
    %v2720 = vadd.f32 %v2710, %v2716
    %v2721 = vmul.f32 %v1293, %v2419
    %v2722 = vmul.f32 %v1293, %v2420
    %v2725 = vrot.slane %v2721, 6
    %v2726 = vrot.slane %v2722, 6
    %v2729 = vadd.f32 %v2719, %v2725
    %v2730 = vadd.f32 %v2720, %v2726
    %v2731 = vmul.f32 %v1304, %v2411
    %v2732 = vmul.f32 %v1304, %v2412
    %v2735 = vrot.slane %v2731, 6
    %v2736 = vrot.slane %v2732, 6
    %v2739 = vadd.f32 %v2729, %v2735
    %v2740 = vadd.f32 %v2730, %v2736
    %v2741 = vmul.f32 %v1315, %v2427
    %v2742 = vmul.f32 %v1315, %v2428
    %v2745 = vrot.slane %v2741, 6
    %v2746 = vrot.slane %v2742, 6
    %v2749 = vadd.f32 %v2739, %v2745
    %v2750 = vadd.f32 %v2740, %v2746
    %v2751 = vmul.f32 %v1326, %v2443
    %v2752 = vmul.f32 %v1326, %v2444
    %v2755 = vrot.slane %v2751, 6
    %v2756 = vrot.slane %v2752, 6
    %v2759 = vadd.f32 %v2749, %v2755
    %v2760 = vadd.f32 %v2750, %v2756
    %v2761 = vmul.f32 %v1337, %v2459
    %v2762 = vmul.f32 %v1337, %v2460
    %v2765 = vrot.slane %v2761, 6
    %v2766 = vrot.slane %v2762, 6
    %v2769 = vadd.f32 %v2759, %v2765
    %v2770 = vadd.f32 %v2760, %v2766
    %v2771 = vmul.f32 %v1348, %v2475
    %v2772 = vmul.f32 %v1348, %v2476
    %v2775 = vrot.slane %v2771, 6
    %v2776 = vrot.slane %v2772, 6
    %v2779 = vadd.f32 %v2769, %v2775
    %v2780 = vadd.f32 %v2770, %v2776
    %v2781 = vmul.f32 %v1359, %v2435
    %v2782 = vmul.f32 %v1359, %v2436
    %v2783 = vmul.f32 %v1362, %v2451
    %v2784 = vmul.f32 %v1362, %v2452
    %v2785 = vadd.f32 %v2781, %v2783
    %v2786 = vadd.f32 %v2782, %v2784
    %v2787 = vmul.f32 %v1367, %v2467
    %v2788 = vmul.f32 %v1367, %v2468
    %v2789 = vadd.f32 %v2785, %v2787
    %v2790 = vadd.f32 %v2786, %v2788
    %v2791 = vmul.f32 %v1372, %v2419
    %v2792 = vmul.f32 %v1372, %v2420
    %v2793 = vadd.f32 %v2789, %v2791
    %v2794 = vadd.f32 %v2790, %v2792
    %v2795 = vmul.f32 %v1377, %v2411
    %v2796 = vmul.f32 %v1377, %v2412
    %v2797 = vadd.f32 %v2793, %v2795
    %v2798 = vadd.f32 %v2794, %v2796
    %v2799 = vmul.f32 %v1382, %v2427
    %v2800 = vmul.f32 %v1382, %v2428
    %v2801 = vadd.f32 %v2797, %v2799
    %v2802 = vadd.f32 %v2798, %v2800
    %v2803 = vmul.f32 %v1387, %v2443
    %v2804 = vmul.f32 %v1387, %v2444
    %v2805 = vadd.f32 %v2801, %v2803
    %v2806 = vadd.f32 %v2802, %v2804
    %v2807 = vmul.f32 %v1392, %v2459
    %v2808 = vmul.f32 %v1392, %v2460
    %v2809 = vadd.f32 %v2805, %v2807
    %v2810 = vadd.f32 %v2806, %v2808
    %v2811 = vmul.f32 %v1397, %v2475
    %v2812 = vmul.f32 %v1397, %v2476
    %v2813 = vadd.f32 %v2809, %v2811
    %v2814 = vadd.f32 %v2810, %v2812
    %v2815 = vmul.f32 %v1402, %v2435
    %v2816 = vmul.f32 %v1402, %v2436
    %v2819 = vrot.slane %v2815, 2
    %v2820 = vrot.slane %v2816, 2
    %v2823 = vadd.f32 %v2813, %v2819
    %v2824 = vadd.f32 %v2814, %v2820
    %v2825 = vmul.f32 %v1413, %v2451
    %v2826 = vmul.f32 %v1413, %v2452
    %v2829 = vrot.slane %v2825, 2
    %v2830 = vrot.slane %v2826, 2
    %v2833 = vadd.f32 %v2823, %v2829
    %v2834 = vadd.f32 %v2824, %v2830
    %v2835 = vmul.f32 %v1424, %v2467
    %v2836 = vmul.f32 %v1424, %v2468
    %v2839 = vrot.slane %v2835, 2
    %v2840 = vrot.slane %v2836, 2
    %v2843 = vadd.f32 %v2833, %v2839
    %v2844 = vadd.f32 %v2834, %v2840
    %v2845 = vmul.f32 %v1435, %v2419
    %v2846 = vmul.f32 %v1435, %v2420
    %v2849 = vrot.slane %v2845, 2
    %v2850 = vrot.slane %v2846, 2
    %v2853 = vadd.f32 %v2843, %v2849
    %v2854 = vadd.f32 %v2844, %v2850
    %v2855 = vmul.f32 %v1446, %v2411
    %v2856 = vmul.f32 %v1446, %v2412
    %v2859 = vrot.slane %v2855, 2
    %v2860 = vrot.slane %v2856, 2
    %v2863 = vadd.f32 %v2853, %v2859
    %v2864 = vadd.f32 %v2854, %v2860
    %v2865 = vmul.f32 %v1457, %v2427
    %v2866 = vmul.f32 %v1457, %v2428
    %v2869 = vrot.slane %v2865, 2
    %v2870 = vrot.slane %v2866, 2
    %v2873 = vadd.f32 %v2863, %v2869
    %v2874 = vadd.f32 %v2864, %v2870
    %v2875 = vmul.f32 %v1468, %v2443
    %v2876 = vmul.f32 %v1468, %v2444
    %v2879 = vrot.slane %v2875, 2
    %v2880 = vrot.slane %v2876, 2
    %v2883 = vadd.f32 %v2873, %v2879
    %v2884 = vadd.f32 %v2874, %v2880
    %v2885 = vmul.f32 %v1479, %v2459
    %v2886 = vmul.f32 %v1479, %v2460
    %v2889 = vrot.slane %v2885, 2
    %v2890 = vrot.slane %v2886, 2
    %v2893 = vadd.f32 %v2883, %v2889
    %v2894 = vadd.f32 %v2884, %v2890
    %v2895 = vmul.f32 %v1490, %v2475
    %v2896 = vmul.f32 %v1490, %v2476
    %v2899 = vrot.slane %v2895, 2
    %v2900 = vrot.slane %v2896, 2
    %v2903 = vadd.f32 %v2893, %v2899
    %v2904 = vadd.f32 %v2894, %v2900
    %v2905 = vmul.f32 %v1501, %v2435
    %v2906 = vmul.f32 %v1501, %v2436
    %v2909 = vrot.slane %v2905, 4
    %v2910 = vrot.slane %v2906, 4
    %v2913 = vadd.f32 %v2903, %v2909
    %v2914 = vadd.f32 %v2904, %v2910
    %v2915 = vmul.f32 %v1512, %v2451
    %v2916 = vmul.f32 %v1512, %v2452
    %v2919 = vrot.slane %v2915, 4
    %v2920 = vrot.slane %v2916, 4
    %v2923 = vadd.f32 %v2913, %v2919
    %v2924 = vadd.f32 %v2914, %v2920
    %v2925 = vmul.f32 %v1523, %v2467
    %v2926 = vmul.f32 %v1523, %v2468
    %v2929 = vrot.slane %v2925, 4
    %v2930 = vrot.slane %v2926, 4
    %v2933 = vadd.f32 %v2923, %v2929
    %v2934 = vadd.f32 %v2924, %v2930
    %v2935 = vmul.f32 %v1534, %v2419
    %v2936 = vmul.f32 %v1534, %v2420
    %v2939 = vrot.slane %v2935, 4
    %v2940 = vrot.slane %v2936, 4
    %v2943 = vadd.f32 %v2933, %v2939
    %v2944 = vadd.f32 %v2934, %v2940
    %v2945 = vmul.f32 %v1545, %v2411
    %v2946 = vmul.f32 %v1545, %v2412
    %v2949 = vrot.slane %v2945, 4
    %v2950 = vrot.slane %v2946, 4
    %v2953 = vadd.f32 %v2943, %v2949
    %v2954 = vadd.f32 %v2944, %v2950
    %v2955 = vmul.f32 %v1556, %v2427
    %v2956 = vmul.f32 %v1556, %v2428
    %v2959 = vrot.slane %v2955, 4
    %v2960 = vrot.slane %v2956, 4
    %v2963 = vadd.f32 %v2953, %v2959
    %v2964 = vadd.f32 %v2954, %v2960
    %v2965 = vmul.f32 %v1567, %v2443
    %v2966 = vmul.f32 %v1567, %v2444
    %v2969 = vrot.slane %v2965, 4
    %v2970 = vrot.slane %v2966, 4
    %v2973 = vadd.f32 %v2963, %v2969
    %v2974 = vadd.f32 %v2964, %v2970
    %v2975 = vmul.f32 %v1578, %v2459
    %v2976 = vmul.f32 %v1578, %v2460
    %v2979 = vrot.slane %v2975, 4
    %v2980 = vrot.slane %v2976, 4
    %v2983 = vadd.f32 %v2973, %v2979
    %v2984 = vadd.f32 %v2974, %v2980
    %v2985 = vmul.f32 %v1589, %v2475
    %v2986 = vmul.f32 %v1589, %v2476
    %v2989 = vrot.slane %v2985, 4
    %v2990 = vrot.slane %v2986, 4
    %v2993 = vadd.f32 %v2983, %v2989
    %v2994 = vadd.f32 %v2984, %v2990
    %v2995 = vmul.f32 %v1600, %v2435
    %v2996 = vmul.f32 %v1600, %v2436
    %v2999 = vrot.slane %v2995, 6
    %v3000 = vrot.slane %v2996, 6
    %v3003 = vadd.f32 %v2993, %v2999
    %v3004 = vadd.f32 %v2994, %v3000
    %v3005 = vmul.f32 %v1611, %v2451
    %v3006 = vmul.f32 %v1611, %v2452
    %v3009 = vrot.slane %v3005, 6
    %v3010 = vrot.slane %v3006, 6
    %v3013 = vadd.f32 %v3003, %v3009
    %v3014 = vadd.f32 %v3004, %v3010
    %v3015 = vmul.f32 %v1622, %v2467
    %v3016 = vmul.f32 %v1622, %v2468
    %v3019 = vrot.slane %v3015, 6
    %v3020 = vrot.slane %v3016, 6
    %v3023 = vadd.f32 %v3013, %v3019
    %v3024 = vadd.f32 %v3014, %v3020
    %v3025 = vmul.f32 %v1633, %v2419
    %v3026 = vmul.f32 %v1633, %v2420
    %v3029 = vrot.slane %v3025, 6
    %v3030 = vrot.slane %v3026, 6
    %v3033 = vadd.f32 %v3023, %v3029
    %v3034 = vadd.f32 %v3024, %v3030
    %v3035 = vmul.f32 %v1644, %v2411
    %v3036 = vmul.f32 %v1644, %v2412
    %v3039 = vrot.slane %v3035, 6
    %v3040 = vrot.slane %v3036, 6
    %v3043 = vadd.f32 %v3033, %v3039
    %v3044 = vadd.f32 %v3034, %v3040
    %v3045 = vmul.f32 %v1655, %v2427
    %v3046 = vmul.f32 %v1655, %v2428
    %v3049 = vrot.slane %v3045, 6
    %v3050 = vrot.slane %v3046, 6
    %v3053 = vadd.f32 %v3043, %v3049
    %v3054 = vadd.f32 %v3044, %v3050
    %v3055 = vmul.f32 %v1666, %v2443
    %v3056 = vmul.f32 %v1666, %v2444
    %v3059 = vrot.slane %v3055, 6
    %v3060 = vrot.slane %v3056, 6
    %v3063 = vadd.f32 %v3053, %v3059
    %v3064 = vadd.f32 %v3054, %v3060
    %v3065 = vmul.f32 %v1677, %v2459
    %v3066 = vmul.f32 %v1677, %v2460
    %v3069 = vrot.slane %v3065, 6
    %v3070 = vrot.slane %v3066, 6
    %v3073 = vadd.f32 %v3063, %v3069
    %v3074 = vadd.f32 %v3064, %v3070
    %v3075 = vmul.f32 %v1688, %v2475
    %v3076 = vmul.f32 %v1688, %v2476
    %v3079 = vrot.slane %v3075, 6
    %v3080 = vrot.slane %v3076, 6
    %v3083 = vadd.f32 %v3073, %v3079
    %v3084 = vadd.f32 %v3074, %v3080
    %v3085 = vadd.f32 %v2779, %v1699
    %v3086 = vadd.f32 %v2780, %v1699
    %v3087 = vadd.f32 %v3083, %v1702
    %v3088 = vadd.f32 %v3084, %v1702
    %v3091 = vrot.slane %v3087, 6
    %v3092 = vrot.slane %v3088, 6
    %v3095 = vsel %vm940, %v3085, %v3091
    %v3096 = vsel %vm940, %v3086, %v3092
    %v3097 = vmul.f32 %v1716, %v1859
    %v3098 = vmul.f32 %v1716, %v1860
    %v3099 = vadd.f32 %v3095, %v3097
    %v3100 = vadd.f32 %v3096, %v3098
    %v3101 = vadd.f32 %v1861, %v3099
    %v3102 = vadd.f32 %v1862, %v3100
    %v3103 = vmul.f32 %v3101, 0.05
    %v3104 = vmul.f32 %v3102, 0.05
    %v3107 = vrot.slane %v3104, 4
    %v3108 = vsel %vm943, %v3103, %v3107
    %v3110 = vadd.f32 %v1731, %v3108
    %s3111 = scalar_lea.vmem %s4, 8
    %3112 = vst [vmem:[%s3111] sm:$0xff] %v3110
    %v3113 = vmul.f32 %v3099, %v3099
    %v3114 = vmul.f32 %v3100, %v3100
    %v3115 = vadd.f32 %v1735, %v3113
    %v3116 = vadd.f32 %v1736, %v3114
    %v3117 = vmul.f32 %v1861, %v3099
    %v3118 = vmul.f32 %v1862, %v3100
    %v3119 = vadd.f32 %v1739, %v3117
    %v3120 = vadd.f32 %v1740, %v3118
    %3122 = vst [vmem:[#allocation1] ss:$2 sm:$0xff] %v3110
    %v3123 = vld.sshfl [vmem:[#allocation1] sm:$0xff pattern:$0x75316420]
    %v3124 = vld.sshfl [vmem:[#allocation1 + $0x8] sm:$0xff pattern:$0x75316420]
    %3127 = vrot.lane.b32.xlu0 %v3123, 1
    %v3128 = vpop.permute.xlu0 %3127
    %3129 = vrot.lane.b32.xlu0 %v3124, 1
    %v3130 = vpop.permute.xlu0 %3129
    %v3131 = vsel %vm209, %v3128, %v3130
    %v3132 = vsel %vm209, %v3130, %v3128
    %3133 = vst [vmem:[#allocation1] ss:$2 sm:$0xff] %v3110
    %v3134 = vld.sshfl [vmem:[#allocation1] sm:$0xff pattern:$0x75316420]
    %v3135 = vld.sshfl [vmem:[#allocation1 + $0x8] sm:$0xff pattern:$0x75316420]
    %v3138 = vsel %vm191, %v3134, %v3132
    %v3139 = vsel %vm192, %v3135, %v3131
    %3140 = vst [vmem:[#allocation1] ss:$2 sm:$0xff] %v3110
    %v3141 = vld.sshfl [vmem:[#allocation1] sm:$0xff pattern:$0x75316420]
    %v3142 = vld.sshfl [vmem:[#allocation1 + $0x8] sm:$0xff pattern:$0x75316420]
    %3145 = vrot.lane.b32.xlu0 %v3141, 127
    %v3146 = vpop.permute.xlu0 %3145
    %3147 = vrot.lane.b32.xlu0 %v3142, 127
    %v3148 = vpop.permute.xlu0 %3147
    %v3149 = vsel %vm228, %v3146, %v3148
    %v3150 = vsel %vm228, %v3148, %v3146
    %3151 = vst [vmem:[#allocation1] ss:$2 sm:$0xff] %v3110
    %v3152 = vld.sshfl [vmem:[#allocation1] sm:$0xff pattern:$0x75316420]
    %v3153 = vld.sshfl [vmem:[#allocation1 + $0x8] sm:$0xff pattern:$0x75316420]
    %v3156 = vsel %vm193, %v3152, %v3149
    %v3157 = vsel %vm194, %v3153, %v3150
    %3158 = vrot.lane.b32.xlu0 %v3138, 16
    %v3159 = vpop.permute.xlu0 %3158
    %3160 = vrot.lane.b32.xlu0 %v3139, 16
    %v3161 = vpop.permute.xlu0 %3160
    %v3162 = vsel %vm242, %v3159, %v3161
    %v3163 = vsel %vm242, %v3161, %v3159
    %v3164 = vsel %vm195, %v3138, %v3163
    %v3165 = vsel %vm196, %v3139, %v3162
    %3166 = vrot.lane.b32.xlu0 %v3138, 112
    %v3167 = vpop.permute.xlu0 %3166
    %3168 = vrot.lane.b32.xlu0 %v3139, 112
    %v3169 = vpop.permute.xlu0 %3168
    %v3170 = vsel %vm251, %v3167, %v3169
    %v3171 = vsel %vm251, %v3169, %v3167
    %v3172 = vsel %vm197, %v3138, %v3170
    %v3173 = vsel %vm198, %v3139, %v3171
    %3174 = vst [vmem:[#allocation1] ss:$2 sm:$0xff] %v3110
    %v3175 = vld.sshfl [vmem:[#allocation1] sm:$0xff pattern:$0x75316420]
    %v3176 = vld.sshfl [vmem:[#allocation1 + $0x8] sm:$0xff pattern:$0x75316420]
    %3179 = vrot.lane.b32.xlu0 %v3175, 16
    %v3180 = vpop.permute.xlu0 %3179
    %3181 = vrot.lane.b32.xlu0 %v3176, 16
    %v3182 = vpop.permute.xlu0 %3181
    %v3183 = vsel %vm242, %v3180, %v3182
    %v3184 = vsel %vm242, %v3182, %v3180
    %3185 = vst [vmem:[#allocation1] ss:$2 sm:$0xff] %v3110
    %v3186 = vld.sshfl [vmem:[#allocation1] sm:$0xff pattern:$0x75316420]
    %v3187 = vld.sshfl [vmem:[#allocation1 + $0x8] sm:$0xff pattern:$0x75316420]
    %v3190 = vsel %vm195, %v3186, %v3184
    %v3191 = vsel %vm196, %v3187, %v3183
    %3192 = vst [vmem:[#allocation1] ss:$2 sm:$0xff] %v3110
    %v3193 = vld.sshfl [vmem:[#allocation1] sm:$0xff pattern:$0x75316420]
    %v3194 = vld.sshfl [vmem:[#allocation1 + $0x8] sm:$0xff pattern:$0x75316420]
    %3197 = vrot.lane.b32.xlu0 %v3193, 112
    %v3198 = vpop.permute.xlu0 %3197
    %3199 = vrot.lane.b32.xlu0 %v3194, 112
    %v3200 = vpop.permute.xlu0 %3199
    %v3201 = vsel %vm251, %v3198, %v3200
    %v3202 = vsel %vm251, %v3200, %v3198
    %3203 = vst [vmem:[#allocation1] ss:$2 sm:$0xff] %v3110
    %v3204 = vld.sshfl [vmem:[#allocation1] sm:$0xff pattern:$0x75316420]
    %v3205 = vld.sshfl [vmem:[#allocation1 + $0x8] sm:$0xff pattern:$0x75316420]
    %v3208 = vsel %vm197, %v3204, %v3201
    %v3209 = vsel %vm198, %v3205, %v3202
    %3210 = vrot.lane.b32.xlu0 %v3156, 16
    %v3211 = vpop.permute.xlu0 %3210
    %3212 = vrot.lane.b32.xlu0 %v3157, 16
    %v3213 = vpop.permute.xlu0 %3212
    %v3214 = vsel %vm242, %v3211, %v3213
    %v3215 = vsel %vm242, %v3213, %v3211
    %v3216 = vsel %vm195, %v3156, %v3215
    %v3217 = vsel %vm196, %v3157, %v3214
    %3218 = vrot.lane.b32.xlu0 %v3156, 112
    %v3219 = vpop.permute.xlu0 %3218
    %3220 = vrot.lane.b32.xlu0 %v3157, 112
    %v3221 = vpop.permute.xlu0 %3220
    %v3222 = vsel %vm251, %v3219, %v3221
    %v3223 = vsel %vm251, %v3221, %v3219
    %v3224 = vsel %vm197, %v3156, %v3222
    %v3225 = vsel %vm198, %v3157, %v3223
    %v3226 = vadd.f32 %v3190, %v3208
    %v3227 = vadd.f32 %v3191, %v3209
    %v3228 = vadd.f32 %v3226, %v3138
    %v3229 = vadd.f32 %v3227, %v3139
    %v3230 = vadd.f32 %v3228, %v3156
    %v3231 = vadd.f32 %v3229, %v3157
    %v3232 = vmul.f32 %v3110, 4.0
    %3234 = vst [vmem:[#allocation1] ss:$2 sm:$0xff] %v3232
    %v3235 = vld.sshfl [vmem:[#allocation1] sm:$0xff pattern:$0x75316420]
    %v3236 = vld.sshfl [vmem:[#allocation1 + $0x8] sm:$0xff pattern:$0x75316420]
    %v3239 = vsub.f32 %v3230, %v3235
    %v3240 = vsub.f32 %v3231, %v3236
    %v3241 = vmul.f32 %v326, %v3239
    %v3242 = vmul.f32 %v326, %v3240
    %v3243 = vmul.f32 %v330, %v3164
    %v3244 = vmul.f32 %v330, %v3165
    %v3245 = vmul.f32 %v333, %v3190
    %v3246 = vmul.f32 %v333, %v3191
    %v3247 = vadd.f32 %v3243, %v3245
    %v3248 = vadd.f32 %v3244, %v3246
    %v3249 = vmul.f32 %v338, %v3216
    %v3250 = vmul.f32 %v338, %v3217
    %v3251 = vadd.f32 %v3247, %v3249
    %v3252 = vadd.f32 %v3248, %v3250
    %v3253 = vmul.f32 %v343, %v3138
    %v3254 = vmul.f32 %v343, %v3139
    %v3255 = vadd.f32 %v3251, %v3253
    %v3256 = vadd.f32 %v3252, %v3254
    %v3257 = vmul.f32 %v348, %v3110
    %3259 = vst [vmem:[#allocation1] ss:$2 sm:$0xff] %v3257
    %v3260 = vld.sshfl [vmem:[#allocation1] sm:$0xff pattern:$0x75316420]
    %v3261 = vld.sshfl [vmem:[#allocation1 + $0x8] sm:$0xff pattern:$0x75316420]
    %v3264 = vadd.f32 %v3255, %v3260
    %v3265 = vadd.f32 %v3256, %v3261
    %v3266 = vmul.f32 %v358, %v3156
    %v3267 = vmul.f32 %v358, %v3157
    %v3268 = vadd.f32 %v3264, %v3266
    %v3269 = vadd.f32 %v3265, %v3267
    %v3270 = vmul.f32 %v363, %v3172
    %v3271 = vmul.f32 %v363, %v3173
    %v3272 = vadd.f32 %v3268, %v3270
    %v3273 = vadd.f32 %v3269, %v3271
    %v3274 = vmul.f32 %v368, %v3208
    %v3275 = vmul.f32 %v368, %v3209
    %v3276 = vadd.f32 %v3272, %v3274
    %v3277 = vadd.f32 %v3273, %v3275
    %v3278 = vmul.f32 %v373, %v3224
    %v3279 = vmul.f32 %v373, %v3225
    %v3280 = vadd.f32 %v3276, %v3278
    %v3281 = vadd.f32 %v3277, %v3279
    %v3282 = vmul.f32 %v378, %v3164
    %v3283 = vmul.f32 %v378, %v3165
    %v3286 = vrot.slane %v3282, 2
    %v3287 = vrot.slane %v3283, 2
    %v3290 = vadd.f32 %v3280, %v3286
    %v3291 = vadd.f32 %v3281, %v3287
    %v3292 = vmul.f32 %v389, %v3190
    %v3293 = vmul.f32 %v389, %v3191
    %v3296 = vrot.slane %v3292, 2
    %v3297 = vrot.slane %v3293, 2
    %v3300 = vadd.f32 %v3290, %v3296
    %v3301 = vadd.f32 %v3291, %v3297
    %v3302 = vmul.f32 %v400, %v3216
    %v3303 = vmul.f32 %v400, %v3217
    %v3306 = vrot.slane %v3302, 2
    %v3307 = vrot.slane %v3303, 2
    %v3310 = vadd.f32 %v3300, %v3306
    %v3311 = vadd.f32 %v3301, %v3307
    %v3312 = vmul.f32 %v411, %v3138
    %v3313 = vmul.f32 %v411, %v3139
    %v3316 = vrot.slane %v3312, 2
    %v3317 = vrot.slane %v3313, 2
    %v3320 = vadd.f32 %v3310, %v3316
    %v3321 = vadd.f32 %v3311, %v3317
    %v3322 = vmul.f32 %v422, %v3110
    %3324 = vst [vmem:[#allocation1] ss:$2 sm:$0xff] %v3322
    %v3325 = vld.sshfl [vmem:[#allocation1] sm:$0xff pattern:$0x75316420]
    %v3326 = vld.sshfl [vmem:[#allocation1 + $0x8] sm:$0xff pattern:$0x75316420]
    %v3327 = vrot.slane %v3325, 2
    %v3328 = vrot.slane %v3326, 2
    %v3331 = vadd.f32 %v3320, %v3327
    %v3332 = vadd.f32 %v3321, %v3328
    %v3333 = vmul.f32 %v434, %v3156
    %v3334 = vmul.f32 %v434, %v3157
    %v3337 = vrot.slane %v3333, 2
    %v3338 = vrot.slane %v3334, 2
    %v3341 = vadd.f32 %v3331, %v3337
    %v3342 = vadd.f32 %v3332, %v3338
    %v3343 = vmul.f32 %v445, %v3172
    %v3344 = vmul.f32 %v445, %v3173
    %v3347 = vrot.slane %v3343, 2
    %v3348 = vrot.slane %v3344, 2
    %v3351 = vadd.f32 %v3341, %v3347
    %v3352 = vadd.f32 %v3342, %v3348
    %v3353 = vmul.f32 %v456, %v3208
    %v3354 = vmul.f32 %v456, %v3209
    %v3357 = vrot.slane %v3353, 2
    %v3358 = vrot.slane %v3354, 2
    %v3361 = vadd.f32 %v3351, %v3357
    %v3362 = vadd.f32 %v3352, %v3358
    %v3363 = vmul.f32 %v467, %v3224
    %v3364 = vmul.f32 %v467, %v3225
    %v3367 = vrot.slane %v3363, 2
    %v3368 = vrot.slane %v3364, 2
    %v3371 = vadd.f32 %v3361, %v3367
    %v3372 = vadd.f32 %v3362, %v3368
    %v3373 = vmul.f32 %v478, %v3164
    %v3374 = vmul.f32 %v478, %v3165
    %v3375 = vmul.f32 %v481, %v3190
    %v3376 = vmul.f32 %v481, %v3191
    %v3377 = vadd.f32 %v3373, %v3375
    %v3378 = vadd.f32 %v3374, %v3376
    %v3379 = vmul.f32 %v486, %v3216
    %v3380 = vmul.f32 %v486, %v3217
    %v3381 = vadd.f32 %v3377, %v3379
    %v3382 = vadd.f32 %v3378, %v3380
    %v3383 = vmul.f32 %v491, %v3138
    %v3384 = vmul.f32 %v491, %v3139
    %v3385 = vadd.f32 %v3381, %v3383
    %v3386 = vadd.f32 %v3382, %v3384
    %v3387 = vmul.f32 %v496, %v3110
    %3389 = vst [vmem:[#allocation1] ss:$2 sm:$0xff] %v3387
    %v3390 = vld.sshfl [vmem:[#allocation1] sm:$0xff pattern:$0x75316420]
    %v3391 = vld.sshfl [vmem:[#allocation1 + $0x8] sm:$0xff pattern:$0x75316420]
    %v3394 = vadd.f32 %v3385, %v3390
    %v3395 = vadd.f32 %v3386, %v3391
    %v3396 = vmul.f32 %v506, %v3156
    %v3397 = vmul.f32 %v506, %v3157
    %v3398 = vadd.f32 %v3394, %v3396
    %v3399 = vadd.f32 %v3395, %v3397
    %v3400 = vmul.f32 %v511, %v3172
    %v3401 = vmul.f32 %v511, %v3173
    %v3402 = vadd.f32 %v3398, %v3400
    %v3403 = vadd.f32 %v3399, %v3401
    %v3404 = vmul.f32 %v516, %v3208
    %v3405 = vmul.f32 %v516, %v3209
    %v3406 = vadd.f32 %v3402, %v3404
    %v3407 = vadd.f32 %v3403, %v3405
    %v3408 = vmul.f32 %v521, %v3224
    %v3409 = vmul.f32 %v521, %v3225
    %v3410 = vadd.f32 %v3406, %v3408
    %v3411 = vadd.f32 %v3407, %v3409
    %v3412 = vmul.f32 %v526, %v3164
    %v3413 = vmul.f32 %v526, %v3165
    %v3416 = vrot.slane %v3412, 2
    %v3417 = vrot.slane %v3413, 2
    %v3420 = vadd.f32 %v3410, %v3416
    %v3421 = vadd.f32 %v3411, %v3417
    %v3422 = vmul.f32 %v537, %v3190
    %v3423 = vmul.f32 %v537, %v3191
    %v3426 = vrot.slane %v3422, 2
    %v3427 = vrot.slane %v3423, 2
    %v3430 = vadd.f32 %v3420, %v3426
    %v3431 = vadd.f32 %v3421, %v3427
    %v3432 = vmul.f32 %v548, %v3216
    %v3433 = vmul.f32 %v548, %v3217
    %v3436 = vrot.slane %v3432, 2
    %v3437 = vrot.slane %v3433, 2
    %v3440 = vadd.f32 %v3430, %v3436
    %v3441 = vadd.f32 %v3431, %v3437
    %v3442 = vmul.f32 %v559, %v3138
    %v3443 = vmul.f32 %v559, %v3139
    %v3446 = vrot.slane %v3442, 2
    %v3447 = vrot.slane %v3443, 2
    %v3450 = vadd.f32 %v3440, %v3446
    %v3451 = vadd.f32 %v3441, %v3447
    %v3452 = vmul.f32 %v570, %v3110
    %3454 = vst [vmem:[#allocation1] ss:$2 sm:$0xff] %v3452
    %v3455 = vld.sshfl [vmem:[#allocation1] sm:$0xff pattern:$0x75316420]
    %v3456 = vld.sshfl [vmem:[#allocation1 + $0x8] sm:$0xff pattern:$0x75316420]
    %v3457 = vrot.slane %v3455, 2
    %v3458 = vrot.slane %v3456, 2
    %v3461 = vadd.f32 %v3450, %v3457
    %v3462 = vadd.f32 %v3451, %v3458
    %v3463 = vmul.f32 %v582, %v3156
    %v3464 = vmul.f32 %v582, %v3157
    %v3467 = vrot.slane %v3463, 2
    %v3468 = vrot.slane %v3464, 2
    %v3471 = vadd.f32 %v3461, %v3467
    %v3472 = vadd.f32 %v3462, %v3468
    %v3473 = vmul.f32 %v593, %v3172
    %v3474 = vmul.f32 %v593, %v3173
    %v3477 = vrot.slane %v3473, 2
    %v3478 = vrot.slane %v3474, 2
    %v3481 = vadd.f32 %v3471, %v3477
    %v3482 = vadd.f32 %v3472, %v3478
    %v3483 = vmul.f32 %v604, %v3208
    %v3484 = vmul.f32 %v604, %v3209
    %v3487 = vrot.slane %v3483, 2
    %v3488 = vrot.slane %v3484, 2
    %v3491 = vadd.f32 %v3481, %v3487
    %v3492 = vadd.f32 %v3482, %v3488
    %v3493 = vmul.f32 %v615, %v3224
    %v3494 = vmul.f32 %v615, %v3225
    %v3497 = vrot.slane %v3493, 2
    %v3498 = vrot.slane %v3494, 2
    %v3501 = vadd.f32 %v3491, %v3497
    %v3502 = vadd.f32 %v3492, %v3498
    %v3503 = vmul.f32 %v626, %v3164
    %v3504 = vmul.f32 %v626, %v3165
    %v3505 = vmul.f32 %v629, %v3190
    %v3506 = vmul.f32 %v629, %v3191
    %v3507 = vadd.f32 %v3503, %v3505
    %v3508 = vadd.f32 %v3504, %v3506
    %v3509 = vmul.f32 %v634, %v3216
    %v3510 = vmul.f32 %v634, %v3217
    %v3511 = vadd.f32 %v3507, %v3509
    %v3512 = vadd.f32 %v3508, %v3510
    %v3513 = vmul.f32 %v639, %v3138
    %v3514 = vmul.f32 %v639, %v3139
    %v3515 = vadd.f32 %v3511, %v3513
    %v3516 = vadd.f32 %v3512, %v3514
    %v3517 = vmul.f32 %v644, %v3110
    %3519 = vst [vmem:[#allocation1] ss:$2 sm:$0xff] %v3517
    %v3520 = vld.sshfl [vmem:[#allocation1] sm:$0xff pattern:$0x75316420]
    %v3521 = vld.sshfl [vmem:[#allocation1 + $0x8] sm:$0xff pattern:$0x75316420]
    %v3524 = vadd.f32 %v3515, %v3520
    %v3525 = vadd.f32 %v3516, %v3521
    %v3526 = vmul.f32 %v654, %v3156
    %v3527 = vmul.f32 %v654, %v3157
    %v3528 = vadd.f32 %v3524, %v3526
    %v3529 = vadd.f32 %v3525, %v3527
    %v3530 = vmul.f32 %v659, %v3172
    %v3531 = vmul.f32 %v659, %v3173
    %v3532 = vadd.f32 %v3528, %v3530
    %v3533 = vadd.f32 %v3529, %v3531
    %v3534 = vmul.f32 %v664, %v3208
    %v3535 = vmul.f32 %v664, %v3209
    %v3536 = vadd.f32 %v3532, %v3534
    %v3537 = vadd.f32 %v3533, %v3535
    %v3538 = vmul.f32 %v669, %v3224
    %v3539 = vmul.f32 %v669, %v3225
    %v3540 = vadd.f32 %v3536, %v3538
    %v3541 = vadd.f32 %v3537, %v3539
    %v3542 = vmul.f32 %v674, %v3164
    %v3543 = vmul.f32 %v674, %v3165
    %v3546 = vrot.slane %v3542, 2
    %v3547 = vrot.slane %v3543, 2
    %v3550 = vadd.f32 %v3540, %v3546
    %v3551 = vadd.f32 %v3541, %v3547
    %v3552 = vmul.f32 %v685, %v3190
    %v3553 = vmul.f32 %v685, %v3191
    %v3556 = vrot.slane %v3552, 2
    %v3557 = vrot.slane %v3553, 2
    %v3560 = vadd.f32 %v3550, %v3556
    %v3561 = vadd.f32 %v3551, %v3557
    %v3562 = vmul.f32 %v696, %v3216
    %v3563 = vmul.f32 %v696, %v3217
    %v3566 = vrot.slane %v3562, 2
    %v3567 = vrot.slane %v3563, 2
    %v3570 = vadd.f32 %v3560, %v3566
    %v3571 = vadd.f32 %v3561, %v3567
    %v3572 = vmul.f32 %v707, %v3138
    %v3573 = vmul.f32 %v707, %v3139
    %v3576 = vrot.slane %v3572, 2
    %v3577 = vrot.slane %v3573, 2
    %v3580 = vadd.f32 %v3570, %v3576
    %v3581 = vadd.f32 %v3571, %v3577
    %v3582 = vmul.f32 %v718, %v3110
    %3584 = vst [vmem:[#allocation1] ss:$2 sm:$0xff] %v3582
    %v3585 = vld.sshfl [vmem:[#allocation1] sm:$0xff pattern:$0x75316420]
    %v3586 = vld.sshfl [vmem:[#allocation1 + $0x8] sm:$0xff pattern:$0x75316420]
    %v3587 = vrot.slane %v3585, 2
    %v3588 = vrot.slane %v3586, 2
    %v3591 = vadd.f32 %v3580, %v3587
    %v3592 = vadd.f32 %v3581, %v3588
    %v3593 = vmul.f32 %v730, %v3156
    %v3594 = vmul.f32 %v730, %v3157
    %v3597 = vrot.slane %v3593, 2
    %v3598 = vrot.slane %v3594, 2
    %v3601 = vadd.f32 %v3591, %v3597
    %v3602 = vadd.f32 %v3592, %v3598
    %v3603 = vmul.f32 %v741, %v3172
    %v3604 = vmul.f32 %v741, %v3173
    %v3607 = vrot.slane %v3603, 2
    %v3608 = vrot.slane %v3604, 2
    %v3611 = vadd.f32 %v3601, %v3607
    %v3612 = vadd.f32 %v3602, %v3608
    %v3613 = vmul.f32 %v752, %v3208
    %v3614 = vmul.f32 %v752, %v3209
    %v3617 = vrot.slane %v3613, 2
    %v3618 = vrot.slane %v3614, 2
    %v3621 = vadd.f32 %v3611, %v3617
    %v3622 = vadd.f32 %v3612, %v3618
    %v3623 = vmul.f32 %v763, %v3224
    %v3624 = vmul.f32 %v763, %v3225
    %v3627 = vrot.slane %v3623, 2
    %v3628 = vrot.slane %v3624, 2
    %v3631 = vadd.f32 %v3621, %v3627
    %v3632 = vadd.f32 %v3622, %v3628
    %v3633 = vmul.f32 %v774, %v3164
    %v3634 = vmul.f32 %v774, %v3165
    %v3635 = vmul.f32 %v777, %v3190
    %v3636 = vmul.f32 %v777, %v3191
    %v3637 = vadd.f32 %v3633, %v3635
    %v3638 = vadd.f32 %v3634, %v3636
    %v3639 = vmul.f32 %v782, %v3216
    %v3640 = vmul.f32 %v782, %v3217
    %v3641 = vadd.f32 %v3637, %v3639
    %v3642 = vadd.f32 %v3638, %v3640
    %v3643 = vmul.f32 %v787, %v3138
    %v3644 = vmul.f32 %v787, %v3139
    %v3645 = vadd.f32 %v3641, %v3643
    %v3646 = vadd.f32 %v3642, %v3644
    %v3647 = vmul.f32 %v792, %v3110
    %3649 = vst [vmem:[#allocation1] ss:$2 sm:$0xff] %v3647
    %v3650 = vld.sshfl [vmem:[#allocation1] sm:$0xff pattern:$0x75316420]
    %v3651 = vld.sshfl [vmem:[#allocation1 + $0x8] sm:$0xff pattern:$0x75316420]
    %v3654 = vadd.f32 %v3645, %v3650
    %v3655 = vadd.f32 %v3646, %v3651
    %v3656 = vmul.f32 %v802, %v3156
    %v3657 = vmul.f32 %v802, %v3157
    %v3658 = vadd.f32 %v3654, %v3656
    %v3659 = vadd.f32 %v3655, %v3657
    %v3660 = vmul.f32 %v807, %v3172
    %v3661 = vmul.f32 %v807, %v3173
    %v3662 = vadd.f32 %v3658, %v3660
    %v3663 = vadd.f32 %v3659, %v3661
    %v3664 = vmul.f32 %v812, %v3208
    %v3665 = vmul.f32 %v812, %v3209
    %v3666 = vadd.f32 %v3662, %v3664
    %v3667 = vadd.f32 %v3663, %v3665
    %v3668 = vmul.f32 %v817, %v3224
    %v3669 = vmul.f32 %v817, %v3225
    %v3670 = vadd.f32 %v3666, %v3668
    %v3671 = vadd.f32 %v3667, %v3669
    %v3672 = vmul.f32 %v822, %v3164
    %v3673 = vmul.f32 %v822, %v3165
    %v3676 = vrot.slane %v3672, 2
    %v3677 = vrot.slane %v3673, 2
    %v3680 = vadd.f32 %v3670, %v3676
    %v3681 = vadd.f32 %v3671, %v3677
    %v3682 = vmul.f32 %v833, %v3190
    %v3683 = vmul.f32 %v833, %v3191
    %v3686 = vrot.slane %v3682, 2
    %v3687 = vrot.slane %v3683, 2
    %v3690 = vadd.f32 %v3680, %v3686
    %v3691 = vadd.f32 %v3681, %v3687
    %v3692 = vmul.f32 %v844, %v3216
    %v3693 = vmul.f32 %v844, %v3217
    %v3696 = vrot.slane %v3692, 2
    %v3697 = vrot.slane %v3693, 2
    %v3700 = vadd.f32 %v3690, %v3696
    %v3701 = vadd.f32 %v3691, %v3697
    %v3702 = vmul.f32 %v855, %v3138
    %v3703 = vmul.f32 %v855, %v3139
    %v3706 = vrot.slane %v3702, 2
    %v3707 = vrot.slane %v3703, 2
    %v3710 = vadd.f32 %v3700, %v3706
    %v3711 = vadd.f32 %v3701, %v3707
    %v3712 = vmul.f32 %v866, %v3110
    %3714 = vst [vmem:[#allocation1] ss:$2 sm:$0xff] %v3712
    %v3715 = vld.sshfl [vmem:[#allocation1] sm:$0xff pattern:$0x75316420]
    %v3716 = vld.sshfl [vmem:[#allocation1 + $0x8] sm:$0xff pattern:$0x75316420]
    %v3717 = vrot.slane %v3715, 2
    %v3718 = vrot.slane %v3716, 2
    %v3721 = vadd.f32 %v3710, %v3717
    %v3722 = vadd.f32 %v3711, %v3718
    %v3723 = vmul.f32 %v878, %v3156
    %v3724 = vmul.f32 %v878, %v3157
    %v3727 = vrot.slane %v3723, 2
    %v3728 = vrot.slane %v3724, 2
    %v3731 = vadd.f32 %v3721, %v3727
    %v3732 = vadd.f32 %v3722, %v3728
    %v3733 = vmul.f32 %v889, %v3172
    %v3734 = vmul.f32 %v889, %v3173
    %v3737 = vrot.slane %v3733, 2
    %v3738 = vrot.slane %v3734, 2
    %v3741 = vadd.f32 %v3731, %v3737
    %v3742 = vadd.f32 %v3732, %v3738
    %v3743 = vmul.f32 %v900, %v3208
    %v3744 = vmul.f32 %v900, %v3209
    %v3747 = vrot.slane %v3743, 2
    %v3748 = vrot.slane %v3744, 2
    %v3751 = vadd.f32 %v3741, %v3747
    %v3752 = vadd.f32 %v3742, %v3748
    %v3753 = vmul.f32 %v911, %v3224
    %v3754 = vmul.f32 %v911, %v3225
    %v3757 = vrot.slane %v3753, 2
    %v3758 = vrot.slane %v3754, 2
    %v3761 = vadd.f32 %v3751, %v3757
    %v3762 = vadd.f32 %v3752, %v3758
    %v3765 = vrot.slane %v3501, 6
    %v3766 = vrot.slane %v3502, 6
    %v3771 = vrot.slane %v3631, 4
    %v3772 = vrot.slane %v3632, 4
    %v3777 = vrot.slane %v3761, 2
    %v3778 = vrot.slane %v3762, 2
    %v3781 = vsel %vm940, %v3371, %v3765
    %v3782 = vsel %vm940, %v3372, %v3766
    %v3783 = vsel %vm943, %v3781, %v3771
    %v3784 = vsel %vm943, %v3782, %v3772
    %v3785 = vsel %vm946, %v3783, %v3777
    %v3786 = vsel %vm946, %v3784, %v3778
    %vm3787 = vcmp.ge.f32.partialorder %v3785, 0.0
    %vm3788 = vcmp.ge.f32.partialorder %v3786, 0.0
    %v3789 = vmul.f32 %v3785, 0.01
    %v3790 = vmul.f32 %v3786, 0.01
    %v3791 = vsel %vm3787, %v3785, %v3789
    %v3792 = vsel %vm3788, %v3786, %v3790
    %3793 = vrot.lane.b32.xlu0 %v3791, 1
    %v3794 = vpop.permute.xlu0 %3793
    %3795 = vrot.lane.b32.xlu0 %v3792, 1
    %v3796 = vpop.permute.xlu0 %3795
    %v3797 = vsel %vm209, %v3794, %v3796
    %v3798 = vsel %vm209, %v3796, %v3794
    %v3799 = vsel %vm191, %v3791, %v3798
    %v3800 = vsel %vm192, %v3792, %v3797
    %3801 = vrot.lane.b32.xlu0 %v3791, 127
    %v3802 = vpop.permute.xlu0 %3801
    %3803 = vrot.lane.b32.xlu0 %v3792, 127
    %v3804 = vpop.permute.xlu0 %3803
    %v3805 = vsel %vm228, %v3802, %v3804
    %v3806 = vsel %vm228, %v3804, %v3802
    %v3807 = vsel %vm193, %v3791, %v3805
    %v3808 = vsel %vm194, %v3792, %v3806
    %3809 = vrot.lane.b32.xlu0 %v3799, 16
    %v3810 = vpop.permute.xlu0 %3809
    %3811 = vrot.lane.b32.xlu0 %v3800, 16
    %v3812 = vpop.permute.xlu0 %3811
    %v3813 = vsel %vm242, %v3810, %v3812
    %v3814 = vsel %vm242, %v3812, %v3810
    %v3815 = vsel %vm195, %v3799, %v3814
    %v3816 = vsel %vm196, %v3800, %v3813
    %3817 = vrot.lane.b32.xlu0 %v3799, 112
    %v3818 = vpop.permute.xlu0 %3817
    %3819 = vrot.lane.b32.xlu0 %v3800, 112
    %v3820 = vpop.permute.xlu0 %3819
    %v3821 = vsel %vm251, %v3818, %v3820
    %v3822 = vsel %vm251, %v3820, %v3818
    %v3823 = vsel %vm197, %v3799, %v3821
    %v3824 = vsel %vm198, %v3800, %v3822
    %3825 = vrot.lane.b32.xlu0 %v3791, 16
    %v3826 = vpop.permute.xlu0 %3825
    %3827 = vrot.lane.b32.xlu0 %v3792, 16
    %v3828 = vpop.permute.xlu0 %3827
    %v3829 = vsel %vm242, %v3826, %v3828
    %v3830 = vsel %vm242, %v3828, %v3826
    %v3831 = vsel %vm195, %v3791, %v3830
    %v3832 = vsel %vm196, %v3792, %v3829
    %3833 = vrot.lane.b32.xlu0 %v3791, 112
    %v3834 = vpop.permute.xlu0 %3833
    %3835 = vrot.lane.b32.xlu0 %v3792, 112
    %v3836 = vpop.permute.xlu0 %3835
    %v3837 = vsel %vm251, %v3834, %v3836
    %v3838 = vsel %vm251, %v3836, %v3834
    %v3839 = vsel %vm197, %v3791, %v3837
    %v3840 = vsel %vm198, %v3792, %v3838
    %3841 = vrot.lane.b32.xlu0 %v3807, 16
    %v3842 = vpop.permute.xlu0 %3841
    %3843 = vrot.lane.b32.xlu0 %v3808, 16
    %v3844 = vpop.permute.xlu0 %3843
    %v3845 = vsel %vm242, %v3842, %v3844
    %v3846 = vsel %vm242, %v3844, %v3842
    %v3847 = vsel %vm195, %v3807, %v3846
    %v3848 = vsel %vm196, %v3808, %v3845
    %3849 = vrot.lane.b32.xlu0 %v3807, 112
    %v3850 = vpop.permute.xlu0 %3849
    %3851 = vrot.lane.b32.xlu0 %v3808, 112
    %v3852 = vpop.permute.xlu0 %3851
    %v3853 = vsel %vm251, %v3850, %v3852
    %v3854 = vsel %vm251, %v3852, %v3850
    %v3855 = vsel %vm197, %v3807, %v3853
    %v3856 = vsel %vm198, %v3808, %v3854
    %v3857 = vmul.f32 %v1019, %v3815
    %v3858 = vmul.f32 %v1019, %v3816
    %v3859 = vmul.f32 %v1022, %v3831
    %v3860 = vmul.f32 %v1022, %v3832
    %v3861 = vadd.f32 %v3857, %v3859
    %v3862 = vadd.f32 %v3858, %v3860
    %v3863 = vmul.f32 %v1027, %v3847
    %v3864 = vmul.f32 %v1027, %v3848
    %v3865 = vadd.f32 %v3861, %v3863
    %v3866 = vadd.f32 %v3862, %v3864
    %v3867 = vmul.f32 %v1032, %v3799
    %v3868 = vmul.f32 %v1032, %v3800
    %v3869 = vadd.f32 %v3865, %v3867
    %v3870 = vadd.f32 %v3866, %v3868
    %v3871 = vmul.f32 %v1037, %v3791
    %v3872 = vmul.f32 %v1037, %v3792
    %v3873 = vadd.f32 %v3869, %v3871
    %v3874 = vadd.f32 %v3870, %v3872
    %v3875 = vmul.f32 %v1042, %v3807
    %v3876 = vmul.f32 %v1042, %v3808
    %v3877 = vadd.f32 %v3873, %v3875
    %v3878 = vadd.f32 %v3874, %v3876
    %v3879 = vmul.f32 %v1047, %v3823
    %v3880 = vmul.f32 %v1047, %v3824
    %v3881 = vadd.f32 %v3877, %v3879
    %v3882 = vadd.f32 %v3878, %v3880
    %v3883 = vmul.f32 %v1052, %v3839
    %v3884 = vmul.f32 %v1052, %v3840
    %v3885 = vadd.f32 %v3881, %v3883
    %v3886 = vadd.f32 %v3882, %v3884
    %v3887 = vmul.f32 %v1057, %v3855
    %v3888 = vmul.f32 %v1057, %v3856
    %v3889 = vadd.f32 %v3885, %v3887
    %v3890 = vadd.f32 %v3886, %v3888
    %v3891 = vmul.f32 %v1062, %v3815
    %v3892 = vmul.f32 %v1062, %v3816
    %v3895 = vrot.slane %v3891, 2
    %v3896 = vrot.slane %v3892, 2
    %v3899 = vadd.f32 %v3889, %v3895
    %v3900 = vadd.f32 %v3890, %v3896
    %v3901 = vmul.f32 %v1073, %v3831
    %v3902 = vmul.f32 %v1073, %v3832
    %v3905 = vrot.slane %v3901, 2
    %v3906 = vrot.slane %v3902, 2
    %v3909 = vadd.f32 %v3899, %v3905
    %v3910 = vadd.f32 %v3900, %v3906
    %v3911 = vmul.f32 %v1084, %v3847
    %v3912 = vmul.f32 %v1084, %v3848
    %v3915 = vrot.slane %v3911, 2
    %v3916 = vrot.slane %v3912, 2
    %v3919 = vadd.f32 %v3909, %v3915
    %v3920 = vadd.f32 %v3910, %v3916
    %v3921 = vmul.f32 %v1095, %v3799
    %v3922 = vmul.f32 %v1095, %v3800
    %v3925 = vrot.slane %v3921, 2
    %v3926 = vrot.slane %v3922, 2
    %v3929 = vadd.f32 %v3919, %v3925
    %v3930 = vadd.f32 %v3920, %v3926
    %v3931 = vmul.f32 %v1106, %v3791
    %v3932 = vmul.f32 %v1106, %v3792
    %v3935 = vrot.slane %v3931, 2
    %v3936 = vrot.slane %v3932, 2
    %v3939 = vadd.f32 %v3929, %v3935
    %v3940 = vadd.f32 %v3930, %v3936
    %v3941 = vmul.f32 %v1117, %v3807
    %v3942 = vmul.f32 %v1117, %v3808
    %v3945 = vrot.slane %v3941, 2
    %v3946 = vrot.slane %v3942, 2
    %v3949 = vadd.f32 %v3939, %v3945
    %v3950 = vadd.f32 %v3940, %v3946
    %v3951 = vmul.f32 %v1128, %v3823
    %v3952 = vmul.f32 %v1128, %v3824
    %v3955 = vrot.slane %v3951, 2
    %v3956 = vrot.slane %v3952, 2
    %v3959 = vadd.f32 %v3949, %v3955
    %v3960 = vadd.f32 %v3950, %v3956
    %v3961 = vmul.f32 %v1139, %v3839
    %v3962 = vmul.f32 %v1139, %v3840
    %v3965 = vrot.slane %v3961, 2
    %v3966 = vrot.slane %v3962, 2
    %v3969 = vadd.f32 %v3959, %v3965
    %v3970 = vadd.f32 %v3960, %v3966
    %v3971 = vmul.f32 %v1150, %v3855
    %v3972 = vmul.f32 %v1150, %v3856
    %v3975 = vrot.slane %v3971, 2
    %v3976 = vrot.slane %v3972, 2
    %v3979 = vadd.f32 %v3969, %v3975
    %v3980 = vadd.f32 %v3970, %v3976
    %v3981 = vmul.f32 %v1161, %v3815
    %v3982 = vmul.f32 %v1161, %v3816
    %v3985 = vrot.slane %v3981, 4
    %v3986 = vrot.slane %v3982, 4
    %v3989 = vadd.f32 %v3979, %v3985
    %v3990 = vadd.f32 %v3980, %v3986
    %v3991 = vmul.f32 %v1172, %v3831
    %v3992 = vmul.f32 %v1172, %v3832
    %v3995 = vrot.slane %v3991, 4
    %v3996 = vrot.slane %v3992, 4
    %v3999 = vadd.f32 %v3989, %v3995
    %v4000 = vadd.f32 %v3990, %v3996
    %v4001 = vmul.f32 %v1183, %v3847
    %v4002 = vmul.f32 %v1183, %v3848
    %v4005 = vrot.slane %v4001, 4
    %v4006 = vrot.slane %v4002, 4
    %v4009 = vadd.f32 %v3999, %v4005
    %v4010 = vadd.f32 %v4000, %v4006
    %v4011 = vmul.f32 %v1194, %v3799
    %v4012 = vmul.f32 %v1194, %v3800
    %v4015 = vrot.slane %v4011, 4
    %v4016 = vrot.slane %v4012, 4
    %v4019 = vadd.f32 %v4009, %v4015
    %v4020 = vadd.f32 %v4010, %v4016
    %v4021 = vmul.f32 %v1205, %v3791
    %v4022 = vmul.f32 %v1205, %v3792
    %v4025 = vrot.slane %v4021, 4
    %v4026 = vrot.slane %v4022, 4
    %v4029 = vadd.f32 %v4019, %v4025
    %v4030 = vadd.f32 %v4020, %v4026
    %v4031 = vmul.f32 %v1216, %v3807
    %v4032 = vmul.f32 %v1216, %v3808
    %v4035 = vrot.slane %v4031, 4
    %v4036 = vrot.slane %v4032, 4
    %v4039 = vadd.f32 %v4029, %v4035
    %v4040 = vadd.f32 %v4030, %v4036
    %v4041 = vmul.f32 %v1227, %v3823
    %v4042 = vmul.f32 %v1227, %v3824
    %v4045 = vrot.slane %v4041, 4
    %v4046 = vrot.slane %v4042, 4
    %v4049 = vadd.f32 %v4039, %v4045
    %v4050 = vadd.f32 %v4040, %v4046
    %v4051 = vmul.f32 %v1238, %v3839
    %v4052 = vmul.f32 %v1238, %v3840
    %v4055 = vrot.slane %v4051, 4
    %v4056 = vrot.slane %v4052, 4
    %v4059 = vadd.f32 %v4049, %v4055
    %v4060 = vadd.f32 %v4050, %v4056
    %v4061 = vmul.f32 %v1249, %v3855
    %v4062 = vmul.f32 %v1249, %v3856
    %v4065 = vrot.slane %v4061, 4
    %v4066 = vrot.slane %v4062, 4
    %v4069 = vadd.f32 %v4059, %v4065
    %v4070 = vadd.f32 %v4060, %v4066
    %v4071 = vmul.f32 %v1260, %v3815
    %v4072 = vmul.f32 %v1260, %v3816
    %v4075 = vrot.slane %v4071, 6
    %v4076 = vrot.slane %v4072, 6
    %v4079 = vadd.f32 %v4069, %v4075
    %v4080 = vadd.f32 %v4070, %v4076
    %v4081 = vmul.f32 %v1271, %v3831
    %v4082 = vmul.f32 %v1271, %v3832
    %v4085 = vrot.slane %v4081, 6
    %v4086 = vrot.slane %v4082, 6
    %v4089 = vadd.f32 %v4079, %v4085
    %v4090 = vadd.f32 %v4080, %v4086
    %v4091 = vmul.f32 %v1282, %v3847
    %v4092 = vmul.f32 %v1282, %v3848
    %v4095 = vrot.slane %v4091, 6
    %v4096 = vrot.slane %v4092, 6
    %v4099 = vadd.f32 %v4089, %v4095
    %v4100 = vadd.f32 %v4090, %v4096
    %v4101 = vmul.f32 %v1293, %v3799
    %v4102 = vmul.f32 %v1293, %v3800
    %v4105 = vrot.slane %v4101, 6
    %v4106 = vrot.slane %v4102, 6
    %v4109 = vadd.f32 %v4099, %v4105
    %v4110 = vadd.f32 %v4100, %v4106
    %v4111 = vmul.f32 %v1304, %v3791
    %v4112 = vmul.f32 %v1304, %v3792
    %v4115 = vrot.slane %v4111, 6
    %v4116 = vrot.slane %v4112, 6
    %v4119 = vadd.f32 %v4109, %v4115
    %v4120 = vadd.f32 %v4110, %v4116
    %v4121 = vmul.f32 %v1315, %v3807
    %v4122 = vmul.f32 %v1315, %v3808
    %v4125 = vrot.slane %v4121, 6
    %v4126 = vrot.slane %v4122, 6
    %v4129 = vadd.f32 %v4119, %v4125
    %v4130 = vadd.f32 %v4120, %v4126
    %v4131 = vmul.f32 %v1326, %v3823
    %v4132 = vmul.f32 %v1326, %v3824
    %v4135 = vrot.slane %v4131, 6
    %v4136 = vrot.slane %v4132, 6
    %v4139 = vadd.f32 %v4129, %v4135
    %v4140 = vadd.f32 %v4130, %v4136
    %v4141 = vmul.f32 %v1337, %v3839
    %v4142 = vmul.f32 %v1337, %v3840
    %v4145 = vrot.slane %v4141, 6
    %v4146 = vrot.slane %v4142, 6
    %v4149 = vadd.f32 %v4139, %v4145
    %v4150 = vadd.f32 %v4140, %v4146
    %v4151 = vmul.f32 %v1348, %v3855
    %v4152 = vmul.f32 %v1348, %v3856
    %v4155 = vrot.slane %v4151, 6
    %v4156 = vrot.slane %v4152, 6
    %v4159 = vadd.f32 %v4149, %v4155
    %v4160 = vadd.f32 %v4150, %v4156
    %v4161 = vmul.f32 %v1359, %v3815
    %v4162 = vmul.f32 %v1359, %v3816
    %v4163 = vmul.f32 %v1362, %v3831
    %v4164 = vmul.f32 %v1362, %v3832
    %v4165 = vadd.f32 %v4161, %v4163
    %v4166 = vadd.f32 %v4162, %v4164
    %v4167 = vmul.f32 %v1367, %v3847
    %v4168 = vmul.f32 %v1367, %v3848
    %v4169 = vadd.f32 %v4165, %v4167
    %v4170 = vadd.f32 %v4166, %v4168
    %v4171 = vmul.f32 %v1372, %v3799
    %v4172 = vmul.f32 %v1372, %v3800
    %v4173 = vadd.f32 %v4169, %v4171
    %v4174 = vadd.f32 %v4170, %v4172
    %v4175 = vmul.f32 %v1377, %v3791
    %v4176 = vmul.f32 %v1377, %v3792
    %v4177 = vadd.f32 %v4173, %v4175
    %v4178 = vadd.f32 %v4174, %v4176
    %v4179 = vmul.f32 %v1382, %v3807
    %v4180 = vmul.f32 %v1382, %v3808
    %v4181 = vadd.f32 %v4177, %v4179
    %v4182 = vadd.f32 %v4178, %v4180
    %v4183 = vmul.f32 %v1387, %v3823
    %v4184 = vmul.f32 %v1387, %v3824
    %v4185 = vadd.f32 %v4181, %v4183
    %v4186 = vadd.f32 %v4182, %v4184
    %v4187 = vmul.f32 %v1392, %v3839
    %v4188 = vmul.f32 %v1392, %v3840
    %v4189 = vadd.f32 %v4185, %v4187
    %v4190 = vadd.f32 %v4186, %v4188
    %v4191 = vmul.f32 %v1397, %v3855
    %v4192 = vmul.f32 %v1397, %v3856
    %v4193 = vadd.f32 %v4189, %v4191
    %v4194 = vadd.f32 %v4190, %v4192
    %v4195 = vmul.f32 %v1402, %v3815
    %v4196 = vmul.f32 %v1402, %v3816
    %v4199 = vrot.slane %v4195, 2
    %v4200 = vrot.slane %v4196, 2
    %v4203 = vadd.f32 %v4193, %v4199
    %v4204 = vadd.f32 %v4194, %v4200
    %v4205 = vmul.f32 %v1413, %v3831
    %v4206 = vmul.f32 %v1413, %v3832
    %v4209 = vrot.slane %v4205, 2
    %v4210 = vrot.slane %v4206, 2
    %v4213 = vadd.f32 %v4203, %v4209
    %v4214 = vadd.f32 %v4204, %v4210
    %v4215 = vmul.f32 %v1424, %v3847
    %v4216 = vmul.f32 %v1424, %v3848
    %v4219 = vrot.slane %v4215, 2
    %v4220 = vrot.slane %v4216, 2
    %v4223 = vadd.f32 %v4213, %v4219
    %v4224 = vadd.f32 %v4214, %v4220
    %v4225 = vmul.f32 %v1435, %v3799
    %v4226 = vmul.f32 %v1435, %v3800
    %v4229 = vrot.slane %v4225, 2
    %v4230 = vrot.slane %v4226, 2
    %v4233 = vadd.f32 %v4223, %v4229
    %v4234 = vadd.f32 %v4224, %v4230
    %v4235 = vmul.f32 %v1446, %v3791
    %v4236 = vmul.f32 %v1446, %v3792
    %v4239 = vrot.slane %v4235, 2
    %v4240 = vrot.slane %v4236, 2
    %v4243 = vadd.f32 %v4233, %v4239
    %v4244 = vadd.f32 %v4234, %v4240
    %v4245 = vmul.f32 %v1457, %v3807
    %v4246 = vmul.f32 %v1457, %v3808
    %v4249 = vrot.slane %v4245, 2
    %v4250 = vrot.slane %v4246, 2
    %v4253 = vadd.f32 %v4243, %v4249
    %v4254 = vadd.f32 %v4244, %v4250
    %v4255 = vmul.f32 %v1468, %v3823
    %v4256 = vmul.f32 %v1468, %v3824
    %v4259 = vrot.slane %v4255, 2
    %v4260 = vrot.slane %v4256, 2
    %v4263 = vadd.f32 %v4253, %v4259
    %v4264 = vadd.f32 %v4254, %v4260
    %v4265 = vmul.f32 %v1479, %v3839
    %v4266 = vmul.f32 %v1479, %v3840
    %v4269 = vrot.slane %v4265, 2
    %v4270 = vrot.slane %v4266, 2
    %v4273 = vadd.f32 %v4263, %v4269
    %v4274 = vadd.f32 %v4264, %v4270
    %v4275 = vmul.f32 %v1490, %v3855
    %v4276 = vmul.f32 %v1490, %v3856
    %v4279 = vrot.slane %v4275, 2
    %v4280 = vrot.slane %v4276, 2
    %v4283 = vadd.f32 %v4273, %v4279
    %v4284 = vadd.f32 %v4274, %v4280
    %v4285 = vmul.f32 %v1501, %v3815
    %v4286 = vmul.f32 %v1501, %v3816
    %v4289 = vrot.slane %v4285, 4
    %v4290 = vrot.slane %v4286, 4
    %v4293 = vadd.f32 %v4283, %v4289
    %v4294 = vadd.f32 %v4284, %v4290
    %v4295 = vmul.f32 %v1512, %v3831
    %v4296 = vmul.f32 %v1512, %v3832
    %v4299 = vrot.slane %v4295, 4
    %v4300 = vrot.slane %v4296, 4
    %v4303 = vadd.f32 %v4293, %v4299
    %v4304 = vadd.f32 %v4294, %v4300
    %v4305 = vmul.f32 %v1523, %v3847
    %v4306 = vmul.f32 %v1523, %v3848
    %v4309 = vrot.slane %v4305, 4
    %v4310 = vrot.slane %v4306, 4
    %v4313 = vadd.f32 %v4303, %v4309
    %v4314 = vadd.f32 %v4304, %v4310
    %v4315 = vmul.f32 %v1534, %v3799
    %v4316 = vmul.f32 %v1534, %v3800
    %v4319 = vrot.slane %v4315, 4
    %v4320 = vrot.slane %v4316, 4
    %v4323 = vadd.f32 %v4313, %v4319
    %v4324 = vadd.f32 %v4314, %v4320
    %v4325 = vmul.f32 %v1545, %v3791
    %v4326 = vmul.f32 %v1545, %v3792
    %v4329 = vrot.slane %v4325, 4
    %v4330 = vrot.slane %v4326, 4
    %v4333 = vadd.f32 %v4323, %v4329
    %v4334 = vadd.f32 %v4324, %v4330
    %v4335 = vmul.f32 %v1556, %v3807
    %v4336 = vmul.f32 %v1556, %v3808
    %v4339 = vrot.slane %v4335, 4
    %v4340 = vrot.slane %v4336, 4
    %v4343 = vadd.f32 %v4333, %v4339
    %v4344 = vadd.f32 %v4334, %v4340
    %v4345 = vmul.f32 %v1567, %v3823
    %v4346 = vmul.f32 %v1567, %v3824
    %v4349 = vrot.slane %v4345, 4
    %v4350 = vrot.slane %v4346, 4
    %v4353 = vadd.f32 %v4343, %v4349
    %v4354 = vadd.f32 %v4344, %v4350
    %v4355 = vmul.f32 %v1578, %v3839
    %v4356 = vmul.f32 %v1578, %v3840
    %v4359 = vrot.slane %v4355, 4
    %v4360 = vrot.slane %v4356, 4
    %v4363 = vadd.f32 %v4353, %v4359
    %v4364 = vadd.f32 %v4354, %v4360
    %v4365 = vmul.f32 %v1589, %v3855
    %v4366 = vmul.f32 %v1589, %v3856
    %v4369 = vrot.slane %v4365, 4
    %v4370 = vrot.slane %v4366, 4
    %v4373 = vadd.f32 %v4363, %v4369
    %v4374 = vadd.f32 %v4364, %v4370
    %v4375 = vmul.f32 %v1600, %v3815
    %v4376 = vmul.f32 %v1600, %v3816
    %v4379 = vrot.slane %v4375, 6
    %v4380 = vrot.slane %v4376, 6
    %v4383 = vadd.f32 %v4373, %v4379
    %v4384 = vadd.f32 %v4374, %v4380
    %v4385 = vmul.f32 %v1611, %v3831
    %v4386 = vmul.f32 %v1611, %v3832
    %v4389 = vrot.slane %v4385, 6
    %v4390 = vrot.slane %v4386, 6
    %v4393 = vadd.f32 %v4383, %v4389
    %v4394 = vadd.f32 %v4384, %v4390
    %v4395 = vmul.f32 %v1622, %v3847
    %v4396 = vmul.f32 %v1622, %v3848
    %v4399 = vrot.slane %v4395, 6
    %v4400 = vrot.slane %v4396, 6
    %v4403 = vadd.f32 %v4393, %v4399
    %v4404 = vadd.f32 %v4394, %v4400
    %v4405 = vmul.f32 %v1633, %v3799
    %v4406 = vmul.f32 %v1633, %v3800
    %v4409 = vrot.slane %v4405, 6
    %v4410 = vrot.slane %v4406, 6
    %v4413 = vadd.f32 %v4403, %v4409
    %v4414 = vadd.f32 %v4404, %v4410
    %v4415 = vmul.f32 %v1644, %v3791
    %v4416 = vmul.f32 %v1644, %v3792
    %v4419 = vrot.slane %v4415, 6
    %v4420 = vrot.slane %v4416, 6
    %v4423 = vadd.f32 %v4413, %v4419
    %v4424 = vadd.f32 %v4414, %v4420
    %v4425 = vmul.f32 %v1655, %v3807
    %v4426 = vmul.f32 %v1655, %v3808
    %v4429 = vrot.slane %v4425, 6
    %v4430 = vrot.slane %v4426, 6
    %v4433 = vadd.f32 %v4423, %v4429
    %v4434 = vadd.f32 %v4424, %v4430
    %v4435 = vmul.f32 %v1666, %v3823
    %v4436 = vmul.f32 %v1666, %v3824
    %v4439 = vrot.slane %v4435, 6
    %v4440 = vrot.slane %v4436, 6
    %v4443 = vadd.f32 %v4433, %v4439
    %v4444 = vadd.f32 %v4434, %v4440
    %v4445 = vmul.f32 %v1677, %v3839
    %v4446 = vmul.f32 %v1677, %v3840
    %v4449 = vrot.slane %v4445, 6
    %v4450 = vrot.slane %v4446, 6
    %v4453 = vadd.f32 %v4443, %v4449
    %v4454 = vadd.f32 %v4444, %v4450
    %v4455 = vmul.f32 %v1688, %v3855
    %v4456 = vmul.f32 %v1688, %v3856
    %v4459 = vrot.slane %v4455, 6
    %v4460 = vrot.slane %v4456, 6
    %v4463 = vadd.f32 %v4453, %v4459
    %v4464 = vadd.f32 %v4454, %v4460
    %v4465 = vadd.f32 %v4159, %v1699
    %v4466 = vadd.f32 %v4160, %v1699
    %v4467 = vadd.f32 %v4463, %v1702
    %v4468 = vadd.f32 %v4464, %v1702
    %v4471 = vrot.slane %v4467, 6
    %v4472 = vrot.slane %v4468, 6
    %v4475 = vsel %vm940, %v4465, %v4471
    %v4476 = vsel %vm940, %v4466, %v4472
    %v4477 = vmul.f32 %v1716, %v3239
    %v4478 = vmul.f32 %v1716, %v3240
    %v4479 = vadd.f32 %v4475, %v4477
    %v4480 = vadd.f32 %v4476, %v4478
    %v4481 = vadd.f32 %v3241, %v4479
    %v4482 = vadd.f32 %v3242, %v4480
    %v4483 = vmul.f32 %v4481, 0.05
    %v4484 = vmul.f32 %v4482, 0.05
    %v4487 = vrot.slane %v4484, 4
    %v4488 = vsel %vm943, %v4483, %v4487
    %v4490 = vadd.f32 %v3110, %v4488
    %s4491 = scalar_lea.vmem %s4, 16
    %4492 = vst [vmem:[%s4491] sm:$0xff] %v4490
    %v4493 = vmul.f32 %v4479, %v4479
    %v4494 = vmul.f32 %v4480, %v4480
    %v4495 = vadd.f32 %v3115, %v4493
    %v4496 = vadd.f32 %v3116, %v4494
    %v4497 = vmul.f32 %v3241, %v4479
    %v4498 = vmul.f32 %v3242, %v4480
    %v4499 = vadd.f32 %v3119, %v4497
    %v4500 = vadd.f32 %v3120, %v4498
    %v4501 = vsel %vm943, %v4495, 0.0
    %v4502 = vsel %vm943, %v4496, 0.0
    %v4503 = vadd.f32 %v4501, %v4502
    %4504 = vadd.xlane.f32.xlu0 %v4503
    %v4505 = vpop.xlane.xlu0 %4504
    %v4506 = vrot.slane %v4505, 4
    %v4507 = vadd.f32 %v4505, %v4506
    %v4508 = vrot.slane %v4507, 2
    %v4509 = vadd.f32 %v4507, %v4508
    %v4510 = vrot.slane %v4509, 1
    %v4511 = vadd.f32 %v4509, %v4510
    %s4512 = vtos %v4511
    %v4513 = vstv %s4512
    %vm4514 = vcmask 0
    %4515 = vst.msk [vmem:[#allocation5] sm:$0x1] %vm4514, %v4513
    %v4516 = vsel %vm943, %v4499, 0.0
    %v4517 = vsel %vm943, %v4500, 0.0
    %v4518 = vadd.f32 %v4516, %v4517
    %4519 = vadd.xlane.f32.xlu0 %v4518
    %v4520 = vpop.xlane.xlu0 %4519
    %v4521 = vrot.slane %v4520, 4
    %v4522 = vadd.f32 %v4520, %v4521
    %v4523 = vrot.slane %v4522, 2
    %v4524 = vadd.f32 %v4522, %v4523
    %v4525 = vrot.slane %v4524, 1
    %v4526 = vadd.f32 %v4524, %v4525
    %s4527 = vtos %v4526
    %v4528 = vstv %s4527
    %4529 = vst.msk [vmem:[#allocation6] sm:$0x1] %vm4514, %v4528
    // Predicated region
    $region22: #{_lambda_.1} parent=1 // pred_check
      _
    $region23: #{_lambda_.1} parent=1 // pred_check_branch
      %4531 = sbr.rel (0) target = $region25
    $region24: #{_lambda_.1} parent=1 // pred_region
      _
    $region25: #{_lambda_.1} parent=1 // pred_fallthru
      _
    // Predicated region
    $region26: #{_lambda_.1} parent=1 // pred_check
      _
    $region27: #{_lambda_.1} parent=1 // pred_check_branch
      %4533 = sbr.rel (0) target = $region29
    $region28: #{_lambda_.1} parent=1 // pred_region
      %4535 = vsyncadd [#allocation3], 0
      %s4537 = sshll.u32 [#allocation5], 4
      %s4538 = int_to_ptr.vmem [resolvable:$true] %s4537
      %s4539 = sshll.u32 %s5, 4
      %s4540 = int_to_ptr.hbm [resolvable:$true] %s4539
      %4542 = dma.vmem_to_hbm [thread:$0]  %s4538, 16, %s4540, [#allocation3]
    $region29: #{_lambda_.1} parent=1 // pred_fallthru
      _
    // Predicated region
    $region30: #{_lambda_.1} parent=1 // pred_check
      _
    $region31: #{_lambda_.1} parent=1 // pred_check_branch
      %4544 = sbr.rel (0) target = $region33
    $region32: #{_lambda_.1} parent=1 // pred_region
      %4546 = vsyncadd [#allocation7], 0
      %s4548 = sshll.u32 [#allocation6], 4
      %s4549 = int_to_ptr.vmem [resolvable:$true] %s4548
      %s4550 = sshll.u32 %s6, 4
      %s4551 = int_to_ptr.hbm [resolvable:$true] %s4550
      %4553 = dma.vmem_to_hbm [thread:$0]  %s4549, 16, %s4551, [#allocation7]
    $region33: #{_lambda_.1} parent=1 // pred_fallthru
      _
    // Predicated region
    $region34: #{_lambda_.1} parent=1 // pred_check
      _
    $region35: #{_lambda_.1} parent=1 // pred_check_branch
      %4555 = sbr.rel (0) target = $region37
    $region36: #{_lambda_.1} parent=1 // pred_region
      _
    $region37: #{_lambda_.1} parent=1 // pred_fallthru
      _
    // Predicated region
    $region38: #{_lambda_.1} parent=1 // pred_check
      _
    $region39: #{_lambda_.1} parent=1 // pred_check_branch
      %4557 = sbr.rel (0) target = $region41
    $region40: #{_lambda_.1} parent=1 // pred_region
      %4559 = dma.done [#allocation3], 16
    $region41: #{_lambda_.1} parent=1 // pred_fallthru
      _
    // Predicated region
    $region42: #{_lambda_.1} parent=1 // pred_check
      _
    $region43: #{_lambda_.1} parent=1 // pred_check_branch
      %4561 = sbr.rel (0) target = $region45
    $region44: #{_lambda_.1} parent=1 // pred_region
      %4563 = dma.done [#allocation7], 16
    $region45: #{_lambda_.1} parent=1 // pred_fallthru
      _
    %4564 = vsyncpa [#allocation3], 1
    %4565 = vsyncpa [#allocation7], 1
    %4566 = vsyncpa [#allocation4], 1

</llo_original>
